<compile_context>
chip_gen: v6e
topology: v6e:2x2x1
jax: 0.10.0
libtpu: 0.0.40
codegen_flags: <defaults>
</compile_context>

<pallas_src>
import math

import jax
import jax.numpy as jnp
from jax.experimental import pallas as pl
from jax.experimental.pallas import tpu as pltpu

LATENT_DIM = 64           # small latent dim for the synthetic example
IMG_FLAT = 1 * 28 * 28    # 784 real output features
IMG_PAD = 896             # 7 * 128, lane-aligned output head
W5A_COLS = 512            # output-head column chunk A (multiple of 128)
W5B_COLS = IMG_PAD - W5A_COLS   # 384, chunk B (multiple of 128)
BN_EPS = 0.8              # nn.BatchNorm1d(dim, 0.8) -> eps = 0.8
LRELU_SLOPE = 0.2
VEC_ROWS = 13             # packed (1, dout) params (biases, gamma/beta, scales)
VEC_COLS = 1024


# ----------------------------------------------------------------------------
# shared math helpers (used by both the kernel and the pure-JAX reference)
# ----------------------------------------------------------------------------
def _leaky_relu(x):
    return jnp.where(x > 0, x, LRELU_SLOPE * x)


def _batchnorm_train(x, gamma, beta):
    # PyTorch training-mode BatchNorm1d: biased batch statistics, eps=0.8.
    mean = jnp.mean(x, axis=0, keepdims=True)
    diff = x - mean
    var = jnp.mean(diff * diff, axis=0, keepdims=True)
    return diff * jax.lax.rsqrt(var + BN_EPS) * gamma + beta


def _mm_bf16(h, w_bf16, b):
    # bf16 operands on the MXU, f32 accumulation, f32 bias add.
    return jnp.dot(h.astype(jnp.bfloat16), w_bf16,
                   preferred_element_type=jnp.float32) + b


def _mm_i8(h, w_i8, scale, b):
    # Weight-only int8: int8 values are exactly representable in bf16, so
    # dot(h_bf16, int8_as_bf16) * per_col_scale == dot(h, dequant_weight).
    # The scale multiply touches only the tiny (B, dout) result.
    w_bf16 = w_i8.astype(jnp.float32).astype(jnp.bfloat16)
    acc = jnp.dot(h.astype(jnp.bfloat16), w_bf16,
                  preferred_element_type=jnp.float32)
    return acc * scale + b


# ----------------------------------------------------------------------------
# kernel
# ----------------------------------------------------------------------------
def generator_kernel(
    z_ref, vec_ref,
    w1_hbm, w2_hbm, w3_hbm, w4_hbm, w5a_hbm, w5b_hbm,
    out_ref,
    w1_buf, w2_buf, w3_buf, w4_buf, w5a_buf, w5b_buf, sems,
):
    # Issue all weight DMAs (HBM -> VMEM) up front, smallest first so the
    # early (critical-path) waits are short.  Per-copy semaphores mean
    # correctness does NOT depend on completion order; ordering is only a
    # bandwidth-scheduling hint.
    srcs_dsts = ((w1_hbm, w1_buf), (w2_hbm, w2_buf), (w3_hbm, w3_buf),
                 (w4_hbm, w4_buf), (w5a_hbm, w5a_buf), (w5b_hbm, w5b_buf))
    copies = []
    for i, (src, dst) in enumerate(srcs_dsts):
        cp = pltpu.make_async_copy(src, dst, sems.at[i])
        cp.start()
        copies.append(cp)

    # One packed f32 operand holds all 13 tiny (1, dout) vectors.
    # Row layout: 0=b1, 1=b2, 2=g2, 3=be2, 4=b3, 5=g3, 6=be3,
    #             7=b4, 8=g4, 9=be4, 10=b5, 11=scale4, 12=scale5
    vecs = vec_ref[...]
    b1 = vecs[0:1, 0:128]
    b2, g2, be2 = vecs[1:2, 0:256], vecs[2:3, 0:256], vecs[3:4, 0:256]
    b3, g3, be3 = vecs[4:5, 0:512], vecs[5:6, 0:512], vecs[6:7, 0:512]
    b4, g4, be4 = vecs[7:8, :], vecs[8:9, :], vecs[9:10, :]
    b5 = vecs[10:11, 0:IMG_PAD]
    s4 = vecs[11:12, :]
    s5 = vecs[12:13, 0:IMG_PAD]

    x = z_ref[...].astype(jnp.float32)

    # block 1: Linear -> LeakyReLU (no BatchNorm)
    copies[0].wait()
    h = _leaky_relu(_mm_bf16(x, w1_buf[...], b1))

    # block 2: Linear -> BatchNorm -> LeakyReLU
    copies[1].wait()
    h = _leaky_relu(_batchnorm_train(_mm_bf16(h, w2_buf[...], b2), g2, be2))

    # block 3
    copies[2].wait()
    h = _leaky_relu(_batchnorm_train(_mm_bf16(h, w3_buf[...], b3), g3, be3))

    # block 4 (int8 weight, per-column dequant scale)
    copies[3].wait()
    h = _leaky_relu(_batchnorm_train(_mm_i8(h, w4_buf[...], s4, b4), g4, be4))

    # output head: Linear -> Tanh, computed in two lane-aligned column chunks
    # so chunk A's matmul/tanh/store overlaps chunk B's weight DMA tail.
    copies[4].wait()
    out_ref[:, 0:W5A_COLS] = jnp.tanh(
        _mm_i8(h, w5a_buf[...], s5[:, 0:W5A_COLS], b5[:, 0:W5A_COLS]))
    copies[5].wait()
    out_ref[:, W5A_COLS:IMG_PAD] = jnp.tanh(
        _mm_i8(h, w5b_buf[...], s5[:, W5A_COLS:IMG_PAD],
               b5[:, W5A_COLS:IMG_PAD]))


# ----------------------------------------------------------------------------
# parameter construction (deterministic PyTorch-style init + quantization)
# ----------------------------------------------------------------------------
def _quantize_per_col(w):
    amax = jnp.max(jnp.abs(w), axis=0, keepdims=True)
    scale = jnp.maximum(amax, 1e-6) / 127.0
    w_i8 = jnp.clip(jnp.round(w / scale), -127, 127).astype(jnp.int8)
    return w_i8, scale


def init_params(key, latent_dim=LATENT_DIM):
    """Weights: bf16 for layers 1-3, per-column int8 (+f32 scale) for 4-5."""
    dims = [(latent_dim, 128), (128, 256), (256, 512), (512, 1024),
            (1024, IMG_FLAT)]
    keys = jax.random.split(key, 2 * len(dims))
    raw = []
    for i, (din, dout) in enumerate(dims):
        bound = 1.0 / math.sqrt(din)
        w = jax.random.uniform(keys[2 * i], (din, dout), jnp.float32,
                               -bound, bound)
        b = jax.random.uniform(keys[2 * i + 1], (1, dout), jnp.float32,
                               -bound, bound)
        raw.append((w, b))
    (w1, b1), (w2, b2), (w3, b3), (w4, b4), (w5, b5) = raw

    # lane-align the output head: pad 784 -> 896 with zero columns
    w5 = jnp.pad(w5, ((0, 0), (0, IMG_PAD - IMG_FLAT)))
    b5 = jnp.pad(b5, ((0, 0), (0, IMG_PAD - IMG_FLAT)))

    w4_i8, s4 = _quantize_per_col(w4)
    w5_i8, s5 = _quantize_per_col(w5)

    params = dict(
        w1=w1.astype(jnp.bfloat16), b1=b1,
        w2=w2.astype(jnp.bfloat16), b2=b2,
        w3=w3.astype(jnp.bfloat16), b3=b3,
        w4_i8=w4_i8, s4=s4, b4=b4,
        w5a_i8=w5_i8[:, :W5A_COLS], w5b_i8=w5_i8[:, W5A_COLS:],
        s5=s5, b5=b5,
    )
    bn = dict(
        g2=jnp.ones((1, 256), jnp.float32), be2=jnp.zeros((1, 256), jnp.float32),
        g3=jnp.ones((1, 512), jnp.float32), be3=jnp.zeros((1, 512), jnp.float32),
        g4=jnp.ones((1, 1024), jnp.float32), be4=jnp.zeros((1, 1024), jnp.float32),
    )
    return params, bn


def _pack_vectors(params, bn):
    """Pack all (1, dout) vectors into one lane-padded (13, 1024) f32 array."""
    def row(v):
        return jnp.pad(v, ((0, 0), (0, VEC_COLS - v.shape[1])))
    rows = [row(params['b1']),
            row(params['b2']), row(bn['g2']), row(bn['be2']),
            row(params['b3']), row(bn['g3']), row(bn['be3']),
            row(params['b4']), row(bn['g4']), row(bn['be4']),
            row(params['b5']),
            row(params['s4']), row(params['s5'])]
    return jnp.concatenate(rows, axis=0)   # (13, 1024) f32


# ----------------------------------------------------------------------------
# wrapper
# ----------------------------------------------------------------------------
def generator_forward(z, params, bn):
    B = z.shape[0]
    vecs = _pack_vectors(params, bn)

    vmem = pl.BlockSpec(memory_space=pltpu.MemorySpace.VMEM)
    hbm = pl.BlockSpec(memory_space=pl.ANY)   # weights stay in HBM; kernel DMAs

    flat = pl.pallas_call(
        generator_kernel,
        out_shape=jax.ShapeDtypeStruct((B, IMG_PAD), jnp.float32),
        in_specs=[vmem, vmem,                 # z, packed vectors
                  hbm, hbm, hbm,              # w1, w2, w3 (bf16)
                  hbm, hbm, hbm],             # w4, w5a, w5b (int8)
        out_specs=vmem,
        scratch_shapes=[
            pltpu.VMEM(params['w1'].shape, jnp.bfloat16),
            pltpu.VMEM(params['w2'].shape, jnp.bfloat16),
            pltpu.VMEM(params['w3'].shape, jnp.bfloat16),
            pltpu.VMEM(params['w4_i8'].shape, jnp.int8),
            pltpu.VMEM(params['w5a_i8'].shape, jnp.int8),
            pltpu.VMEM(params['w5b_i8'].shape, jnp.int8),
            pltpu.SemaphoreType.DMA((6,)),
        ],
        compiler_params=pltpu.CompilerParams(vmem_limit_bytes=32 << 20),
    )(z, vecs,
      params['w1'], params['w2'], params['w3'],
      params['w4_i8'], params['w5a_i8'], params['w5b_i8'])

    # drop the lane padding, then view(B, 1, 28, 28) — NCHW like PyTorch.
    return flat[:, :IMG_FLAT].reshape(B, 1, 28, 28)


def generator_reference(z, params, bn):
    """Pure-JAX reference using the identical numerical path as the kernel."""
    h = _leaky_relu(_mm_bf16(z.astype(jnp.float32), params['w1'], params['b1']))
    h = _leaky_relu(_batchnorm_train(
        _mm_bf16(h, params['w2'], params['b2']), bn['g2'], bn['be2']))
    h = _leaky_relu(_batchnorm_train(
        _mm_bf16(h, params['w3'], params['b3']), bn['g3'], bn['be3']))
    h = _leaky_relu(_batchnorm_train(
        _mm_i8(h, params['w4_i8'], params['s4'], params['b4']),
        bn['g4'], bn['be4']))
    w5_i8 = jnp.concatenate([params['w5a_i8'], params['w5b_i8']], axis=1)
    out = jnp.tanh(_mm_i8(h, w5_i8, params['s5'], params['b5']))
    return out[:, :IMG_FLAT].reshape(z.shape[0], 1, 28, 28)


if __name__ == "__main__":
    key = jax.random.PRNGKey(0)
    kp, kz = jax.random.split(key)
    params, bn = init_params(kp, LATENT_DIM)

    B = 8
    z = jax.random.normal(kz, (B, LATENT_DIM), jnp.float32)

    img = jax.block_until_ready(generator_forward(z, params, bn))
    ref = generator_reference(z, params, bn)

    assert img.shape == (B, 1, 28, 28), img.shape
    max_err = float(jnp.max(jnp.abs(img - ref)))
    assert jnp.allclose(img, ref, atol=5e-3, rtol=5e-3), max_err

    print("KERNEL_OK")
</pallas_src>

<mosaic_0001>
module attributes {stable_mosaic.version = 11 : i64} {
  func.func @generator_kernel(%arg0: memref<8x64xf32, #tpu.memory_space<vmem>>, %arg1: memref<13x1024xf32, #tpu.memory_space<vmem>>, %arg2: memref<64x128xbf16, #tpu.memory_space<any>>, %arg3: memref<128x256xbf16, #tpu.memory_space<any>>, %arg4: memref<256x512xbf16, #tpu.memory_space<any>>, %arg5: memref<512x1024xi8, #tpu.memory_space<any>>, %arg6: memref<1024x512xi8, #tpu.memory_space<any>>, %arg7: memref<1024x384xi8, #tpu.memory_space<any>>, %arg8: memref<8x896xf32, #tpu.memory_space<vmem>>, %arg9: memref<64x128xbf16, #tpu.memory_space<vmem>>, %arg10: memref<128x256xbf16, #tpu.memory_space<vmem>>, %arg11: memref<256x512xbf16, #tpu.memory_space<vmem>>, %arg12: memref<512x1024xi8, #tpu.memory_space<vmem>>, %arg13: memref<1024x512xi8, #tpu.memory_space<vmem>>, %arg14: memref<1024x384xi8, #tpu.memory_space<vmem>>, %arg15: memref<6x!tpu.dma_semaphore, #tpu.memory_space<semaphore_mem>>) attributes {dimension_semantics = [], scalar_prefetch = 0 : i64, scratch_operands = 7 : i64, tpu.core_type = #tpu.core_type<tc>} {
    %c0_i32 = arith.constant 0 : i32
    %0 = tpu.memref_slice %arg15[%c0_i32] : memref<6x!tpu.dma_semaphore, #tpu.memory_space<semaphore_mem>> -> memref<1x!tpu.dma_semaphore, #tpu.memory_space<semaphore_mem>>
    %1 = tpu.memref_squeeze %0 : memref<1x!tpu.dma_semaphore, #tpu.memory_space<semaphore_mem>> -> memref<!tpu.dma_semaphore, #tpu.memory_space<semaphore_mem>>
    tpu.enqueue_dma source(%arg2 : memref<64x128xbf16, #tpu.memory_space<any>>) target(%arg9 : memref<64x128xbf16, #tpu.memory_space<vmem>>) target_semaphore(%1 : memref<!tpu.dma_semaphore, #tpu.memory_space<semaphore_mem>>)
    %c1_i32 = arith.constant 1 : i32
    %2 = tpu.memref_slice %arg15[%c1_i32] : memref<6x!tpu.dma_semaphore, #tpu.memory_space<semaphore_mem>> -> memref<1x!tpu.dma_semaphore, #tpu.memory_space<semaphore_mem>>
    %3 = tpu.memref_squeeze %2 : memref<1x!tpu.dma_semaphore, #tpu.memory_space<semaphore_mem>> -> memref<!tpu.dma_semaphore, #tpu.memory_space<semaphore_mem>>
    tpu.enqueue_dma source(%arg3 : memref<128x256xbf16, #tpu.memory_space<any>>) target(%arg10 : memref<128x256xbf16, #tpu.memory_space<vmem>>) target_semaphore(%3 : memref<!tpu.dma_semaphore, #tpu.memory_space<semaphore_mem>>)
    %c2_i32 = arith.constant 2 : i32
    %4 = tpu.memref_slice %arg15[%c2_i32] : memref<6x!tpu.dma_semaphore, #tpu.memory_space<semaphore_mem>> -> memref<1x!tpu.dma_semaphore, #tpu.memory_space<semaphore_mem>>
    %5 = tpu.memref_squeeze %4 : memref<1x!tpu.dma_semaphore, #tpu.memory_space<semaphore_mem>> -> memref<!tpu.dma_semaphore, #tpu.memory_space<semaphore_mem>>
    tpu.enqueue_dma source(%arg4 : memref<256x512xbf16, #tpu.memory_space<any>>) target(%arg11 : memref<256x512xbf16, #tpu.memory_space<vmem>>) target_semaphore(%5 : memref<!tpu.dma_semaphore, #tpu.memory_space<semaphore_mem>>)
    %c3_i32 = arith.constant 3 : i32
    %6 = tpu.memref_slice %arg15[%c3_i32] : memref<6x!tpu.dma_semaphore, #tpu.memory_space<semaphore_mem>> -> memref<1x!tpu.dma_semaphore, #tpu.memory_space<semaphore_mem>>
    %7 = tpu.memref_squeeze %6 : memref<1x!tpu.dma_semaphore, #tpu.memory_space<semaphore_mem>> -> memref<!tpu.dma_semaphore, #tpu.memory_space<semaphore_mem>>
    tpu.enqueue_dma source(%arg5 : memref<512x1024xi8, #tpu.memory_space<any>>) target(%arg12 : memref<512x1024xi8, #tpu.memory_space<vmem>>) target_semaphore(%7 : memref<!tpu.dma_semaphore, #tpu.memory_space<semaphore_mem>>)
    %c4_i32 = arith.constant 4 : i32
    %8 = tpu.memref_slice %arg15[%c4_i32] : memref<6x!tpu.dma_semaphore, #tpu.memory_space<semaphore_mem>> -> memref<1x!tpu.dma_semaphore, #tpu.memory_space<semaphore_mem>>
    %9 = tpu.memref_squeeze %8 : memref<1x!tpu.dma_semaphore, #tpu.memory_space<semaphore_mem>> -> memref<!tpu.dma_semaphore, #tpu.memory_space<semaphore_mem>>
    tpu.enqueue_dma source(%arg6 : memref<1024x512xi8, #tpu.memory_space<any>>) target(%arg13 : memref<1024x512xi8, #tpu.memory_space<vmem>>) target_semaphore(%9 : memref<!tpu.dma_semaphore, #tpu.memory_space<semaphore_mem>>)
    %c5_i32 = arith.constant 5 : i32
    %10 = tpu.memref_slice %arg15[%c5_i32] : memref<6x!tpu.dma_semaphore, #tpu.memory_space<semaphore_mem>> -> memref<1x!tpu.dma_semaphore, #tpu.memory_space<semaphore_mem>>
    %11 = tpu.memref_squeeze %10 : memref<1x!tpu.dma_semaphore, #tpu.memory_space<semaphore_mem>> -> memref<!tpu.dma_semaphore, #tpu.memory_space<semaphore_mem>>
    tpu.enqueue_dma source(%arg7 : memref<1024x384xi8, #tpu.memory_space<any>>) target(%arg14 : memref<1024x384xi8, #tpu.memory_space<vmem>>) target_semaphore(%11 : memref<!tpu.dma_semaphore, #tpu.memory_space<semaphore_mem>>)
    %c0 = arith.constant 0 : index
    %c0_0 = arith.constant 0 : index
    %12 = vector.load %arg1[%c0, %c0_0] : memref<13x1024xf32, #tpu.memory_space<vmem>>, vector<13x1024xf32>
    %13 = vector.extract_strided_slice %12 {offsets = [0, 0], sizes = [1, 128], strides = [1, 1]} : vector<13x1024xf32> to vector<1x128xf32>
    %14 = vector.extract_strided_slice %12 {offsets = [1, 0], sizes = [1, 256], strides = [1, 1]} : vector<13x1024xf32> to vector<1x256xf32>
    %15 = vector.extract_strided_slice %12 {offsets = [2, 0], sizes = [1, 256], strides = [1, 1]} : vector<13x1024xf32> to vector<1x256xf32>
    %16 = vector.extract_strided_slice %12 {offsets = [3, 0], sizes = [1, 256], strides = [1, 1]} : vector<13x1024xf32> to vector<1x256xf32>
    %17 = vector.extract_strided_slice %12 {offsets = [4, 0], sizes = [1, 512], strides = [1, 1]} : vector<13x1024xf32> to vector<1x512xf32>
    %18 = vector.extract_strided_slice %12 {offsets = [5, 0], sizes = [1, 512], strides = [1, 1]} : vector<13x1024xf32> to vector<1x512xf32>
    %19 = vector.extract_strided_slice %12 {offsets = [6, 0], sizes = [1, 512], strides = [1, 1]} : vector<13x1024xf32> to vector<1x512xf32>
    %20 = vector.extract_strided_slice %12 {offsets = [7, 0], sizes = [1, 1024], strides = [1, 1]} : vector<13x1024xf32> to vector<1x1024xf32>
    %21 = vector.extract_strided_slice %12 {offsets = [8, 0], sizes = [1, 1024], strides = [1, 1]} : vector<13x1024xf32> to vector<1x1024xf32>
    %22 = vector.extract_strided_slice %12 {offsets = [9, 0], sizes = [1, 1024], strides = [1, 1]} : vector<13x1024xf32> to vector<1x1024xf32>
    %23 = vector.extract_strided_slice %12 {offsets = [10, 0], sizes = [1, 896], strides = [1, 1]} : vector<13x1024xf32> to vector<1x896xf32>
    %24 = vector.extract_strided_slice %12 {offsets = [11, 0], sizes = [1, 1024], strides = [1, 1]} : vector<13x1024xf32> to vector<1x1024xf32>
    %25 = vector.extract_strided_slice %12 {offsets = [12, 0], sizes = [1, 896], strides = [1, 1]} : vector<13x1024xf32> to vector<1x896xf32>
    %c0_1 = arith.constant 0 : index
    %c0_2 = arith.constant 0 : index
    %26 = vector.load %arg0[%c0_1, %c0_2] : memref<8x64xf32, #tpu.memory_space<vmem>>, vector<8x64xf32>
    %c0_i32_3 = arith.constant 0 : i32
    %27 = tpu.memref_slice %arg15[%c0_i32_3] : memref<6x!tpu.dma_semaphore, #tpu.memory_space<semaphore_mem>> -> memref<1x!tpu.dma_semaphore, #tpu.memory_space<semaphore_mem>>
    %28 = tpu.memref_squeeze %27 : memref<1x!tpu.dma_semaphore, #tpu.memory_space<semaphore_mem>> -> memref<!tpu.dma_semaphore, #tpu.memory_space<semaphore_mem>>
    tpu.wait_dma2 semaphore(%28 : memref<!tpu.dma_semaphore, #tpu.memory_space<semaphore_mem>>) src(%arg2 : memref<64x128xbf16, #tpu.memory_space<any>>) dst(%arg9 : memref<64x128xbf16, #tpu.memory_space<vmem>>)
    %c0_4 = arith.constant 0 : index
    %c0_5 = arith.constant 0 : index
    %29 = vector.load %arg9[%c0_4, %c0_5] : memref<64x128xbf16, #tpu.memory_space<vmem>>, vector<64x128xbf16>
    %30 = arith.truncf %26 : vector<8x64xf32> to vector<8x64xbf16>
    %cst = arith.constant dense<0.000000e+00> : vector<8x128xf32>
    %31 = tpu.matmul %30, %29, %cst {dimension_numbers = #tpu.dot_dimension_numbers<[1], [0], [0], [1], [0, 0, 1, 1], [], []>} : vector<8x64xbf16>, vector<64x128xbf16>, vector<8x128xf32> -> vector<8x128xf32>
    %32 = vector.broadcast %13 : vector<1x128xf32> to vector<8x128xf32>
    %33 = arith.addf %31, %32 : vector<8x128xf32>
    %cst_6 = arith.constant 0.000000e+00 : f32
    %34 = vector.broadcast %cst_6 : f32 to vector<8x128xf32>
    %35 = arith.cmpf ogt, %33, %34 : vector<8x128xf32>
    %cst_7 = arith.constant 2.000000e-01 : f32
    %36 = vector.broadcast %cst_7 : f32 to vector<8x128xf32>
    %37 = arith.mulf %36, %33 : vector<8x128xf32>
    %38 = arith.select %35, %33, %37 : vector<8x128xi1>, vector<8x128xf32>
    %c1_i32_8 = arith.constant 1 : i32
    %39 = tpu.memref_slice %arg15[%c1_i32_8] : memref<6x!tpu.dma_semaphore, #tpu.memory_space<semaphore_mem>> -> memref<1x!tpu.dma_semaphore, #tpu.memory_space<semaphore_mem>>
    %40 = tpu.memref_squeeze %39 : memref<1x!tpu.dma_semaphore, #tpu.memory_space<semaphore_mem>> -> memref<!tpu.dma_semaphore, #tpu.memory_space<semaphore_mem>>
    tpu.wait_dma2 semaphore(%40 : memref<!tpu.dma_semaphore, #tpu.memory_space<semaphore_mem>>) src(%arg3 : memref<128x256xbf16, #tpu.memory_space<any>>) dst(%arg10 : memref<128x256xbf16, #tpu.memory_space<vmem>>)
    %c0_9 = arith.constant 0 : index
    %c0_10 = arith.constant 0 : index
    %41 = vector.load %arg10[%c0_9, %c0_10] : memref<128x256xbf16, #tpu.memory_space<vmem>>, vector<128x256xbf16>
    %42 = arith.truncf %38 : vector<8x128xf32> to vector<8x128xbf16>
    %cst_11 = arith.constant dense<0.000000e+00> : vector<8x256xf32>
    %43 = tpu.matmul %42, %41, %cst_11 {dimension_numbers = #tpu.dot_dimension_numbers<[1], [0], [0], [1], [0, 0, 1, 1], [], []>} : vector<8x128xbf16>, vector<128x256xbf16>, vector<8x256xf32> -> vector<8x256xf32>
    %44 = vector.broadcast %14 : vector<1x256xf32> to vector<8x256xf32>
    %45 = arith.addf %43, %44 : vector<8x256xf32>
    %cst_12 = arith.constant dense<0.000000e+00> : vector<256xf32>
    %46 = vector.multi_reduction <add>, %45, %cst_12 [0] : vector<8x256xf32> to vector<256xf32>
    %47 = vector.shape_cast %46 : vector<256xf32> to vector<1x256xf32>
    %cst_13 = arith.constant 8.000000e+00 : f32
    %48 = vector.broadcast %cst_13 : f32 to vector<1x256xf32>
    %49 = arith.divf %47, %48 : vector<1x256xf32>
    %50 = vector.broadcast %49 : vector<1x256xf32> to vector<8x256xf32>
    %51 = arith.subf %45, %50 : vector<8x256xf32>
    %52 = arith.mulf %51, %51 : vector<8x256xf32>
    %cst_14 = arith.constant dense<0.000000e+00> : vector<256xf32>
    %53 = vector.multi_reduction <add>, %52, %cst_14 [0] : vector<8x256xf32> to vector<256xf32>
    %54 = vector.shape_cast %53 : vector<256xf32> to vector<1x256xf32>
    %cst_15 = arith.constant 8.000000e+00 : f32
    %55 = vector.broadcast %cst_15 : f32 to vector<1x256xf32>
    %56 = arith.divf %54, %55 : vector<1x256xf32>
    %cst_16 = arith.constant 8.000000e-01 : f32
    %57 = vector.broadcast %cst_16 : f32 to vector<1x256xf32>
    %58 = arith.addf %56, %57 : vector<1x256xf32>
    %59 = math.rsqrt %58 : vector<1x256xf32>
    %60 = vector.broadcast %59 : vector<1x256xf32> to vector<8x256xf32>
    %61 = arith.mulf %51, %60 : vector<8x256xf32>
    %62 = vector.broadcast %15 : vector<1x256xf32> to vector<8x256xf32>
    %63 = arith.mulf %61, %62 : vector<8x256xf32>
    %64 = vector.broadcast %16 : vector<1x256xf32> to vector<8x256xf32>
    %65 = arith.addf %63, %64 : vector<8x256xf32>
    %cst_17 = arith.constant 0.000000e+00 : f32
    %66 = vector.broadcast %cst_17 : f32 to vector<8x256xf32>
    %67 = arith.cmpf ogt, %65, %66 : vector<8x256xf32>
    %cst_18 = arith.constant 2.000000e-01 : f32
    %68 = vector.broadcast %cst_18 : f32 to vector<8x256xf32>
    %69 = arith.mulf %68, %65 : vector<8x256xf32>
    %70 = arith.select %67, %65, %69 : vector<8x256xi1>, vector<8x256xf32>
    %c2_i32_19 = arith.constant 2 : i32
    %71 = tpu.memref_slice %arg15[%c2_i32_19] : memref<6x!tpu.dma_semaphore, #tpu.memory_space<semaphore_mem>> -> memref<1x!tpu.dma_semaphore, #tpu.memory_space<semaphore_mem>>
    %72 = tpu.memref_squeeze %71 : memref<1x!tpu.dma_semaphore, #tpu.memory_space<semaphore_mem>> -> memref<!tpu.dma_semaphore, #tpu.memory_space<semaphore_mem>>
    tpu.wait_dma2 semaphore(%72 : memref<!tpu.dma_semaphore, #tpu.memory_space<semaphore_mem>>) src(%arg4 : memref<256x512xbf16, #tpu.memory_space<any>>) dst(%arg11 : memref<256x512xbf16, #tpu.memory_space<vmem>>)
    %c0_20 = arith.constant 0 : index
    %c0_21 = arith.constant 0 : index
    %73 = vector.load %arg11[%c0_20, %c0_21] : memref<256x512xbf16, #tpu.memory_space<vmem>>, vector<256x512xbf16>
    %74 = arith.truncf %70 : vector<8x256xf32> to vector<8x256xbf16>
    %cst_22 = arith.constant dense<0.000000e+00> : vector<8x512xf32>
    %75 = tpu.matmul %74, %73, %cst_22 {dimension_numbers = #tpu.dot_dimension_numbers<[1], [0], [0], [1], [0, 0, 1, 1], [], []>} : vector<8x256xbf16>, vector<256x512xbf16>, vector<8x512xf32> -> vector<8x512xf32>
    %76 = vector.broadcast %17 : vector<1x512xf32> to vector<8x512xf32>
    %77 = arith.addf %75, %76 : vector<8x512xf32>
    %cst_23 = arith.constant dense<0.000000e+00> : vector<512xf32>
    %78 = vector.multi_reduction <add>, %77, %cst_23 [0] : vector<8x512xf32> to vector<512xf32>
    %79 = vector.shape_cast %78 : vector<512xf32> to vector<1x512xf32>
    %cst_24 = arith.constant 8.000000e+00 : f32
    %80 = vector.broadcast %cst_24 : f32 to vector<1x512xf32>
    %81 = arith.divf %79, %80 : vector<1x512xf32>
    %82 = vector.broadcast %81 : vector<1x512xf32> to vector<8x512xf32>
    %83 = arith.subf %77, %82 : vector<8x512xf32>
    %84 = arith.mulf %83, %83 : vector<8x512xf32>
    %cst_25 = arith.constant dense<0.000000e+00> : vector<512xf32>
    %85 = vector.multi_reduction <add>, %84, %cst_25 [0] : vector<8x512xf32> to vector<512xf32>
    %86 = vector.shape_cast %85 : vector<512xf32> to vector<1x512xf32>
    %cst_26 = arith.constant 8.000000e+00 : f32
    %87 = vector.broadcast %cst_26 : f32 to vector<1x512xf32>
    %88 = arith.divf %86, %87 : vector<1x512xf32>
    %cst_27 = arith.constant 8.000000e-01 : f32
    %89 = vector.broadcast %cst_27 : f32 to vector<1x512xf32>
    %90 = arith.addf %88, %89 : vector<1x512xf32>
    %91 = math.rsqrt %90 : vector<1x512xf32>
    %92 = vector.broadcast %91 : vector<1x512xf32> to vector<8x512xf32>
    %93 = arith.mulf %83, %92 : vector<8x512xf32>
    %94 = vector.broadcast %18 : vector<1x512xf32> to vector<8x512xf32>
    %95 = arith.mulf %93, %94 : vector<8x512xf32>
    %96 = vector.broadcast %19 : vector<1x512xf32> to vector<8x512xf32>
    %97 = arith.addf %95, %96 : vector<8x512xf32>
    %cst_28 = arith.constant 0.000000e+00 : f32
    %98 = vector.broadcast %cst_28 : f32 to vector<8x512xf32>
    %99 = arith.cmpf ogt, %97, %98 : vector<8x512xf32>
    %cst_29 = arith.constant 2.000000e-01 : f32
    %100 = vector.broadcast %cst_29 : f32 to vector<8x512xf32>
    %101 = arith.mulf %100, %97 : vector<8x512xf32>
    %102 = arith.select %99, %97, %101 : vector<8x512xi1>, vector<8x512xf32>
    %c3_i32_30 = arith.constant 3 : i32
    %103 = tpu.memref_slice %arg15[%c3_i32_30] : memref<6x!tpu.dma_semaphore, #tpu.memory_space<semaphore_mem>> -> memref<1x!tpu.dma_semaphore, #tpu.memory_space<semaphore_mem>>
    %104 = tpu.memref_squeeze %103 : memref<1x!tpu.dma_semaphore, #tpu.memory_space<semaphore_mem>> -> memref<!tpu.dma_semaphore, #tpu.memory_space<semaphore_mem>>
    tpu.wait_dma2 semaphore(%104 : memref<!tpu.dma_semaphore, #tpu.memory_space<semaphore_mem>>) src(%arg5 : memref<512x1024xi8, #tpu.memory_space<any>>) dst(%arg12 : memref<512x1024xi8, #tpu.memory_space<vmem>>)
    %c0_31 = arith.constant 0 : index
    %c0_32 = arith.constant 0 : index
    %105 = vector.load %arg12[%c0_31, %c0_32] : memref<512x1024xi8, #tpu.memory_space<vmem>>, vector<512x1024xi8>
    %106 = arith.sitofp %105 : vector<512x1024xi8> to vector<512x1024xf32>
    %107 = arith.truncf %106 : vector<512x1024xf32> to vector<512x1024xbf16>
    %108 = arith.truncf %102 : vector<8x512xf32> to vector<8x512xbf16>
    %cst_33 = arith.constant dense<0.000000e+00> : vector<8x1024xf32>
    %109 = tpu.matmul %108, %107, %cst_33 {dimension_numbers = #tpu.dot_dimension_numbers<[1], [0], [0], [1], [0, 0, 1, 1], [], []>} : vector<8x512xbf16>, vector<512x1024xbf16>, vector<8x1024xf32> -> vector<8x1024xf32>
    %110 = vector.broadcast %24 : vector<1x1024xf32> to vector<8x1024xf32>
    %111 = arith.mulf %109, %110 : vector<8x1024xf32>
    %112 = vector.broadcast %20 : vector<1x1024xf32> to vector<8x1024xf32>
    %113 = arith.addf %111, %112 : vector<8x1024xf32>
    %cst_34 = arith.constant dense<0.000000e+00> : vector<1024xf32>
    %114 = vector.multi_reduction <add>, %113, %cst_34 [0] : vector<8x1024xf32> to vector<1024xf32>
    %115 = vector.shape_cast %114 : vector<1024xf32> to vector<1x1024xf32>
    %cst_35 = arith.constant 8.000000e+00 : f32
    %116 = vector.broadcast %cst_35 : f32 to vector<1x1024xf32>
    %117 = arith.divf %115, %116 : vector<1x1024xf32>
    %118 = vector.broadcast %117 : vector<1x1024xf32> to vector<8x1024xf32>
    %119 = arith.subf %113, %118 : vector<8x1024xf32>
    %120 = arith.mulf %119, %119 : vector<8x1024xf32>
    %cst_36 = arith.constant dense<0.000000e+00> : vector<1024xf32>
    %121 = vector.multi_reduction <add>, %120, %cst_36 [0] : vector<8x1024xf32> to vector<1024xf32>
    %122 = vector.shape_cast %121 : vector<1024xf32> to vector<1x1024xf32>
    %cst_37 = arith.constant 8.000000e+00 : f32
    %123 = vector.broadcast %cst_37 : f32 to vector<1x1024xf32>
    %124 = arith.divf %122, %123 : vector<1x1024xf32>
    %cst_38 = arith.constant 8.000000e-01 : f32
    %125 = vector.broadcast %cst_38 : f32 to vector<1x1024xf32>
    %126 = arith.addf %124, %125 : vector<1x1024xf32>
    %127 = math.rsqrt %126 : vector<1x1024xf32>
    %128 = vector.broadcast %127 : vector<1x1024xf32> to vector<8x1024xf32>
    %129 = arith.mulf %119, %128 : vector<8x1024xf32>
    %130 = vector.broadcast %21 : vector<1x1024xf32> to vector<8x1024xf32>
    %131 = arith.mulf %129, %130 : vector<8x1024xf32>
    %132 = vector.broadcast %22 : vector<1x1024xf32> to vector<8x1024xf32>
    %133 = arith.addf %131, %132 : vector<8x1024xf32>
    %cst_39 = arith.constant 0.000000e+00 : f32
    %134 = vector.broadcast %cst_39 : f32 to vector<8x1024xf32>
    %135 = arith.cmpf ogt, %133, %134 : vector<8x1024xf32>
    %cst_40 = arith.constant 2.000000e-01 : f32
    %136 = vector.broadcast %cst_40 : f32 to vector<8x1024xf32>
    %137 = arith.mulf %136, %133 : vector<8x1024xf32>
    %138 = arith.select %135, %133, %137 : vector<8x1024xi1>, vector<8x1024xf32>
    %c4_i32_41 = arith.constant 4 : i32
    %139 = tpu.memref_slice %arg15[%c4_i32_41] : memref<6x!tpu.dma_semaphore, #tpu.memory_space<semaphore_mem>> -> memref<1x!tpu.dma_semaphore, #tpu.memory_space<semaphore_mem>>
    %140 = tpu.memref_squeeze %139 : memref<1x!tpu.dma_semaphore, #tpu.memory_space<semaphore_mem>> -> memref<!tpu.dma_semaphore, #tpu.memory_space<semaphore_mem>>
    tpu.wait_dma2 semaphore(%140 : memref<!tpu.dma_semaphore, #tpu.memory_space<semaphore_mem>>) src(%arg6 : memref<1024x512xi8, #tpu.memory_space<any>>) dst(%arg13 : memref<1024x512xi8, #tpu.memory_space<vmem>>)
    %c0_42 = arith.constant 0 : index
    %c0_43 = arith.constant 0 : index
    %141 = vector.load %arg13[%c0_42, %c0_43] : memref<1024x512xi8, #tpu.memory_space<vmem>>, vector<1024x512xi8>
    %142 = vector.extract_strided_slice %25 {offsets = [0, 0], sizes = [1, 512], strides = [1, 1]} : vector<1x896xf32> to vector<1x512xf32>
    %143 = vector.extract_strided_slice %23 {offsets = [0, 0], sizes = [1, 512], strides = [1, 1]} : vector<1x896xf32> to vector<1x512xf32>
    %144 = arith.sitofp %141 : vector<1024x512xi8> to vector<1024x512xf32>
    %145 = arith.truncf %144 : vector<1024x512xf32> to vector<1024x512xbf16>
    %146 = arith.truncf %138 : vector<8x1024xf32> to vector<8x1024xbf16>
    %cst_44 = arith.constant dense<0.000000e+00> : vector<8x512xf32>
    %147 = tpu.matmul %146, %145, %cst_44 {dimension_numbers = #tpu.dot_dimension_numbers<[1], [0], [0], [1], [0, 0, 1, 1], [], []>} : vector<8x1024xbf16>, vector<1024x512xbf16>, vector<8x512xf32> -> vector<8x512xf32>
    %148 = vector.broadcast %142 : vector<1x512xf32> to vector<8x512xf32>
    %149 = arith.mulf %147, %148 : vector<8x512xf32>
    %150 = vector.broadcast %143 : vector<1x512xf32> to vector<8x512xf32>
    %151 = arith.addf %149, %150 : vector<8x512xf32>
    %152 = math.tanh %151 : vector<8x512xf32>
    %c0_45 = arith.constant 0 : index
    %c0_46 = arith.constant 0 : index
    %153 = vector.load %arg8[%c0_45, %c0_46] : memref<8x896xf32, #tpu.memory_space<vmem>>, vector<8x512xf32>
    tpu.vector_store %arg8[%c0_45, %c0_46], %152 {strides = array<i32>} : memref<8x896xf32, #tpu.memory_space<vmem>>, vector<8x512xf32>,
    %c5_i32_47 = arith.constant 5 : i32
    %154 = tpu.memref_slice %arg15[%c5_i32_47] : memref<6x!tpu.dma_semaphore, #tpu.memory_space<semaphore_mem>> -> memref<1x!tpu.dma_semaphore, #tpu.memory_space<semaphore_mem>>
    %155 = tpu.memref_squeeze %154 : memref<1x!tpu.dma_semaphore, #tpu.memory_space<semaphore_mem>> -> memref<!tpu.dma_semaphore, #tpu.memory_space<semaphore_mem>>
    tpu.wait_dma2 semaphore(%155 : memref<!tpu.dma_semaphore, #tpu.memory_space<semaphore_mem>>) src(%arg7 : memref<1024x384xi8, #tpu.memory_space<any>>) dst(%arg14 : memref<1024x384xi8, #tpu.memory_space<vmem>>)
    %c0_48 = arith.constant 0 : index
    %c0_49 = arith.constant 0 : index
    %156 = vector.load %arg14[%c0_48, %c0_49] : memref<1024x384xi8, #tpu.memory_space<vmem>>, vector<1024x384xi8>
    %157 = vector.extract_strided_slice %25 {offsets = [0, 512], sizes = [1, 384], strides = [1, 1]} : vector<1x896xf32> to vector<1x384xf32>
    %158 = vector.extract_strided_slice %23 {offsets = [0, 512], sizes = [1, 384], strides = [1, 1]} : vector<1x896xf32> to vector<1x384xf32>
    %159 = arith.sitofp %156 : vector<1024x384xi8> to vector<1024x384xf32>
    %160 = arith.truncf %159 : vector<1024x384xf32> to vector<1024x384xbf16>
    %161 = arith.truncf %138 : vector<8x1024xf32> to vector<8x1024xbf16>
    %cst_50 = arith.constant dense<0.000000e+00> : vector<8x384xf32>
    %162 = tpu.matmul %161, %160, %cst_50 {dimension_numbers = #tpu.dot_dimension_numbers<[1], [0], [0], [1], [0, 0, 1, 1], [], []>} : vector<8x1024xbf16>, vector<1024x384xbf16>, vector<8x384xf32> -> vector<8x384xf32>
    %163 = vector.broadcast %157 : vector<1x384xf32> to vector<8x384xf32>
    %164 = arith.mulf %162, %163 : vector<8x384xf32>
    %165 = vector.broadcast %158 : vector<1x384xf32> to vector<8x384xf32>
    %166 = arith.addf %164, %165 : vector<8x384xf32>
    %167 = math.tanh %166 : vector<8x384xf32>
    %c0_51 = arith.constant 0 : index
    %c512 = arith.constant 512 : index
    %168 = vector.load %arg8[%c0_51, %c512] : memref<8x896xf32, #tpu.memory_space<vmem>>, vector<8x384xf32>
    tpu.vector_store %arg8[%c0_51, %c512], %167 {strides = array<i32>} : memref<8x896xf32, #tpu.memory_space<vmem>>, vector<8x384xf32>,
    return
  }
}

</mosaic_0001>

<llo_original>
// kernel: tpu_custom_call.1
$region0: #{tpu_custom_call.1}
  #allocation0 [shape = 'u32[]', space=smem, size = 0x4, offset = 0x4, fixed_abs, tag = 'smem constant byte address 0x4 - core index']
  #allocation1 [shape = 'u32[144,128]{1,0:T(1,128)}', space=vmem, size = 0x12000, scoped, tag = 'internal scratch']
  #allocation2 [shape = 'bf16[64,128]{1,0:T(8,128)(2,1)}', space=vmem, size = 0x4000, scoped, tag = 'scratch operand']
  #allocation3 [shape = 'bf16[128,256]{1,0:T(8,128)(2,1)}', space=vmem, size = 0x10000, scoped, tag = 'scratch operand']
  #allocation4 [shape = 'bf16[256,512]{1,0:T(8,128)(2,1)}', space=vmem, size = 0x40000, scoped, tag = 'scratch operand']
  #allocation5 [shape = 's8[512,1024]{1,0:T(32,128)(4,1)}', space=vmem, size = 0x80000, scoped, tag = 'scratch operand']
  #allocation6 [shape = 's8[1024,512]{1,0:T(32,128)(4,1)}', space=vmem, size = 0x80000, scoped, tag = 'scratch operand']
  #allocation7 [shape = 's8[1024,384]{1,0:T(32,128)(4,1)}', space=vmem, size = 0x60000, scoped, tag = 'scratch operand']
  #allocation8 [shape = 's32[6]{0}', space=sflag, size = 0x18, scoped, tag = 'scratch operand']
  #allocation15 [shape = 's32[]', space=sflag, size = 0x4, offset = 0, fixed_abs, tag = 'sflag constant byte address 0x0 - dummy sync flag']
  #allocation16 [shape = 's32[]', space=sflag, size = 0x4, offset = 0, fixed_abs, tag = 'sflag constant byte address 0x0 - dummy sync flag']
  #allocation17 [shape = 'u32[]', space=smem, size = 0x4, offset = 0x44, fixed_abs, tag = 'smem constant byte address 0x44 - assertion arg 0']
  #allocation18 [shape = 'u32[]', space=smem, size = 0x4, offset = 0x48, fixed_abs, tag = 'smem constant byte address 0x48 - assertion arg 1']
  #allocation19 [shape = 's32[]', space=sflag, size = 0x4, offset = 0, fixed_abs, tag = 'sflag constant byte address 0x0 - dummy sync flag']
  #allocation20 [shape = 's32[]', space=sflag, size = 0x4, offset = 0, fixed_abs, tag = 'sflag constant byte address 0x0 - dummy sync flag']
  #allocation21 [shape = 's32[]', space=sflag, size = 0x4, offset = 0, fixed_abs, tag = 'sflag constant byte address 0x0 - dummy sync flag']
  #allocation22 [shape = 's32[]', space=sflag, size = 0x4, offset = 0, fixed_abs, tag = 'sflag constant byte address 0x0 - dummy sync flag']
  #allocation23 [shape = 's32[]', space=sflag, size = 0x4, offset = 0, fixed_abs, tag = 'sflag constant byte address 0x0 - dummy sync flag']
  #allocation24 [shape = 's32[]', space=sflag, size = 0x4, offset = 0, fixed_abs, tag = 'sflag constant byte address 0x0 - dummy sync flag']
  #allocation25 [shape = 's32[]', space=sflag, size = 0x4, offset = 0, fixed_abs, tag = 'sflag constant byte address 0x0 - dummy sync flag']
  #allocation26 [shape = 's32[]', space=sflag, size = 0x4, offset = 0, fixed_abs, tag = 'sflag constant byte address 0x0 - dummy sync flag']
  #allocation27 [shape = 's32[]', space=sflag, size = 0x4, offset = 0, fixed_abs, tag = 'sflag constant byte address 0x0 - dummy sync flag']
  #allocation28 [shape = 's32[]', space=sflag, size = 0x4, offset = 0, fixed_abs, tag = 'sflag constant byte address 0x0 - dummy sync flag']
  %s0 = inlined_call_operand.hbm [shape: f32[8,64], index: 0, kind: input, shape index: {}]
  %s1 = inlined_call_operand.hbm [shape: f32[13,1024], index: 1, kind: input, shape index: {}]
  %s2 = inlined_call_operand.hbm [shape: bf16[64,128], index: 2, kind: input, shape index: {}]
  %s3 = inlined_call_operand.hbm [shape: bf16[128,256], index: 3, kind: input, shape index: {}]
  %s4 = inlined_call_operand.hbm [shape: bf16[256,512], index: 4, kind: input, shape index: {}]
  %s5 = inlined_call_operand.hbm [shape: s8[512,1024], index: 5, kind: input, shape index: {}]
  %s6 = inlined_call_operand.hbm [shape: s8[1024,512], index: 6, kind: input, shape index: {}]
  %s7 = inlined_call_operand.hbm [shape: s8[1024,384], index: 7, kind: input, shape index: {}]
  %s8 = inlined_call_operand.hbm [shape: f32[8,896], index: 8, kind: output, shape index: {}]
  %s9 = sld [smem:[#allocation0]]
  $region50: #{tpu_custom_call.1} parent=0
    _
  %s11 = ssub.s32 1, %s9
  %s12 = scalar_select 0, %s11, %s9
  $region1: #{tpu_custom_call.1} parent=0
    #allocation9 [shape = 'u8[4096]{0}', space=vmem, size = 0x1000, scoped, tag = 'input window, operand 0, single buffered']
    #allocation10 [shape = 's32[1]{0}', space=sflag, size = 0x4, scoped, tag = 'scoped memory for tpu_custom_call.1']
    #allocation11 [shape = 's32[1]{0}', space=sflag, size = 0x4, scoped, tag = 'scoped memory for tpu_custom_call.1']
    #allocation12 [shape = 'u8[65536]{0}', space=vmem, size = 0x10000, scoped, tag = 'input window, operand 1, single buffered']
    #allocation13 [shape = 's32[1]{0}', space=sflag, size = 0x4, scoped, tag = 'scoped memory for tpu_custom_call.1']
    #allocation14 [shape = 'u8[28672]{0}', space=vmem, size = 0x7000, scoped, tag = 'output window, operand 0, single buffered']
    %13 = vsyncpa [#allocation10], 0
    %14 = vsyncpa [#allocation13], 0
    %15 = vsyncpa [#allocation11], 0
    // Predicated region
    $region2: #{tpu_custom_call.1} parent=1 // pred_check
      _
    $region3: #{tpu_custom_call.1} parent=1 // pred_check_branch
      %17 = sbr.rel (0) target = $region5
    $region4: #{tpu_custom_call.1} parent=1 // pred_region
      %s19 = ssub.s32 128, 128
      %20 = vsyncadd [#allocation10], %s19
      %s22 = sshll.u32 [#allocation9], 4
      %s23 = int_to_ptr.vmem [resolvable:$true] %s22
      %25 = dma.hbm_to_vmem [thread:$0]  %s0, 128, %s23, [#allocation10]
    $region5: #{tpu_custom_call.1} parent=1 // pred_fallthru
      _
    // Predicated region
    $region6: #{tpu_custom_call.1} parent=1 // pred_check
      _
    $region7: #{tpu_custom_call.1} parent=1 // pred_check_branch
      %27 = sbr.rel (0) target = $region9
    $region8: #{tpu_custom_call.1} parent=1 // pred_region
      %s29 = ssub.s32 2048, 2048
      %30 = vsyncadd [#allocation13], %s29
      %s31 = sshll.u32 [#allocation12], 4
      %s32 = int_to_ptr.vmem [resolvable:$true] %s31
      %37 = dma.hbm_to_vmem [thread:$0]  %s1, 2048, %s32, [#allocation13], 1024, 1024, 64
    $region9: #{tpu_custom_call.1} parent=1 // pred_fallthru
      _
    // Predicated region
    $region10: #{tpu_custom_call.1} parent=1 // pred_check
      _
    $region11: #{tpu_custom_call.1} parent=1 // pred_check_branch
      %39 = sbr.rel (0) target = $region13
    $region12: #{tpu_custom_call.1} parent=1 // pred_region
      %40 = dma.done [#allocation10], 128
    $region13: #{tpu_custom_call.1} parent=1 // pred_fallthru
      _
    // Predicated region
    $region14: #{tpu_custom_call.1} parent=1 // pred_check
      _
    $region15: #{tpu_custom_call.1} parent=1 // pred_check_branch
      %42 = sbr.rel (0) target = $region17
    $region16: #{tpu_custom_call.1} parent=1 // pred_region
      %43 = dma.done [#allocation13], 2048
    $region17: #{tpu_custom_call.1} parent=1 // pred_fallthru
      _
    // Predicated region
    $region18: #{tpu_custom_call.1} parent=1 // pred_check
      _
    $region19: #{tpu_custom_call.1} parent=1 // pred_check_branch
      %46 = sbr.rel target = $region21
    $region20: #{tpu_custom_call.1} parent=1 // pred_region
      %47 = sst [smem:[#allocation17]] [#allocation16]
      %48 = sst [smem:[#allocation18]] [#allocation15]
    $region21: #{tpu_custom_call.1} parent=1 // pred_fallthru
      _
    %50 = shalt.err (0)
    %s52 = sshll.u32 [#allocation2], 4
    %s53 = int_to_ptr.vmem [resolvable:$true] %s52
    %55 = dma.hbm_to_vmem [thread:$0]  %s2, 512, %s53, [#allocation8]
    %s56 = scalar_lea.sflag [#allocation8], 1
    // Predicated region
    $region22: #{tpu_custom_call.1} parent=1 // pred_check
      _
    $region23: #{tpu_custom_call.1} parent=1 // pred_check_branch
      %58 = sbr.rel target = $region25
    $region24: #{tpu_custom_call.1} parent=1 // pred_region
      %59 = sst [smem:[#allocation17]] [#allocation20]
      %60 = sst [smem:[#allocation18]] [#allocation19]
    $region25: #{tpu_custom_call.1} parent=1 // pred_fallthru
      _
    %62 = shalt.err (0)
    %s64 = sshll.u32 [#allocation3], 4
    %s65 = int_to_ptr.vmem [resolvable:$true] %s64
    %67 = dma.hbm_to_vmem [thread:$0]  %s3, 2048, %s65, %s56
    %s68 = scalar_lea.sflag [#allocation8], 2
    // Predicated region
    $region26: #{tpu_custom_call.1} parent=1 // pred_check
      _
    $region27: #{tpu_custom_call.1} parent=1 // pred_check_branch
      %70 = sbr.rel target = $region29
    $region28: #{tpu_custom_call.1} parent=1 // pred_region
      %71 = sst [smem:[#allocation17]] [#allocation22]
      %72 = sst [smem:[#allocation18]] [#allocation21]
    $region29: #{tpu_custom_call.1} parent=1 // pred_fallthru
      _
    %74 = shalt.err (0)
    %s76 = sshll.u32 [#allocation4], 4
    %s77 = int_to_ptr.vmem [resolvable:$true] %s76
    %79 = dma.hbm_to_vmem [thread:$0]  %s4, 8192, %s77, %s68
    %s80 = scalar_lea.sflag [#allocation8], 3
    // Predicated region
    $region30: #{tpu_custom_call.1} parent=1 // pred_check
      _
    $region31: #{tpu_custom_call.1} parent=1 // pred_check_branch
      %82 = sbr.rel target = $region33
    $region32: #{tpu_custom_call.1} parent=1 // pred_region
      %83 = sst [smem:[#allocation17]] [#allocation24]
      %84 = sst [smem:[#allocation18]] [#allocation23]
    $region33: #{tpu_custom_call.1} parent=1 // pred_fallthru
      _
    %86 = shalt.err (0)
    %s88 = sshll.u32 [#allocation5], 4
    %s89 = int_to_ptr.vmem [resolvable:$true] %s88
    %91 = dma.hbm_to_vmem [thread:$0]  %s5, 16384, %s89, %s80
    %s92 = scalar_lea.sflag [#allocation8], 4
    // Predicated region
    $region34: #{tpu_custom_call.1} parent=1 // pred_check
      _
    $region35: #{tpu_custom_call.1} parent=1 // pred_check_branch
      %94 = sbr.rel target = $region37
    $region36: #{tpu_custom_call.1} parent=1 // pred_region
      %95 = sst [smem:[#allocation17]] [#allocation26]
      %96 = sst [smem:[#allocation18]] [#allocation25]
    $region37: #{tpu_custom_call.1} parent=1 // pred_fallthru
      _
    %98 = shalt.err (0)
    %s100 = sshll.u32 [#allocation6], 4
    %s101 = int_to_ptr.vmem [resolvable:$true] %s100
    %103 = dma.hbm_to_vmem [thread:$0]  %s6, 16384, %s101, %s92
    %s104 = scalar_lea.sflag [#allocation8], 5
    // Predicated region
    $region38: #{tpu_custom_call.1} parent=1 // pred_check
      _
    $region39: #{tpu_custom_call.1} parent=1 // pred_check_branch
      %106 = sbr.rel target = $region41
    $region40: #{tpu_custom_call.1} parent=1 // pred_region
      %107 = sst [smem:[#allocation17]] [#allocation28]
      %108 = sst [smem:[#allocation18]] [#allocation27]
    $region41: #{tpu_custom_call.1} parent=1 // pred_fallthru
      _
    %110 = shalt.err (0)
    %s112 = sshll.u32 [#allocation7], 4
    %s113 = int_to_ptr.vmem [resolvable:$true] %s112
    %115 = dma.hbm_to_vmem [thread:$0]  %s7, 12288, %s113, %s104
    %v116 = vld [vmem:[#allocation12] sm:$0xff]
    %v117 = vld [vmem:[#allocation12 + $0x8] sm:$0xff]
    %v118 = vld [vmem:[#allocation12 + $0x10] sm:$0xff]
    %v119 = vld [vmem:[#allocation12 + $0x18] sm:$0xff]
    %v120 = vld [vmem:[#allocation12 + $0x20] sm:$0xff]
    %v121 = vld [vmem:[#allocation12 + $0x28] sm:$0xff]
    %v122 = vld [vmem:[#allocation12 + $0x30] sm:$0xff]
    %v123 = vld [vmem:[#allocation12 + $0x38] sm:$0xff]
    %v124 = vld [vmem:[#allocation12 + $0x40] sm:$0x1f]
    %v125 = vld [vmem:[#allocation12 + $0x48] sm:$0x1f]
    %v126 = vld [vmem:[#allocation12 + $0x50] sm:$0x1f]
    %v127 = vld [vmem:[#allocation12 + $0x58] sm:$0x1f]
    %v128 = vld [vmem:[#allocation12 + $0x60] sm:$0x1f]
    %v129 = vld [vmem:[#allocation12 + $0x68] sm:$0x1f]
    %v130 = vld [vmem:[#allocation12 + $0x70] sm:$0x1f]
    %v131 = vld [vmem:[#allocation12 + $0x78] sm:$0x1f]
    %v132 = vld [vmem:[#allocation9] sm:$0xff]
    %s133 = smul.u32 4, 8
    %s134 = smul.u32 %s133, 1
    %s135 = sshll.u32 %s134, 4
    %136 = dma.done [#allocation8], %s135
    %v137 = vld [vmem:[#allocation2] sm:$0xf]
    %v138 = vld [vmem:[#allocation2 + $0x4] sm:$0xf]
    %v139 = vld [vmem:[#allocation2 + $0x8] sm:$0xf]
    %v140 = vld [vmem:[#allocation2 + $0xc] sm:$0xf]
    %v141 = vld [vmem:[#allocation2 + $0x10] sm:$0xf]
    %v142 = vld [vmem:[#allocation2 + $0x14] sm:$0xf]
    %v143 = vld [vmem:[#allocation2 + $0x18] sm:$0xf]
    %v144 = vld [vmem:[#allocation2 + $0x1c] sm:$0xf]
    %v145 = vpack.c.bf16 %v132, %v132
    %v146 = vlaneseq
    %v147 = vshrl.u32 %v146, 7
    %v148 = vsub.s32 0, %v147
    %v149 = vrot.slane %v116, %v148
    %v158 = vunpack.c.l.b16 %v137
    %v159 = vunpack.c.l.b16 %v138
    %v160 = vunpack.c.l.b16 %v139
    %v161 = vunpack.c.l.b16 %v140
    %v162 = vunpack.c.l.b16 %v141
    %v163 = vunpack.c.l.b16 %v142
    %v164 = vunpack.c.l.b16 %v143
    %v165 = vunpack.c.l.b16 %v144
    %v166 = vpack.c.b16 %v159, %v158
    %v167 = vpack.c.b16 %v161, %v160
    %v168 = vpack.c.b16 %v163, %v162
    %v169 = vpack.c.b16 %v165, %v164
    %vm174 = vcmask 523264
    %v176 = vsel %vm174, %v145, 0
    %178 = vmatprep.subr.bf16.mxu0 0
    %179 = vmatpush1.bf16.msra.mxu0 0
    %180 = vmatprep.subr.bf16.mxu0 0
    %181 = vmatpush1.bf16.msra.mxu0 0
    %182 = vmatprep.subr.bf16.mxu0 0
    %183 = vmatpush1.bf16.msra.mxu0 0
    %184 = vmatprep.subr.bf16.mxu0 0
    %185 = vmatpush1.bf16.msra.mxu0 0
    %186 = vmatprep.subr.bf16.mxu0 0
    %187 = vmatpush1.bf16.msra.mxu0 %v169
    %188 = vmatprep.subr.bf16.mxu0 0
    %189 = vmatpush1.bf16.msra.mxu0 %v168
    %190 = vmatprep.subr.bf16.mxu0 0
    %191 = vmatpush1.bf16.msra.mxu0 %v167
    %192 = vmatprep.subr.bf16.mxu0 0
    %193 = vmatpush1.bf16.msra.mxu0 %v166
    %194 = vmatprep.subr.bf16.mxu0 0
    %195 = vmatpush2.bf16.msra.mxu0 0
    %196 = vmatprep.subr.bf16.mxu0 0
    %197 = vmatpush2.bf16.msra.mxu0 0
    %198 = vmatprep.subr.bf16.mxu0 0
    %199 = vmatpush2.bf16.msra.mxu0 0
    %200 = vmatprep.subr.bf16.mxu0 0
    %201 = vmatpush2.bf16.msra.mxu0 0
    %202 = vmatprep.subr.bf16.mxu0 0
    %203 = vmatpush2.bf16.msra.mxu0 0
    %204 = vmatprep.subr.bf16.mxu0 0
    %205 = vmatpush2.bf16.msra.mxu0 0
    %206 = vmatprep.subr.bf16.mxu0 0
    %207 = vmatpush2.bf16.msra.mxu0 0
    %208 = vmatprep.subr.bf16.mxu0 0
    %209 = vmatpush2.bf16.msra.mxu0 0
    %210 = vmatprep.mubr.bf16.mxu0 0
    %211 = vmatmul.mubr.bf16.gmra.mxu0 %v176
    %v212 = vpop.f32.mrf.mxu0
    %v213 = vadd.f32 %v149, %v212
    %v214 = vpop.f32.mrf.mxu0
    %v215 = vpop.f32.mrf.mxu0
    %v216 = vpop.f32.mrf.mxu0
    %217 = vdwg.mxu0
    %vm218 = vcmp.gt.f32.partialorder %v213, 0.0
    %v219 = vmul.f32 %v213, 0.2
    %v220 = vsel %vm218, %v213, %v219
    %s221 = smul.u32 4, 16
    %s222 = smul.u32 %s221, 2
    %s223 = sshll.u32 %s222, 4
    %224 = dma.done %s56, %s223
    %v225 = vld [vmem:[#allocation3] sm:$0xff]
    %v226 = vld [vmem:[#allocation3 + $0x8] sm:$0xff]
    %v227 = vld [vmem:[#allocation3 + $0x10] sm:$0xff]
    %v228 = vld [vmem:[#allocation3 + $0x18] sm:$0xff]
    %v229 = vld [vmem:[#allocation3 + $0x20] sm:$0xff]
    %v230 = vld [vmem:[#allocation3 + $0x28] sm:$0xff]
    %v231 = vld [vmem:[#allocation3 + $0x30] sm:$0xff]
    %v232 = vld [vmem:[#allocation3 + $0x38] sm:$0xff]
    %v233 = vld [vmem:[#allocation3 + $0x40] sm:$0xff]
    %v234 = vld [vmem:[#allocation3 + $0x48] sm:$0xff]
    %v235 = vld [vmem:[#allocation3 + $0x50] sm:$0xff]
    %v236 = vld [vmem:[#allocation3 + $0x58] sm:$0xff]
    %v237 = vld [vmem:[#allocation3 + $0x60] sm:$0xff]
    %v238 = vld [vmem:[#allocation3 + $0x68] sm:$0xff]
    %v239 = vld [vmem:[#allocation3 + $0x70] sm:$0xff]
    %v240 = vld [vmem:[#allocation3 + $0x78] sm:$0xff]
    %v241 = vpack.c.bf16 %v220, %v220
    %v242 = vlaneseq
    %v243 = vshrl.u32 %v242, 7
    %v244 = vsub.s32 1, %v243
    %v245 = vrot.slane %v116, %v244
    %v246 = vlaneseq
    %v247 = vshrl.u32 %v246, 7
    %v248 = vsub.s32 1, %v247
    %v249 = vrot.slane %v117, %v248
    %v266 = vunpack.c.l.b16 %v225
    %v267 = vunpack.c.h.b16 %v225
    %v268 = vunpack.c.l.b16 %v226
    %v269 = vunpack.c.h.b16 %v226
    %v270 = vunpack.c.l.b16 %v227
    %v271 = vunpack.c.h.b16 %v227
    %v272 = vunpack.c.l.b16 %v228
    %v273 = vunpack.c.h.b16 %v228
    %v274 = vunpack.c.l.b16 %v229
    %v275 = vunpack.c.h.b16 %v229
    %v276 = vunpack.c.l.b16 %v230
    %v277 = vunpack.c.h.b16 %v230
    %v278 = vunpack.c.l.b16 %v231
    %v279 = vunpack.c.h.b16 %v231
    %v280 = vunpack.c.l.b16 %v232
    %v281 = vunpack.c.h.b16 %v232
    %v282 = vunpack.c.l.b16 %v233
    %v283 = vunpack.c.h.b16 %v233
    %v284 = vunpack.c.l.b16 %v234
    %v285 = vunpack.c.h.b16 %v234
    %v286 = vunpack.c.l.b16 %v235
    %v287 = vunpack.c.h.b16 %v235
    %v288 = vunpack.c.l.b16 %v236
    %v289 = vunpack.c.h.b16 %v236
    %v290 = vunpack.c.l.b16 %v237
    %v291 = vunpack.c.h.b16 %v237
    %v292 = vunpack.c.l.b16 %v238
    %v293 = vunpack.c.h.b16 %v238
    %v294 = vunpack.c.l.b16 %v239
    %v295 = vunpack.c.h.b16 %v239
    %v296 = vunpack.c.l.b16 %v240
    %v297 = vunpack.c.h.b16 %v240
    %v298 = vpack.c.b16 %v268, %v266
    %v299 = vpack.c.b16 %v269, %v267
    %v300 = vpack.c.b16 %v272, %v270
    %v301 = vpack.c.b16 %v273, %v271
    %v302 = vpack.c.b16 %v276, %v274
    %v303 = vpack.c.b16 %v277, %v275
    %v304 = vpack.c.b16 %v280, %v278
    %v305 = vpack.c.b16 %v281, %v279
    %v306 = vpack.c.b16 %v284, %v282
    %v307 = vpack.c.b16 %v285, %v283
    %v308 = vpack.c.b16 %v288, %v286
    %v309 = vpack.c.b16 %v289, %v287
    %v310 = vpack.c.b16 %v292, %v290
    %v311 = vpack.c.b16 %v293, %v291
    %v312 = vpack.c.b16 %v296, %v294
    %v313 = vpack.c.b16 %v297, %v295
    %330 = vmatprep.subr.bf16.mxu0 %v313
    %331 = vmatpush1.bf16.msra.mxu0 %v312
    %332 = vmatprep.subr.bf16.mxu0 %v311
    %333 = vmatpush1.bf16.msra.mxu0 %v310
    %334 = vmatprep.subr.bf16.mxu0 %v309
    %335 = vmatpush1.bf16.msra.mxu0 %v308
    %336 = vmatprep.subr.bf16.mxu0 %v307
    %337 = vmatpush1.bf16.msra.mxu0 %v306
    %338 = vmatprep.subr.bf16.mxu0 %v305
    %339 = vmatpush1.bf16.msra.mxu0 %v304
    %340 = vmatprep.subr.bf16.mxu0 %v303
    %341 = vmatpush1.bf16.msra.mxu0 %v302
    %342 = vmatprep.subr.bf16.mxu0 %v301
    %343 = vmatpush1.bf16.msra.mxu0 %v300
    %344 = vmatprep.subr.bf16.mxu0 %v299
    %345 = vmatpush1.bf16.msra.mxu0 %v298
    %346 = vmatprep.subr.bf16.mxu0 0
    %347 = vmatpush2.bf16.msra.mxu0 0
    %348 = vmatprep.subr.bf16.mxu0 0
    %349 = vmatpush2.bf16.msra.mxu0 0
    %350 = vmatprep.subr.bf16.mxu0 0
    %351 = vmatpush2.bf16.msra.mxu0 0
    %352 = vmatprep.subr.bf16.mxu0 0
    %353 = vmatpush2.bf16.msra.mxu0 0
    %354 = vmatprep.subr.bf16.mxu0 0
    %355 = vmatpush2.bf16.msra.mxu0 0
    %356 = vmatprep.subr.bf16.mxu0 0
    %357 = vmatpush2.bf16.msra.mxu0 0
    %358 = vmatprep.subr.bf16.mxu0 0
    %359 = vmatpush2.bf16.msra.mxu0 0
    %360 = vmatprep.subr.bf16.mxu0 0
    %361 = vmatpush2.bf16.msra.mxu0 0
    %362 = vmatprep.mubr.bf16.mxu0 0
    %363 = vmatmul.mubr.bf16.gmra.mxu0 %v241
    %v364 = vpop.f32.mrf.mxu0
    %v365 = vadd.f32 %v245, %v364
    %v366 = vpop.f32.mrf.mxu0
    %v367 = vadd.f32 %v249, %v366
    %v368 = vpop.f32.mrf.mxu0
    %v369 = vpop.f32.mrf.mxu0
    %370 = vdwg.mxu0
    %v371 = vrot.slane %v365, 4
    %v372 = vadd.f32 %v365, %v371
    %v373 = vrot.slane %v372, 2
    %v374 = vadd.f32 %v372, %v373
    %v375 = vrot.slane %v374, 1
    %v376 = vadd.f32 %v374, %v375
    %v377 = vrot.slane %v367, 4
    %v378 = vadd.f32 %v367, %v377
    %v379 = vrot.slane %v378, 2
    %v380 = vadd.f32 %v378, %v379
    %v381 = vrot.slane %v380, 1
    %v382 = vadd.f32 %v380, %v381
    %v383 = vrcp.pop 8.0
    %v384 = vmul.f32 %v376, %v383
    %v385 = vmul.f32 %v382, %v383
    %v386 = vsub.f32 %v365, %v384
    %v387 = vsub.f32 %v367, %v385
    %v388 = vmul.f32 %v386, %v386
    %v389 = vmul.f32 %v387, %v387
    %v390 = vrot.slane %v388, 4
    %v391 = vadd.f32 %v388, %v390
    %v392 = vrot.slane %v391, 2
    %v393 = vadd.f32 %v391, %v392
    %v394 = vrot.slane %v393, 1
    %v395 = vadd.f32 %v393, %v394
    %v396 = vrot.slane %v389, 4
    %v397 = vadd.f32 %v389, %v396
    %v398 = vrot.slane %v397, 2
    %v399 = vadd.f32 %v397, %v398
    %v400 = vrot.slane %v399, 1
    %v401 = vadd.f32 %v399, %v400
    %v402 = vmul.f32 %v395, %v383
    %v403 = vmul.f32 %v401, %v383
    %v404 = vadd.f32 %v402, 0.8
    %v405 = vadd.f32 %v403, 0.8
    %v406 = vrsqrt.pop %v404
    %v407 = vrsqrt.pop %v405
    %v408 = vmul.f32 %v386, %v406
    %v409 = vmul.f32 %v387, %v407
    %v410 = vlaneseq
    %v411 = vshrl.u32 %v410, 7
    %v412 = vsub.s32 2, %v411
    %v413 = vrot.slane %v116, %v412
    %v414 = vlaneseq
    %v415 = vshrl.u32 %v414, 7
    %v416 = vsub.s32 2, %v415
    %v417 = vrot.slane %v117, %v416
    %v418 = vmul.f32 %v408, %v413
    %v419 = vmul.f32 %v409, %v417
    %v420 = vlaneseq
    %v421 = vshrl.u32 %v420, 7
    %v422 = vsub.s32 3, %v421
    %v423 = vrot.slane %v116, %v422
    %v424 = vlaneseq
    %v425 = vshrl.u32 %v424, 7
    %v426 = vsub.s32 3, %v425
    %v427 = vrot.slane %v117, %v426
    %v428 = vadd.f32 %v418, %v423
    %v429 = vadd.f32 %v419, %v427
    %vm430 = vcmp.gt.f32.partialorder %v428, 0.0
    %vm431 = vcmp.gt.f32.partialorder %v429, 0.0
    %v432 = vmul.f32 %v428, 0.2
    %v433 = vmul.f32 %v429, 0.2
    %v434 = vsel %vm430, %v428, %v432
    %v435 = vsel %vm431, %v429, %v433
    %s436 = smul.u32 4, 32
    %s437 = smul.u32 %s436, 4
    %s438 = sshll.u32 %s437, 4
    %439 = dma.done %s68, %s438
    %v440 = vld [vmem:[#allocation4] sm:$0xff]
    %v441 = vld [vmem:[#allocation4 + $0x8] sm:$0xff]
    %v442 = vld [vmem:[#allocation4 + $0x10] sm:$0xff]
    %v443 = vld [vmem:[#allocation4 + $0x18] sm:$0xff]
    %v444 = vld [vmem:[#allocation4 + $0x20] sm:$0xff]
    %v445 = vld [vmem:[#allocation4 + $0x28] sm:$0xff]
    %v446 = vld [vmem:[#allocation4 + $0x30] sm:$0xff]
    %v447 = vld [vmem:[#allocation4 + $0x38] sm:$0xff]
    %v448 = vld [vmem:[#allocation4 + $0x40] sm:$0xff]
    %v449 = vld [vmem:[#allocation4 + $0x48] sm:$0xff]
    %v450 = vld [vmem:[#allocation4 + $0x50] sm:$0xff]
    %v451 = vld [vmem:[#allocation4 + $0x58] sm:$0xff]
    %v452 = vld [vmem:[#allocation4 + $0x60] sm:$0xff]
    %v453 = vld [vmem:[#allocation4 + $0x68] sm:$0xff]
    %v454 = vld [vmem:[#allocation4 + $0x70] sm:$0xff]
    %v455 = vld [vmem:[#allocation4 + $0x78] sm:$0xff]
    %v456 = vld [vmem:[#allocation4 + $0x80] sm:$0xff]
    %v457 = vld [vmem:[#allocation4 + $0x88] sm:$0xff]
    %v458 = vld [vmem:[#allocation4 + $0x90] sm:$0xff]
    %v459 = vld [vmem:[#allocation4 + $0x98] sm:$0xff]
    %v460 = vld [vmem:[#allocation4 + $0xa0] sm:$0xff]
    %v461 = vld [vmem:[#allocation4 + $0xa8] sm:$0xff]
    %v462 = vld [vmem:[#allocation4 + $0xb0] sm:$0xff]
    %v463 = vld [vmem:[#allocation4 + $0xb8] sm:$0xff]
    %v464 = vld [vmem:[#allocation4 + $0xc0] sm:$0xff]
    %v465 = vld [vmem:[#allocation4 + $0xc8] sm:$0xff]
    %v466 = vld [vmem:[#allocation4 + $0xd0] sm:$0xff]
    %v467 = vld [vmem:[#allocation4 + $0xd8] sm:$0xff]
    %v468 = vld [vmem:[#allocation4 + $0xe0] sm:$0xff]
    %v469 = vld [vmem:[#allocation4 + $0xe8] sm:$0xff]
    %v470 = vld [vmem:[#allocation4 + $0xf0] sm:$0xff]
    %v471 = vld [vmem:[#allocation4 + $0xf8] sm:$0xff]
    %v472 = vld [vmem:[#allocation4 + $0x100] sm:$0xff]
    %v473 = vld [vmem:[#allocation4 + $0x108] sm:$0xff]
    %v474 = vld [vmem:[#allocation4 + $0x110] sm:$0xff]
    %v475 = vld [vmem:[#allocation4 + $0x118] sm:$0xff]
    %v476 = vld [vmem:[#allocation4 + $0x120] sm:$0xff]
    %v477 = vld [vmem:[#allocation4 + $0x128] sm:$0xff]
    %v478 = vld [vmem:[#allocation4 + $0x130] sm:$0xff]
    %v479 = vld [vmem:[#allocation4 + $0x138] sm:$0xff]
    %v480 = vld [vmem:[#allocation4 + $0x140] sm:$0xff]
    %v481 = vld [vmem:[#allocation4 + $0x148] sm:$0xff]
    %v482 = vld [vmem:[#allocation4 + $0x150] sm:$0xff]
    %v483 = vld [vmem:[#allocation4 + $0x158] sm:$0xff]
    %v484 = vld [vmem:[#allocation4 + $0x160] sm:$0xff]
    %v485 = vld [vmem:[#allocation4 + $0x168] sm:$0xff]
    %v486 = vld [vmem:[#allocation4 + $0x170] sm:$0xff]
    %v487 = vld [vmem:[#allocation4 + $0x178] sm:$0xff]
    %v488 = vld [vmem:[#allocation4 + $0x180] sm:$0xff]
    %v489 = vld [vmem:[#allocation4 + $0x188] sm:$0xff]
    %v490 = vld [vmem:[#allocation4 + $0x190] sm:$0xff]
    %v491 = vld [vmem:[#allocation4 + $0x198] sm:$0xff]
    %v492 = vld [vmem:[#allocation4 + $0x1a0] sm:$0xff]
    %v493 = vld [vmem:[#allocation4 + $0x1a8] sm:$0xff]
    %v494 = vld [vmem:[#allocation4 + $0x1b0] sm:$0xff]
    %v495 = vld [vmem:[#allocation4 + $0x1b8] sm:$0xff]
    %v496 = vld [vmem:[#allocation4 + $0x1c0] sm:$0xff]
    %v497 = vld [vmem:[#allocation4 + $0x1c8] sm:$0xff]
    %v498 = vld [vmem:[#allocation4 + $0x1d0] sm:$0xff]
    %v499 = vld [vmem:[#allocation4 + $0x1d8] sm:$0xff]
    %v500 = vld [vmem:[#allocation4 + $0x1e0] sm:$0xff]
    %v501 = vld [vmem:[#allocation4 + $0x1e8] sm:$0xff]
    %v502 = vld [vmem:[#allocation4 + $0x1f0] sm:$0xff]
    %v503 = vld [vmem:[#allocation4 + $0x1f8] sm:$0xff]
    %v504 = vpack.c.bf16 %v434, %v434
    %v505 = vpack.c.bf16 %v435, %v435
    %v506 = vlaneseq
    %v507 = vshrl.u32 %v506, 7
    %v508 = vsub.s32 4, %v507
    %v509 = vrot.slane %v116, %v508
    %v510 = vlaneseq
    %v511 = vshrl.u32 %v510, 7
    %v512 = vsub.s32 4, %v511
    %v513 = vrot.slane %v117, %v512
    %v514 = vlaneseq
    %v515 = vshrl.u32 %v514, 7
    %v516 = vsub.s32 4, %v515
    %v517 = vrot.slane %v118, %v516
    %v518 = vlaneseq
    %v519 = vshrl.u32 %v518, 7
    %v520 = vsub.s32 4, %v519
    %v521 = vrot.slane %v119, %v520
    %v586 = vunpack.c.l.b16 %v440
    %v587 = vunpack.c.h.b16 %v440
    %v588 = vunpack.c.l.b16 %v441
    %v589 = vunpack.c.h.b16 %v441
    %v590 = vunpack.c.l.b16 %v442
    %v591 = vunpack.c.h.b16 %v442
    %v592 = vunpack.c.l.b16 %v443
    %v593 = vunpack.c.h.b16 %v443
    %v594 = vunpack.c.l.b16 %v444
    %v595 = vunpack.c.h.b16 %v444
    %v596 = vunpack.c.l.b16 %v445
    %v597 = vunpack.c.h.b16 %v445
    %v598 = vunpack.c.l.b16 %v446
    %v599 = vunpack.c.h.b16 %v446
    %v600 = vunpack.c.l.b16 %v447
    %v601 = vunpack.c.h.b16 %v447
    %v602 = vunpack.c.l.b16 %v448
    %v603 = vunpack.c.h.b16 %v448
    %v604 = vunpack.c.l.b16 %v449
    %v605 = vunpack.c.h.b16 %v449
    %v606 = vunpack.c.l.b16 %v450
    %v607 = vunpack.c.h.b16 %v450
    %v608 = vunpack.c.l.b16 %v451
    %v609 = vunpack.c.h.b16 %v451
    %v610 = vunpack.c.l.b16 %v452
    %v611 = vunpack.c.h.b16 %v452
    %v612 = vunpack.c.l.b16 %v453
    %v613 = vunpack.c.h.b16 %v453
    %v614 = vunpack.c.l.b16 %v454
    %v615 = vunpack.c.h.b16 %v454
    %v616 = vunpack.c.l.b16 %v455
    %v617 = vunpack.c.h.b16 %v455
    %v618 = vunpack.c.l.b16 %v456
    %v619 = vunpack.c.h.b16 %v456
    %v620 = vunpack.c.l.b16 %v457
    %v621 = vunpack.c.h.b16 %v457
    %v622 = vunpack.c.l.b16 %v458
    %v623 = vunpack.c.h.b16 %v458
    %v624 = vunpack.c.l.b16 %v459
    %v625 = vunpack.c.h.b16 %v459
    %v626 = vunpack.c.l.b16 %v460
    %v627 = vunpack.c.h.b16 %v460
    %v628 = vunpack.c.l.b16 %v461
    %v629 = vunpack.c.h.b16 %v461
    %v630 = vunpack.c.l.b16 %v462
    %v631 = vunpack.c.h.b16 %v462
    %v632 = vunpack.c.l.b16 %v463
    %v633 = vunpack.c.h.b16 %v463
    %v634 = vunpack.c.l.b16 %v464
    %v635 = vunpack.c.h.b16 %v464
    %v636 = vunpack.c.l.b16 %v465
    %v637 = vunpack.c.h.b16 %v465
    %v638 = vunpack.c.l.b16 %v466
    %v639 = vunpack.c.h.b16 %v466
    %v640 = vunpack.c.l.b16 %v467
    %v641 = vunpack.c.h.b16 %v467
    %v642 = vunpack.c.l.b16 %v468
    %v643 = vunpack.c.h.b16 %v468
    %v644 = vunpack.c.l.b16 %v469
    %v645 = vunpack.c.h.b16 %v469
    %v646 = vunpack.c.l.b16 %v470
    %v647 = vunpack.c.h.b16 %v470
    %v648 = vunpack.c.l.b16 %v471
    %v649 = vunpack.c.h.b16 %v471
    %v650 = vunpack.c.l.b16 %v472
    %v651 = vunpack.c.h.b16 %v472
    %v652 = vunpack.c.l.b16 %v473
    %v653 = vunpack.c.h.b16 %v473
    %v654 = vunpack.c.l.b16 %v474
    %v655 = vunpack.c.h.b16 %v474
    %v656 = vunpack.c.l.b16 %v475
    %v657 = vunpack.c.h.b16 %v475
    %v658 = vunpack.c.l.b16 %v476
    %v659 = vunpack.c.h.b16 %v476
    %v660 = vunpack.c.l.b16 %v477
    %v661 = vunpack.c.h.b16 %v477
    %v662 = vunpack.c.l.b16 %v478
    %v663 = vunpack.c.h.b16 %v478
    %v664 = vunpack.c.l.b16 %v479
    %v665 = vunpack.c.h.b16 %v479
    %v666 = vunpack.c.l.b16 %v480
    %v667 = vunpack.c.h.b16 %v480
    %v668 = vunpack.c.l.b16 %v481
    %v669 = vunpack.c.h.b16 %v481
    %v670 = vunpack.c.l.b16 %v482
    %v671 = vunpack.c.h.b16 %v482
    %v672 = vunpack.c.l.b16 %v483
    %v673 = vunpack.c.h.b16 %v483
    %v674 = vunpack.c.l.b16 %v484
    %v675 = vunpack.c.h.b16 %v484
    %v676 = vunpack.c.l.b16 %v485
    %v677 = vunpack.c.h.b16 %v485
    %v678 = vunpack.c.l.b16 %v486
    %v679 = vunpack.c.h.b16 %v486
    %v680 = vunpack.c.l.b16 %v487
    %v681 = vunpack.c.h.b16 %v487
    %v682 = vunpack.c.l.b16 %v488
    %v683 = vunpack.c.h.b16 %v488
    %v684 = vunpack.c.l.b16 %v489
    %v685 = vunpack.c.h.b16 %v489
    %v686 = vunpack.c.l.b16 %v490
    %v687 = vunpack.c.h.b16 %v490
    %v688 = vunpack.c.l.b16 %v491
    %v689 = vunpack.c.h.b16 %v491
    %v690 = vunpack.c.l.b16 %v492
    %v691 = vunpack.c.h.b16 %v492
    %v692 = vunpack.c.l.b16 %v493
    %v693 = vunpack.c.h.b16 %v493
    %v694 = vunpack.c.l.b16 %v494
    %v695 = vunpack.c.h.b16 %v494
    %v696 = vunpack.c.l.b16 %v495
    %v697 = vunpack.c.h.b16 %v495
    %v698 = vunpack.c.l.b16 %v496
    %v699 = vunpack.c.h.b16 %v496
    %v700 = vunpack.c.l.b16 %v497
    %v701 = vunpack.c.h.b16 %v497
    %v702 = vunpack.c.l.b16 %v498
    %v703 = vunpack.c.h.b16 %v498
    %v704 = vunpack.c.l.b16 %v499
    %v705 = vunpack.c.h.b16 %v499
    %v706 = vunpack.c.l.b16 %v500
    %v707 = vunpack.c.h.b16 %v500
    %v708 = vunpack.c.l.b16 %v501
    %v709 = vunpack.c.h.b16 %v501
    %v710 = vunpack.c.l.b16 %v502
    %v711 = vunpack.c.h.b16 %v502
    %v712 = vunpack.c.l.b16 %v503
    %v713 = vunpack.c.h.b16 %v503
    %v714 = vpack.c.b16 %v590, %v586
    %v715 = vpack.c.b16 %v591, %v587
    %v716 = vpack.c.b16 %v592, %v588
    %v717 = vpack.c.b16 %v593, %v589
    %v718 = vpack.c.b16 %v598, %v594
    %v719 = vpack.c.b16 %v599, %v595
    %v720 = vpack.c.b16 %v600, %v596
    %v721 = vpack.c.b16 %v601, %v597
    %v722 = vpack.c.b16 %v606, %v602
    %v723 = vpack.c.b16 %v607, %v603
    %v724 = vpack.c.b16 %v608, %v604
    %v725 = vpack.c.b16 %v609, %v605
    %v726 = vpack.c.b16 %v614, %v610
    %v727 = vpack.c.b16 %v615, %v611
    %v728 = vpack.c.b16 %v616, %v612
    %v729 = vpack.c.b16 %v617, %v613
    %v730 = vpack.c.b16 %v622, %v618
    %v731 = vpack.c.b16 %v623, %v619
    %v732 = vpack.c.b16 %v624, %v620
    %v733 = vpack.c.b16 %v625, %v621
    %v734 = vpack.c.b16 %v630, %v626
    %v735 = vpack.c.b16 %v631, %v627
    %v736 = vpack.c.b16 %v632, %v628
    %v737 = vpack.c.b16 %v633, %v629
    %v738 = vpack.c.b16 %v638, %v634
    %v739 = vpack.c.b16 %v639, %v635
    %v740 = vpack.c.b16 %v640, %v636
    %v741 = vpack.c.b16 %v641, %v637
    %v742 = vpack.c.b16 %v646, %v642
    %v743 = vpack.c.b16 %v647, %v643
    %v744 = vpack.c.b16 %v648, %v644
    %v745 = vpack.c.b16 %v649, %v645
    %v746 = vpack.c.b16 %v654, %v650
    %v747 = vpack.c.b16 %v655, %v651
    %v748 = vpack.c.b16 %v656, %v652
    %v749 = vpack.c.b16 %v657, %v653
    %v750 = vpack.c.b16 %v662, %v658
    %v751 = vpack.c.b16 %v663, %v659
    %v752 = vpack.c.b16 %v664, %v660
    %v753 = vpack.c.b16 %v665, %v661
    %v754 = vpack.c.b16 %v670, %v666
    %v755 = vpack.c.b16 %v671, %v667
    %v756 = vpack.c.b16 %v672, %v668
    %v757 = vpack.c.b16 %v673, %v669
    %v758 = vpack.c.b16 %v678, %v674
    %v759 = vpack.c.b16 %v679, %v675
    %v760 = vpack.c.b16 %v680, %v676
    %v761 = vpack.c.b16 %v681, %v677
    %v762 = vpack.c.b16 %v686, %v682
    %v763 = vpack.c.b16 %v687, %v683
    %v764 = vpack.c.b16 %v688, %v684
    %v765 = vpack.c.b16 %v689, %v685
    %v766 = vpack.c.b16 %v694, %v690
    %v767 = vpack.c.b16 %v695, %v691
    %v768 = vpack.c.b16 %v696, %v692
    %v769 = vpack.c.b16 %v697, %v693
    %v770 = vpack.c.b16 %v702, %v698
    %v771 = vpack.c.b16 %v703, %v699
    %v772 = vpack.c.b16 %v704, %v700
    %v773 = vpack.c.b16 %v705, %v701
    %v774 = vpack.c.b16 %v710, %v706
    %v775 = vpack.c.b16 %v711, %v707
    %v776 = vpack.c.b16 %v712, %v708
    %v777 = vpack.c.b16 %v713, %v709
    %842 = vmatprep.subr.bf16.mxu0 %v743
    %843 = vmatpush1.bf16.msra.mxu0 %v742
    %844 = vmatprep.subr.bf16.mxu0 %v739
    %845 = vmatpush1.bf16.msra.mxu0 %v738
    %846 = vmatprep.subr.bf16.mxu0 %v735
    %847 = vmatpush1.bf16.msra.mxu0 %v734
    %848 = vmatprep.subr.bf16.mxu0 %v731
    %849 = vmatpush1.bf16.msra.mxu0 %v730
    %850 = vmatprep.subr.bf16.mxu0 %v727
    %851 = vmatpush1.bf16.msra.mxu0 %v726
    %852 = vmatprep.subr.bf16.mxu0 %v723
    %853 = vmatpush1.bf16.msra.mxu0 %v722
    %854 = vmatprep.subr.bf16.mxu0 %v719
    %855 = vmatpush1.bf16.msra.mxu0 %v718
    %856 = vmatprep.subr.bf16.mxu0 %v715
    %857 = vmatpush1.bf16.msra.mxu0 %v714
    %858 = vmatprep.subr.bf16.mxu0 %v775
    %859 = vmatpush2.bf16.msra.mxu0 %v774
    %860 = vmatprep.subr.bf16.mxu0 %v771
    %861 = vmatpush2.bf16.msra.mxu0 %v770
    %862 = vmatprep.subr.bf16.mxu0 %v767
    %863 = vmatpush2.bf16.msra.mxu0 %v766
    %864 = vmatprep.subr.bf16.mxu0 %v763
    %865 = vmatpush2.bf16.msra.mxu0 %v762
    %866 = vmatprep.subr.bf16.mxu0 %v759
    %867 = vmatpush2.bf16.msra.mxu0 %v758
    %868 = vmatprep.subr.bf16.mxu0 %v755
    %869 = vmatpush2.bf16.msra.mxu0 %v754
    %870 = vmatprep.subr.bf16.mxu0 %v751
    %871 = vmatpush2.bf16.msra.mxu0 %v750
    %872 = vmatprep.subr.bf16.mxu0 %v747
    %873 = vmatpush2.bf16.msra.mxu0 %v746
    %874 = vmatprep.mubr.bf16.mxu0 %v505
    %875 = vmatmul.mubr.bf16.gmra.mxu0 %v504
    %v876 = vpop.f32.mrf.mxu0
    %v877 = vadd.f32 %v509, %v876
    %v878 = vpop.f32.mrf.mxu0
    %v879 = vadd.f32 %v513, %v878
    %v880 = vpop.f32.mrf.mxu0
    %v881 = vpop.f32.mrf.mxu0
    %882 = vdwg.mxu0
    %883 = vmatprep.subr.bf16.mxu0 %v745
    %884 = vmatpush1.bf16.msra.mxu0 %v744
    %885 = vmatprep.subr.bf16.mxu0 %v741
    %886 = vmatpush1.bf16.msra.mxu0 %v740
    %887 = vmatprep.subr.bf16.mxu0 %v737
    %888 = vmatpush1.bf16.msra.mxu0 %v736
    %889 = vmatprep.subr.bf16.mxu0 %v733
    %890 = vmatpush1.bf16.msra.mxu0 %v732
    %891 = vmatprep.subr.bf16.mxu0 %v729
    %892 = vmatpush1.bf16.msra.mxu0 %v728
    %893 = vmatprep.subr.bf16.mxu0 %v725
    %894 = vmatpush1.bf16.msra.mxu0 %v724
    %895 = vmatprep.subr.bf16.mxu0 %v721
    %896 = vmatpush1.bf16.msra.mxu0 %v720
    %897 = vmatprep.subr.bf16.mxu0 %v717
    %898 = vmatpush1.bf16.msra.mxu0 %v716
    %899 = vmatprep.subr.bf16.mxu0 %v777
    %900 = vmatpush2.bf16.msra.mxu0 %v776
    %901 = vmatprep.subr.bf16.mxu0 %v773
    %902 = vmatpush2.bf16.msra.mxu0 %v772
    %903 = vmatprep.subr.bf16.mxu0 %v769
    %904 = vmatpush2.bf16.msra.mxu0 %v768
    %905 = vmatprep.subr.bf16.mxu0 %v765
    %906 = vmatpush2.bf16.msra.mxu0 %v764
    %907 = vmatprep.subr.bf16.mxu0 %v761
    %908 = vmatpush2.bf16.msra.mxu0 %v760
    %909 = vmatprep.subr.bf16.mxu0 %v757
    %910 = vmatpush2.bf16.msra.mxu0 %v756
    %911 = vmatprep.subr.bf16.mxu0 %v753
    %912 = vmatpush2.bf16.msra.mxu0 %v752
    %913 = vmatprep.subr.bf16.mxu0 %v749
    %914 = vmatpush2.bf16.msra.mxu0 %v748
    %915 = vmatprep.mubr.bf16.mxu0 %v505
    %916 = vmatmul.mubr.bf16.gmra.mxu0 %v504
    %v917 = vpop.f32.mrf.mxu0
    %v918 = vadd.f32 %v517, %v917
    %v919 = vpop.f32.mrf.mxu0
    %v920 = vadd.f32 %v521, %v919
    %v921 = vpop.f32.mrf.mxu0
    %v922 = vpop.f32.mrf.mxu0
    %923 = vdwg.mxu0
    %v924 = vrot.slane %v877, 4
    %v925 = vadd.f32 %v877, %v924
    %v926 = vrot.slane %v925, 2
    %v927 = vadd.f32 %v925, %v926
    %v928 = vrot.slane %v927, 1
    %v929 = vadd.f32 %v927, %v928
    %v930 = vrot.slane %v879, 4
    %v931 = vadd.f32 %v879, %v930
    %v932 = vrot.slane %v931, 2
    %v933 = vadd.f32 %v931, %v932
    %v934 = vrot.slane %v933, 1
    %v935 = vadd.f32 %v933, %v934
    %v936 = vrot.slane %v918, 4
    %v937 = vadd.f32 %v918, %v936
    %v938 = vrot.slane %v937, 2
    %v939 = vadd.f32 %v937, %v938
    %v940 = vrot.slane %v939, 1
    %v941 = vadd.f32 %v939, %v940
    %v942 = vrot.slane %v920, 4
    %v943 = vadd.f32 %v920, %v942
    %v944 = vrot.slane %v943, 2
    %v945 = vadd.f32 %v943, %v944
    %v946 = vrot.slane %v945, 1
    %v947 = vadd.f32 %v945, %v946
    %v948 = vmul.f32 %v929, %v383
    %v949 = vmul.f32 %v935, %v383
    %v950 = vmul.f32 %v941, %v383
    %v951 = vmul.f32 %v947, %v383
    %v952 = vsub.f32 %v877, %v948
    %v953 = vsub.f32 %v879, %v949
    %v954 = vsub.f32 %v918, %v950
    %v955 = vsub.f32 %v920, %v951
    %v956 = vmul.f32 %v952, %v952
    %v957 = vmul.f32 %v953, %v953
    %v958 = vmul.f32 %v954, %v954
    %v959 = vmul.f32 %v955, %v955
    %v960 = vrot.slane %v956, 4
    %v961 = vadd.f32 %v956, %v960
    %v962 = vrot.slane %v961, 2
    %v963 = vadd.f32 %v961, %v962
    %v964 = vrot.slane %v963, 1
    %v965 = vadd.f32 %v963, %v964
    %v966 = vrot.slane %v957, 4
    %v967 = vadd.f32 %v957, %v966
    %v968 = vrot.slane %v967, 2
    %v969 = vadd.f32 %v967, %v968
    %v970 = vrot.slane %v969, 1
    %v971 = vadd.f32 %v969, %v970
    %v972 = vrot.slane %v958, 4
    %v973 = vadd.f32 %v958, %v972
    %v974 = vrot.slane %v973, 2
    %v975 = vadd.f32 %v973, %v974
    %v976 = vrot.slane %v975, 1
    %v977 = vadd.f32 %v975, %v976
    %v978 = vrot.slane %v959, 4
    %v979 = vadd.f32 %v959, %v978
    %v980 = vrot.slane %v979, 2
    %v981 = vadd.f32 %v979, %v980
    %v982 = vrot.slane %v981, 1
    %v983 = vadd.f32 %v981, %v982
    %v984 = vmul.f32 %v965, %v383
    %v985 = vmul.f32 %v971, %v383
    %v986 = vmul.f32 %v977, %v383
    %v987 = vmul.f32 %v983, %v383
    %v988 = vadd.f32 %v984, 0.8
    %v989 = vadd.f32 %v985, 0.8
    %v990 = vadd.f32 %v986, 0.8
    %v991 = vadd.f32 %v987, 0.8
    %v992 = vrsqrt.pop %v988
    %v993 = vrsqrt.pop %v989
    %v994 = vrsqrt.pop %v990
    %v995 = vrsqrt.pop %v991
    %v996 = vmul.f32 %v952, %v992
    %v997 = vmul.f32 %v953, %v993
    %v998 = vmul.f32 %v954, %v994
    %v999 = vmul.f32 %v955, %v995
    %v1000 = vlaneseq
    %v1001 = vshrl.u32 %v1000, 7
    %v1002 = vsub.s32 5, %v1001
    %v1003 = vrot.slane %v116, %v1002
    %v1004 = vlaneseq
    %v1005 = vshrl.u32 %v1004, 7
    %v1006 = vsub.s32 5, %v1005
    %v1007 = vrot.slane %v117, %v1006
    %v1008 = vlaneseq
    %v1009 = vshrl.u32 %v1008, 7
    %v1010 = vsub.s32 5, %v1009
    %v1011 = vrot.slane %v118, %v1010
    %v1012 = vlaneseq
    %v1013 = vshrl.u32 %v1012, 7
    %v1014 = vsub.s32 5, %v1013
    %v1015 = vrot.slane %v119, %v1014
    %v1016 = vmul.f32 %v996, %v1003
    %v1017 = vmul.f32 %v997, %v1007
    %v1018 = vmul.f32 %v998, %v1011
    %v1019 = vmul.f32 %v999, %v1015
    %v1020 = vlaneseq
    %v1021 = vshrl.u32 %v1020, 7
    %v1022 = vsub.s32 6, %v1021
    %v1023 = vrot.slane %v116, %v1022
    %v1024 = vlaneseq
    %v1025 = vshrl.u32 %v1024, 7
    %v1026 = vsub.s32 6, %v1025
    %v1027 = vrot.slane %v117, %v1026
    %v1028 = vlaneseq
    %v1029 = vshrl.u32 %v1028, 7
    %v1030 = vsub.s32 6, %v1029
    %v1031 = vrot.slane %v118, %v1030
    %v1032 = vlaneseq
    %v1033 = vshrl.u32 %v1032, 7
    %v1034 = vsub.s32 6, %v1033
    %v1035 = vrot.slane %v119, %v1034
    %v1036 = vadd.f32 %v1016, %v1023
    %v1037 = vadd.f32 %v1017, %v1027
    %v1038 = vadd.f32 %v1018, %v1031
    %v1039 = vadd.f32 %v1019, %v1035
    %vm1040 = vcmp.gt.f32.partialorder %v1036, 0.0
    %vm1041 = vcmp.gt.f32.partialorder %v1037, 0.0
    %vm1042 = vcmp.gt.f32.partialorder %v1038, 0.0
    %vm1043 = vcmp.gt.f32.partialorder %v1039, 0.0
    %v1044 = vmul.f32 %v1036, 0.2
    %v1045 = vmul.f32 %v1037, 0.2
    %v1046 = vmul.f32 %v1038, 0.2
    %v1047 = vmul.f32 %v1039, 0.2
    %v1048 = vsel %vm1040, %v1036, %v1044
    %v1049 = vsel %vm1041, %v1037, %v1045
    %v1050 = vsel %vm1042, %v1038, %v1046
    %v1051 = vsel %vm1043, %v1039, %v1047
    %s1052 = smul.u32 2, 64
    %s1053 = smul.u32 %s1052, 8
    %s1054 = sshll.u32 %s1053, 4
    %1055 = dma.done %s80, %s1054
    %v1056 = vld [vmem:[#allocation5] sm:$0xff]
    %v1057 = vld [vmem:[#allocation5 + $0x8] sm:$0xff]
    %v1058 = vld [vmem:[#allocation5 + $0x10] sm:$0xff]
    %v1059 = vld [vmem:[#allocation5 + $0x18] sm:$0xff]
    %v1060 = vld [vmem:[#allocation5 + $0x20] sm:$0xff]
    %v1061 = vld [vmem:[#allocation5 + $0x28] sm:$0xff]
    %v1062 = vld [vmem:[#allocation5 + $0x30] sm:$0xff]
    %v1063 = vld [vmem:[#allocation5 + $0x38] sm:$0xff]
    %v1064 = vld [vmem:[#allocation5 + $0x40] sm:$0xff]
    %v1065 = vld [vmem:[#allocation5 + $0x48] sm:$0xff]
    %v1066 = vld [vmem:[#allocation5 + $0x50] sm:$0xff]
    %v1067 = vld [vmem:[#allocation5 + $0x58] sm:$0xff]
    %v1068 = vld [vmem:[#allocation5 + $0x60] sm:$0xff]
    %v1069 = vld [vmem:[#allocation5 + $0x68] sm:$0xff]
    %v1070 = vld [vmem:[#allocation5 + $0x70] sm:$0xff]
    %v1071 = vld [vmem:[#allocation5 + $0x78] sm:$0xff]
    %v1072 = vld [vmem:[#allocation5 + $0x80] sm:$0xff]
    %v1073 = vld [vmem:[#allocation5 + $0x88] sm:$0xff]
    %v1074 = vld [vmem:[#allocation5 + $0x90] sm:$0xff]
    %v1075 = vld [vmem:[#allocation5 + $0x98] sm:$0xff]
    %v1076 = vld [vmem:[#allocation5 + $0xa0] sm:$0xff]
    %v1077 = vld [vmem:[#allocation5 + $0xa8] sm:$0xff]
    %v1078 = vld [vmem:[#allocation5 + $0xb0] sm:$0xff]
    %v1079 = vld [vmem:[#allocation5 + $0xb8] sm:$0xff]
    %v1080 = vld [vmem:[#allocation5 + $0xc0] sm:$0xff]
    %v1081 = vld [vmem:[#allocation5 + $0xc8] sm:$0xff]
    %v1082 = vld [vmem:[#allocation5 + $0xd0] sm:$0xff]
    %v1083 = vld [vmem:[#allocation5 + $0xd8] sm:$0xff]
    %v1084 = vld [vmem:[#allocation5 + $0xe0] sm:$0xff]
    %v1085 = vld [vmem:[#allocation5 + $0xe8] sm:$0xff]
    %v1086 = vld [vmem:[#allocation5 + $0xf0] sm:$0xff]
    %v1087 = vld [vmem:[#allocation5 + $0xf8] sm:$0xff]
    %v1088 = vld [vmem:[#allocation5 + $0x100] sm:$0xff]
    %v1089 = vld [vmem:[#allocation5 + $0x108] sm:$0xff]
    %v1090 = vld [vmem:[#allocation5 + $0x110] sm:$0xff]
    %v1091 = vld [vmem:[#allocation5 + $0x118] sm:$0xff]
    %v1092 = vld [vmem:[#allocation5 + $0x120] sm:$0xff]
    %v1093 = vld [vmem:[#allocation5 + $0x128] sm:$0xff]
    %v1094 = vld [vmem:[#allocation5 + $0x130] sm:$0xff]
    %v1095 = vld [vmem:[#allocation5 + $0x138] sm:$0xff]
    %v1096 = vld [vmem:[#allocation5 + $0x140] sm:$0xff]
    %v1097 = vld [vmem:[#allocation5 + $0x148] sm:$0xff]
    %v1098 = vld [vmem:[#allocation5 + $0x150] sm:$0xff]
    %v1099 = vld [vmem:[#allocation5 + $0x158] sm:$0xff]
    %v1100 = vld [vmem:[#allocation5 + $0x160] sm:$0xff]
    %v1101 = vld [vmem:[#allocation5 + $0x168] sm:$0xff]
    %v1102 = vld [vmem:[#allocation5 + $0x170] sm:$0xff]
    %v1103 = vld [vmem:[#allocation5 + $0x178] sm:$0xff]
    %v1104 = vld [vmem:[#allocation5 + $0x180] sm:$0xff]
    %v1105 = vld [vmem:[#allocation5 + $0x188] sm:$0xff]
    %v1106 = vld [vmem:[#allocation5 + $0x190] sm:$0xff]
    %v1107 = vld [vmem:[#allocation5 + $0x198] sm:$0xff]
    %v1108 = vld [vmem:[#allocation5 + $0x1a0] sm:$0xff]
    %v1109 = vld [vmem:[#allocation5 + $0x1a8] sm:$0xff]
    %v1110 = vld [vmem:[#allocation5 + $0x1b0] sm:$0xff]
    %v1111 = vld [vmem:[#allocation5 + $0x1b8] sm:$0xff]
    %v1112 = vld [vmem:[#allocation5 + $0x1c0] sm:$0xff]
    %v1113 = vld [vmem:[#allocation5 + $0x1c8] sm:$0xff]
    %v1114 = vld [vmem:[#allocation5 + $0x1d0] sm:$0xff]
    %v1115 = vld [vmem:[#allocation5 + $0x1d8] sm:$0xff]
    %v1116 = vld [vmem:[#allocation5 + $0x1e0] sm:$0xff]
    %v1117 = vld [vmem:[#allocation5 + $0x1e8] sm:$0xff]
    %v1118 = vld [vmem:[#allocation5 + $0x1f0] sm:$0xff]
    %v1119 = vld [vmem:[#allocation5 + $0x1f8] sm:$0xff]
    %v1120 = vld [vmem:[#allocation5 + $0x200] sm:$0xff]
    %v1121 = vld [vmem:[#allocation5 + $0x208] sm:$0xff]
    %v1122 = vld [vmem:[#allocation5 + $0x210] sm:$0xff]
    %v1123 = vld [vmem:[#allocation5 + $0x218] sm:$0xff]
    %v1124 = vld [vmem:[#allocation5 + $0x220] sm:$0xff]
    %v1125 = vld [vmem:[#allocation5 + $0x228] sm:$0xff]
    %v1126 = vld [vmem:[#allocation5 + $0x230] sm:$0xff]
    %v1127 = vld [vmem:[#allocation5 + $0x238] sm:$0xff]
    %v1128 = vld [vmem:[#allocation5 + $0x240] sm:$0xff]
    %v1129 = vld [vmem:[#allocation5 + $0x248] sm:$0xff]
    %v1130 = vld [vmem:[#allocation5 + $0x250] sm:$0xff]
    %v1131 = vld [vmem:[#allocation5 + $0x258] sm:$0xff]
    %v1132 = vld [vmem:[#allocation5 + $0x260] sm:$0xff]
    %v1133 = vld [vmem:[#allocation5 + $0x268] sm:$0xff]
    %v1134 = vld [vmem:[#allocation5 + $0x270] sm:$0xff]
    %v1135 = vld [vmem:[#allocation5 + $0x278] sm:$0xff]
    %v1136 = vld [vmem:[#allocation5 + $0x280] sm:$0xff]
    %v1137 = vld [vmem:[#allocation5 + $0x288] sm:$0xff]
    %v1138 = vld [vmem:[#allocation5 + $0x290] sm:$0xff]
    %v1139 = vld [vmem:[#allocation5 + $0x298] sm:$0xff]
    %v1140 = vld [vmem:[#allocation5 + $0x2a0] sm:$0xff]
    %v1141 = vld [vmem:[#allocation5 + $0x2a8] sm:$0xff]
    %v1142 = vld [vmem:[#allocation5 + $0x2b0] sm:$0xff]
    %v1143 = vld [vmem:[#allocation5 + $0x2b8] sm:$0xff]
    %v1144 = vld [vmem:[#allocation5 + $0x2c0] sm:$0xff]
    %v1145 = vld [vmem:[#allocation5 + $0x2c8] sm:$0xff]
    %v1146 = vld [vmem:[#allocation5 + $0x2d0] sm:$0xff]
    %v1147 = vld [vmem:[#allocation5 + $0x2d8] sm:$0xff]
    %v1148 = vld [vmem:[#allocation5 + $0x2e0] sm:$0xff]
    %v1149 = vld [vmem:[#allocation5 + $0x2e8] sm:$0xff]
    %v1150 = vld [vmem:[#allocation5 + $0x2f0] sm:$0xff]
    %v1151 = vld [vmem:[#allocation5 + $0x2f8] sm:$0xff]
    %v1152 = vld [vmem:[#allocation5 + $0x300] sm:$0xff]
    %v1153 = vld [vmem:[#allocation5 + $0x308] sm:$0xff]
    %v1154 = vld [vmem:[#allocation5 + $0x310] sm:$0xff]
    %v1155 = vld [vmem:[#allocation5 + $0x318] sm:$0xff]
    %v1156 = vld [vmem:[#allocation5 + $0x320] sm:$0xff]
    %v1157 = vld [vmem:[#allocation5 + $0x328] sm:$0xff]
    %v1158 = vld [vmem:[#allocation5 + $0x330] sm:$0xff]
    %v1159 = vld [vmem:[#allocation5 + $0x338] sm:$0xff]
    %v1160 = vld [vmem:[#allocation5 + $0x340] sm:$0xff]
    %v1161 = vld [vmem:[#allocation5 + $0x348] sm:$0xff]
    %v1162 = vld [vmem:[#allocation5 + $0x350] sm:$0xff]
    %v1163 = vld [vmem:[#allocation5 + $0x358] sm:$0xff]
    %v1164 = vld [vmem:[#allocation5 + $0x360] sm:$0xff]
    %v1165 = vld [vmem:[#allocation5 + $0x368] sm:$0xff]
    %v1166 = vld [vmem:[#allocation5 + $0x370] sm:$0xff]
    %v1167 = vld [vmem:[#allocation5 + $0x378] sm:$0xff]
    %v1168 = vld [vmem:[#allocation5 + $0x380] sm:$0xff]
    %v1169 = vld [vmem:[#allocation5 + $0x388] sm:$0xff]
    %v1170 = vld [vmem:[#allocation5 + $0x390] sm:$0xff]
    %v1171 = vld [vmem:[#allocation5 + $0x398] sm:$0xff]
    %v1172 = vld [vmem:[#allocation5 + $0x3a0] sm:$0xff]
    %v1173 = vld [vmem:[#allocation5 + $0x3a8] sm:$0xff]
    %v1174 = vld [vmem:[#allocation5 + $0x3b0] sm:$0xff]
    %v1175 = vld [vmem:[#allocation5 + $0x3b8] sm:$0xff]
    %v1176 = vld [vmem:[#allocation5 + $0x3c0] sm:$0xff]
    %v1177 = vld [vmem:[#allocation5 + $0x3c8] sm:$0xff]
    %v1178 = vld [vmem:[#allocation5 + $0x3d0] sm:$0xff]
    %v1179 = vld [vmem:[#allocation5 + $0x3d8] sm:$0xff]
    %v1180 = vld [vmem:[#allocation5 + $0x3e0] sm:$0xff]
    %v1181 = vld [vmem:[#allocation5 + $0x3e8] sm:$0xff]
    %v1182 = vld [vmem:[#allocation5 + $0x3f0] sm:$0xff]
    %v1183 = vld [vmem:[#allocation5 + $0x3f8] sm:$0xff]
    %v1184 = vunpack.c.l.s8.bf16 %v1056
    %v1185 = vunpack.c.l.s8.bf16 %v1057
    %v1186 = vunpack.c.l.s8.bf16 %v1058
    %v1187 = vunpack.c.l.s8.bf16 %v1059
    %v1188 = vunpack.c.l.s8.bf16 %v1060
    %v1189 = vunpack.c.l.s8.bf16 %v1061
    %v1190 = vunpack.c.l.s8.bf16 %v1062
    %v1191 = vunpack.c.l.s8.bf16 %v1063
    %v1192 = vunpack.c.h.s8.bf16 %v1056
    %v1193 = vunpack.c.h.s8.bf16 %v1057
    %v1194 = vunpack.c.h.s8.bf16 %v1058
    %v1195 = vunpack.c.h.s8.bf16 %v1059
    %v1196 = vunpack.c.h.s8.bf16 %v1060
    %v1197 = vunpack.c.h.s8.bf16 %v1061
    %v1198 = vunpack.c.h.s8.bf16 %v1062
    %v1199 = vunpack.c.h.s8.bf16 %v1063
    %v1200 = vunpack.c.l.s8.bf16 %v1064
    %v1201 = vunpack.c.l.s8.bf16 %v1065
    %v1202 = vunpack.c.l.s8.bf16 %v1066
    %v1203 = vunpack.c.l.s8.bf16 %v1067
    %v1204 = vunpack.c.l.s8.bf16 %v1068
    %v1205 = vunpack.c.l.s8.bf16 %v1069
    %v1206 = vunpack.c.l.s8.bf16 %v1070
    %v1207 = vunpack.c.l.s8.bf16 %v1071
    %v1208 = vunpack.c.h.s8.bf16 %v1064
    %v1209 = vunpack.c.h.s8.bf16 %v1065
    %v1210 = vunpack.c.h.s8.bf16 %v1066
    %v1211 = vunpack.c.h.s8.bf16 %v1067
    %v1212 = vunpack.c.h.s8.bf16 %v1068
    %v1213 = vunpack.c.h.s8.bf16 %v1069
    %v1214 = vunpack.c.h.s8.bf16 %v1070
    %v1215 = vunpack.c.h.s8.bf16 %v1071
    %v1216 = vunpack.c.l.s8.bf16 %v1072
    %v1217 = vunpack.c.l.s8.bf16 %v1073
    %v1218 = vunpack.c.l.s8.bf16 %v1074
    %v1219 = vunpack.c.l.s8.bf16 %v1075
    %v1220 = vunpack.c.l.s8.bf16 %v1076
    %v1221 = vunpack.c.l.s8.bf16 %v1077
    %v1222 = vunpack.c.l.s8.bf16 %v1078
    %v1223 = vunpack.c.l.s8.bf16 %v1079
    %v1224 = vunpack.c.h.s8.bf16 %v1072
    %v1225 = vunpack.c.h.s8.bf16 %v1073
    %v1226 = vunpack.c.h.s8.bf16 %v1074
    %v1227 = vunpack.c.h.s8.bf16 %v1075
    %v1228 = vunpack.c.h.s8.bf16 %v1076
    %v1229 = vunpack.c.h.s8.bf16 %v1077
    %v1230 = vunpack.c.h.s8.bf16 %v1078
    %v1231 = vunpack.c.h.s8.bf16 %v1079
    %v1232 = vunpack.c.l.s8.bf16 %v1080
    %v1233 = vunpack.c.l.s8.bf16 %v1081
    %v1234 = vunpack.c.l.s8.bf16 %v1082
    %v1235 = vunpack.c.l.s8.bf16 %v1083
    %v1236 = vunpack.c.l.s8.bf16 %v1084
    %v1237 = vunpack.c.l.s8.bf16 %v1085
    %v1238 = vunpack.c.l.s8.bf16 %v1086
    %v1239 = vunpack.c.l.s8.bf16 %v1087
    %v1240 = vunpack.c.h.s8.bf16 %v1080
    %v1241 = vunpack.c.h.s8.bf16 %v1081
    %v1242 = vunpack.c.h.s8.bf16 %v1082
    %v1243 = vunpack.c.h.s8.bf16 %v1083
    %v1244 = vunpack.c.h.s8.bf16 %v1084
    %v1245 = vunpack.c.h.s8.bf16 %v1085
    %v1246 = vunpack.c.h.s8.bf16 %v1086
    %v1247 = vunpack.c.h.s8.bf16 %v1087
    %v1248 = vunpack.c.l.s8.bf16 %v1088
    %v1249 = vunpack.c.l.s8.bf16 %v1089
    %v1250 = vunpack.c.l.s8.bf16 %v1090
    %v1251 = vunpack.c.l.s8.bf16 %v1091
    %v1252 = vunpack.c.l.s8.bf16 %v1092
    %v1253 = vunpack.c.l.s8.bf16 %v1093
    %v1254 = vunpack.c.l.s8.bf16 %v1094
    %v1255 = vunpack.c.l.s8.bf16 %v1095
    %v1256 = vunpack.c.h.s8.bf16 %v1088
    %v1257 = vunpack.c.h.s8.bf16 %v1089
    %v1258 = vunpack.c.h.s8.bf16 %v1090
    %v1259 = vunpack.c.h.s8.bf16 %v1091
    %v1260 = vunpack.c.h.s8.bf16 %v1092
    %v1261 = vunpack.c.h.s8.bf16 %v1093
    %v1262 = vunpack.c.h.s8.bf16 %v1094
    %v1263 = vunpack.c.h.s8.bf16 %v1095
    %v1264 = vunpack.c.l.s8.bf16 %v1096
    %v1265 = vunpack.c.l.s8.bf16 %v1097
    %v1266 = vunpack.c.l.s8.bf16 %v1098
    %v1267 = vunpack.c.l.s8.bf16 %v1099
    %v1268 = vunpack.c.l.s8.bf16 %v1100
    %v1269 = vunpack.c.l.s8.bf16 %v1101
    %v1270 = vunpack.c.l.s8.bf16 %v1102
    %v1271 = vunpack.c.l.s8.bf16 %v1103
    %v1272 = vunpack.c.h.s8.bf16 %v1096
    %v1273 = vunpack.c.h.s8.bf16 %v1097
    %v1274 = vunpack.c.h.s8.bf16 %v1098
    %v1275 = vunpack.c.h.s8.bf16 %v1099
    %v1276 = vunpack.c.h.s8.bf16 %v1100
    %v1277 = vunpack.c.h.s8.bf16 %v1101
    %v1278 = vunpack.c.h.s8.bf16 %v1102
    %v1279 = vunpack.c.h.s8.bf16 %v1103
    %v1280 = vunpack.c.l.s8.bf16 %v1104
    %v1281 = vunpack.c.l.s8.bf16 %v1105
    %v1282 = vunpack.c.l.s8.bf16 %v1106
    %v1283 = vunpack.c.l.s8.bf16 %v1107
    %v1284 = vunpack.c.l.s8.bf16 %v1108
    %v1285 = vunpack.c.l.s8.bf16 %v1109
    %v1286 = vunpack.c.l.s8.bf16 %v1110
    %v1287 = vunpack.c.l.s8.bf16 %v1111
    %v1288 = vunpack.c.h.s8.bf16 %v1104
    %v1289 = vunpack.c.h.s8.bf16 %v1105
    %v1290 = vunpack.c.h.s8.bf16 %v1106
    %v1291 = vunpack.c.h.s8.bf16 %v1107
    %v1292 = vunpack.c.h.s8.bf16 %v1108
    %v1293 = vunpack.c.h.s8.bf16 %v1109
    %v1294 = vunpack.c.h.s8.bf16 %v1110
    %v1295 = vunpack.c.h.s8.bf16 %v1111
    %v1296 = vunpack.c.l.s8.bf16 %v1112
    %v1297 = vunpack.c.l.s8.bf16 %v1113
    %v1298 = vunpack.c.l.s8.bf16 %v1114
    %v1299 = vunpack.c.l.s8.bf16 %v1115
    %v1300 = vunpack.c.l.s8.bf16 %v1116
    %v1301 = vunpack.c.l.s8.bf16 %v1117
    %v1302 = vunpack.c.l.s8.bf16 %v1118
    %v1303 = vunpack.c.l.s8.bf16 %v1119
    %v1304 = vunpack.c.h.s8.bf16 %v1112
    %v1305 = vunpack.c.h.s8.bf16 %v1113
    %v1306 = vunpack.c.h.s8.bf16 %v1114
    %v1307 = vunpack.c.h.s8.bf16 %v1115
    %v1308 = vunpack.c.h.s8.bf16 %v1116
    %v1309 = vunpack.c.h.s8.bf16 %v1117
    %v1310 = vunpack.c.h.s8.bf16 %v1118
    %v1311 = vunpack.c.h.s8.bf16 %v1119
    %v1312 = vunpack.c.l.s8.bf16 %v1120
    %v1313 = vunpack.c.l.s8.bf16 %v1121
    %v1314 = vunpack.c.l.s8.bf16 %v1122
    %v1315 = vunpack.c.l.s8.bf16 %v1123
    %v1316 = vunpack.c.l.s8.bf16 %v1124
    %v1317 = vunpack.c.l.s8.bf16 %v1125
    %v1318 = vunpack.c.l.s8.bf16 %v1126
    %v1319 = vunpack.c.l.s8.bf16 %v1127
    %v1320 = vunpack.c.h.s8.bf16 %v1120
    %v1321 = vunpack.c.h.s8.bf16 %v1121
    %v1322 = vunpack.c.h.s8.bf16 %v1122
    %v1323 = vunpack.c.h.s8.bf16 %v1123
    %v1324 = vunpack.c.h.s8.bf16 %v1124
    %v1325 = vunpack.c.h.s8.bf16 %v1125
    %v1326 = vunpack.c.h.s8.bf16 %v1126
    %v1327 = vunpack.c.h.s8.bf16 %v1127
    %v1328 = vunpack.c.l.s8.bf16 %v1128
    %v1329 = vunpack.c.l.s8.bf16 %v1129
    %v1330 = vunpack.c.l.s8.bf16 %v1130
    %v1331 = vunpack.c.l.s8.bf16 %v1131
    %v1332 = vunpack.c.l.s8.bf16 %v1132
    %v1333 = vunpack.c.l.s8.bf16 %v1133
    %v1334 = vunpack.c.l.s8.bf16 %v1134
    %v1335 = vunpack.c.l.s8.bf16 %v1135
    %v1336 = vunpack.c.h.s8.bf16 %v1128
    %v1337 = vunpack.c.h.s8.bf16 %v1129
    %v1338 = vunpack.c.h.s8.bf16 %v1130
    %v1339 = vunpack.c.h.s8.bf16 %v1131
    %v1340 = vunpack.c.h.s8.bf16 %v1132
    %v1341 = vunpack.c.h.s8.bf16 %v1133
    %v1342 = vunpack.c.h.s8.bf16 %v1134
    %v1343 = vunpack.c.h.s8.bf16 %v1135
    %v1344 = vunpack.c.l.s8.bf16 %v1136
    %v1345 = vunpack.c.l.s8.bf16 %v1137
    %v1346 = vunpack.c.l.s8.bf16 %v1138
    %v1347 = vunpack.c.l.s8.bf16 %v1139
    %v1348 = vunpack.c.l.s8.bf16 %v1140
    %v1349 = vunpack.c.l.s8.bf16 %v1141
    %v1350 = vunpack.c.l.s8.bf16 %v1142
    %v1351 = vunpack.c.l.s8.bf16 %v1143
    %v1352 = vunpack.c.h.s8.bf16 %v1136
    %v1353 = vunpack.c.h.s8.bf16 %v1137
    %v1354 = vunpack.c.h.s8.bf16 %v1138
    %v1355 = vunpack.c.h.s8.bf16 %v1139
    %v1356 = vunpack.c.h.s8.bf16 %v1140
    %v1357 = vunpack.c.h.s8.bf16 %v1141
    %v1358 = vunpack.c.h.s8.bf16 %v1142
    %v1359 = vunpack.c.h.s8.bf16 %v1143
    %v1360 = vunpack.c.l.s8.bf16 %v1144
    %v1361 = vunpack.c.l.s8.bf16 %v1145
    %v1362 = vunpack.c.l.s8.bf16 %v1146
    %v1363 = vunpack.c.l.s8.bf16 %v1147
    %v1364 = vunpack.c.l.s8.bf16 %v1148
    %v1365 = vunpack.c.l.s8.bf16 %v1149
    %v1366 = vunpack.c.l.s8.bf16 %v1150
    %v1367 = vunpack.c.l.s8.bf16 %v1151
    %v1368 = vunpack.c.h.s8.bf16 %v1144
    %v1369 = vunpack.c.h.s8.bf16 %v1145
    %v1370 = vunpack.c.h.s8.bf16 %v1146
    %v1371 = vunpack.c.h.s8.bf16 %v1147
    %v1372 = vunpack.c.h.s8.bf16 %v1148
    %v1373 = vunpack.c.h.s8.bf16 %v1149
    %v1374 = vunpack.c.h.s8.bf16 %v1150
    %v1375 = vunpack.c.h.s8.bf16 %v1151
    %v1376 = vunpack.c.l.s8.bf16 %v1152
    %v1377 = vunpack.c.l.s8.bf16 %v1153
    %v1378 = vunpack.c.l.s8.bf16 %v1154
    %v1379 = vunpack.c.l.s8.bf16 %v1155
    %v1380 = vunpack.c.l.s8.bf16 %v1156
    %v1381 = vunpack.c.l.s8.bf16 %v1157
    %v1382 = vunpack.c.l.s8.bf16 %v1158
    %v1383 = vunpack.c.l.s8.bf16 %v1159
    %v1384 = vunpack.c.h.s8.bf16 %v1152
    %v1385 = vunpack.c.h.s8.bf16 %v1153
    %v1386 = vunpack.c.h.s8.bf16 %v1154
    %v1387 = vunpack.c.h.s8.bf16 %v1155
    %v1388 = vunpack.c.h.s8.bf16 %v1156
    %v1389 = vunpack.c.h.s8.bf16 %v1157
    %v1390 = vunpack.c.h.s8.bf16 %v1158
    %v1391 = vunpack.c.h.s8.bf16 %v1159
    %v1392 = vunpack.c.l.s8.bf16 %v1160
    %v1393 = vunpack.c.l.s8.bf16 %v1161
    %v1394 = vunpack.c.l.s8.bf16 %v1162
    %v1395 = vunpack.c.l.s8.bf16 %v1163
    %v1396 = vunpack.c.l.s8.bf16 %v1164
    %v1397 = vunpack.c.l.s8.bf16 %v1165
    %v1398 = vunpack.c.l.s8.bf16 %v1166
    %v1399 = vunpack.c.l.s8.bf16 %v1167
    %v1400 = vunpack.c.h.s8.bf16 %v1160
    %v1401 = vunpack.c.h.s8.bf16 %v1161
    %v1402 = vunpack.c.h.s8.bf16 %v1162
    %v1403 = vunpack.c.h.s8.bf16 %v1163
    %v1404 = vunpack.c.h.s8.bf16 %v1164
    %v1405 = vunpack.c.h.s8.bf16 %v1165
    %v1406 = vunpack.c.h.s8.bf16 %v1166
    %v1407 = vunpack.c.h.s8.bf16 %v1167
    %v1408 = vunpack.c.l.s8.bf16 %v1168
    %v1409 = vunpack.c.l.s8.bf16 %v1169
    %v1410 = vunpack.c.l.s8.bf16 %v1170
    %v1411 = vunpack.c.l.s8.bf16 %v1171
    %v1412 = vunpack.c.l.s8.bf16 %v1172
    %v1413 = vunpack.c.l.s8.bf16 %v1173
    %v1414 = vunpack.c.l.s8.bf16 %v1174
    %v1415 = vunpack.c.l.s8.bf16 %v1175
    %v1416 = vunpack.c.h.s8.bf16 %v1168
    %v1417 = vunpack.c.h.s8.bf16 %v1169
    %v1418 = vunpack.c.h.s8.bf16 %v1170
    %v1419 = vunpack.c.h.s8.bf16 %v1171
    %v1420 = vunpack.c.h.s8.bf16 %v1172
    %v1421 = vunpack.c.h.s8.bf16 %v1173
    %v1422 = vunpack.c.h.s8.bf16 %v1174
    %v1423 = vunpack.c.h.s8.bf16 %v1175
    %v1424 = vunpack.c.l.s8.bf16 %v1176
    %v1425 = vunpack.c.l.s8.bf16 %v1177
    %v1426 = vunpack.c.l.s8.bf16 %v1178
    %v1427 = vunpack.c.l.s8.bf16 %v1179
    %v1428 = vunpack.c.l.s8.bf16 %v1180
    %v1429 = vunpack.c.l.s8.bf16 %v1181
    %v1430 = vunpack.c.l.s8.bf16 %v1182
    %v1431 = vunpack.c.l.s8.bf16 %v1183
    %v1432 = vunpack.c.h.s8.bf16 %v1176
    %v1433 = vunpack.c.h.s8.bf16 %v1177
    %v1434 = vunpack.c.h.s8.bf16 %v1178
    %v1435 = vunpack.c.h.s8.bf16 %v1179
    %v1436 = vunpack.c.h.s8.bf16 %v1180
    %v1437 = vunpack.c.h.s8.bf16 %v1181
    %v1438 = vunpack.c.h.s8.bf16 %v1182
    %v1439 = vunpack.c.h.s8.bf16 %v1183
    %v1440 = vpack.c.bf16 %v1048, %v1048
    %v1441 = vpack.c.bf16 %v1049, %v1049
    %v1442 = vpack.c.bf16 %v1050, %v1050
    %v1443 = vpack.c.bf16 %v1051, %v1051
    %1444 = vmatprep.subr.bf16.mxu0 %v1241
    %1445 = vmatpush1.bf16.msra.mxu0 %v1240
    %1446 = vmatprep.subr.bf16.mxu0 %v1233
    %1447 = vmatpush1.bf16.msra.mxu0 %v1232
    %1448 = vmatprep.subr.bf16.mxu0 %v1225
    %1449 = vmatpush1.bf16.msra.mxu0 %v1224
    %1450 = vmatprep.subr.bf16.mxu0 %v1217
    %1451 = vmatpush1.bf16.msra.mxu0 %v1216
    %1452 = vmatprep.subr.bf16.mxu0 %v1209
    %1453 = vmatpush1.bf16.msra.mxu0 %v1208
    %1454 = vmatprep.subr.bf16.mxu0 %v1201
    %1455 = vmatpush1.bf16.msra.mxu0 %v1200
    %1456 = vmatprep.subr.bf16.mxu0 %v1193
    %1457 = vmatpush1.bf16.msra.mxu0 %v1192
    %1458 = vmatprep.subr.bf16.mxu0 %v1185
    %1459 = vmatpush1.bf16.msra.mxu0 %v1184
    %1460 = vmatprep.subr.bf16.mxu0 %v1305
    %1461 = vmatpush2.bf16.msra.mxu0 %v1304
    %1462 = vmatprep.subr.bf16.mxu0 %v1297
    %1463 = vmatpush2.bf16.msra.mxu0 %v1296
    %1464 = vmatprep.subr.bf16.mxu0 %v1289
    %1465 = vmatpush2.bf16.msra.mxu0 %v1288
    %1466 = vmatprep.subr.bf16.mxu0 %v1281
    %1467 = vmatpush2.bf16.msra.mxu0 %v1280
    %1468 = vmatprep.subr.bf16.mxu0 %v1273
    %1469 = vmatpush2.bf16.msra.mxu0 %v1272
    %1470 = vmatprep.subr.bf16.mxu0 %v1265
    %1471 = vmatpush2.bf16.msra.mxu0 %v1264
    %1472 = vmatprep.subr.bf16.mxu0 %v1257
    %1473 = vmatpush2.bf16.msra.mxu0 %v1256
    %1474 = vmatprep.subr.bf16.mxu0 %v1249
    %1475 = vmatpush2.bf16.msra.mxu0 %v1248
    %1476 = vmatprep.mubr.bf16.mxu0 %v1441
    %1477 = vmatmul.mubr.bf16.gmra.mxu0 %v1440
    %v1478 = vpop.f32.mrf.mxu0
    %v1479 = vadd.f32 0.0, %v1478
    %v1480 = vpop.f32.mrf.mxu0
    %v1481 = vadd.f32 0.0, %v1480
    %v1482 = vpop.f32.mrf.mxu0
    %v1483 = vpop.f32.mrf.mxu0
    %1484 = vdwg.mxu0
    %1485 = vmatprep.subr.bf16.mxu0 %v1369
    %1486 = vmatpush1.bf16.msra.mxu0 %v1368
    %1487 = vmatprep.subr.bf16.mxu0 %v1361
    %1488 = vmatpush1.bf16.msra.mxu0 %v1360
    %1489 = vmatprep.subr.bf16.mxu0 %v1353
    %1490 = vmatpush1.bf16.msra.mxu0 %v1352
    %1491 = vmatprep.subr.bf16.mxu0 %v1345
    %1492 = vmatpush1.bf16.msra.mxu0 %v1344
    %1493 = vmatprep.subr.bf16.mxu0 %v1337
    %1494 = vmatpush1.bf16.msra.mxu0 %v1336
    %1495 = vmatprep.subr.bf16.mxu0 %v1329
    %1496 = vmatpush1.bf16.msra.mxu0 %v1328
    %1497 = vmatprep.subr.bf16.mxu0 %v1321
    %1498 = vmatpush1.bf16.msra.mxu0 %v1320
    %1499 = vmatprep.subr.bf16.mxu0 %v1313
    %1500 = vmatpush1.bf16.msra.mxu0 %v1312
    %1501 = vmatprep.subr.bf16.mxu0 %v1433
    %1502 = vmatpush2.bf16.msra.mxu0 %v1432
    %1503 = vmatprep.subr.bf16.mxu0 %v1425
    %1504 = vmatpush2.bf16.msra.mxu0 %v1424
    %1505 = vmatprep.subr.bf16.mxu0 %v1417
    %1506 = vmatpush2.bf16.msra.mxu0 %v1416
    %1507 = vmatprep.subr.bf16.mxu0 %v1409
    %1508 = vmatpush2.bf16.msra.mxu0 %v1408
    %1509 = vmatprep.subr.bf16.mxu0 %v1401
    %1510 = vmatpush2.bf16.msra.mxu0 %v1400
    %1511 = vmatprep.subr.bf16.mxu0 %v1393
    %1512 = vmatpush2.bf16.msra.mxu0 %v1392
    %1513 = vmatprep.subr.bf16.mxu0 %v1385
    %1514 = vmatpush2.bf16.msra.mxu0 %v1384
    %1515 = vmatprep.subr.bf16.mxu0 %v1377
    %1516 = vmatpush2.bf16.msra.mxu0 %v1376
    %1517 = vmatprep.mubr.bf16.mxu0 %v1443
    %1518 = vmatmul.mubr.bf16.gmra.mxu0 %v1442
    %v1519 = vpop.f32.mrf.mxu0
    %v1520 = vadd.f32 %v1479, %v1519
    %v1521 = vpop.f32.mrf.mxu0
    %v1522 = vadd.f32 %v1481, %v1521
    %v1523 = vpop.f32.mrf.mxu0
    %v1524 = vpop.f32.mrf.mxu0
    %1525 = vdwg.mxu0
    %1526 = vmatprep.subr.bf16.mxu0 %v1243
    %1527 = vmatpush1.bf16.msra.mxu0 %v1242
    %1528 = vmatprep.subr.bf16.mxu0 %v1235
    %1529 = vmatpush1.bf16.msra.mxu0 %v1234
    %1530 = vmatprep.subr.bf16.mxu0 %v1227
    %1531 = vmatpush1.bf16.msra.mxu0 %v1226
    %1532 = vmatprep.subr.bf16.mxu0 %v1219
    %1533 = vmatpush1.bf16.msra.mxu0 %v1218
    %1534 = vmatprep.subr.bf16.mxu0 %v1211
    %1535 = vmatpush1.bf16.msra.mxu0 %v1210
    %1536 = vmatprep.subr.bf16.mxu0 %v1203
    %1537 = vmatpush1.bf16.msra.mxu0 %v1202
    %1538 = vmatprep.subr.bf16.mxu0 %v1195
    %1539 = vmatpush1.bf16.msra.mxu0 %v1194
    %1540 = vmatprep.subr.bf16.mxu0 %v1187
    %1541 = vmatpush1.bf16.msra.mxu0 %v1186
    %1542 = vmatprep.subr.bf16.mxu0 %v1307
    %1543 = vmatpush2.bf16.msra.mxu0 %v1306
    %1544 = vmatprep.subr.bf16.mxu0 %v1299
    %1545 = vmatpush2.bf16.msra.mxu0 %v1298
    %1546 = vmatprep.subr.bf16.mxu0 %v1291
    %1547 = vmatpush2.bf16.msra.mxu0 %v1290
    %1548 = vmatprep.subr.bf16.mxu0 %v1283
    %1549 = vmatpush2.bf16.msra.mxu0 %v1282
    %1550 = vmatprep.subr.bf16.mxu0 %v1275
    %1551 = vmatpush2.bf16.msra.mxu0 %v1274
    %1552 = vmatprep.subr.bf16.mxu0 %v1267
    %1553 = vmatpush2.bf16.msra.mxu0 %v1266
    %1554 = vmatprep.subr.bf16.mxu0 %v1259
    %1555 = vmatpush2.bf16.msra.mxu0 %v1258
    %1556 = vmatprep.subr.bf16.mxu0 %v1251
    %1557 = vmatpush2.bf16.msra.mxu0 %v1250
    %1558 = vmatprep.mubr.bf16.mxu0 %v1441
    %1559 = vmatmul.mubr.bf16.gmra.mxu0 %v1440
    %v1560 = vpop.f32.mrf.mxu0
    %v1561 = vadd.f32 0.0, %v1560
    %v1562 = vpop.f32.mrf.mxu0
    %v1563 = vadd.f32 0.0, %v1562
    %v1564 = vpop.f32.mrf.mxu0
    %v1565 = vpop.f32.mrf.mxu0
    %1566 = vdwg.mxu0
    %1567 = vmatprep.subr.bf16.mxu0 %v1371
    %1568 = vmatpush1.bf16.msra.mxu0 %v1370
    %1569 = vmatprep.subr.bf16.mxu0 %v1363
    %1570 = vmatpush1.bf16.msra.mxu0 %v1362
    %1571 = vmatprep.subr.bf16.mxu0 %v1355
    %1572 = vmatpush1.bf16.msra.mxu0 %v1354
    %1573 = vmatprep.subr.bf16.mxu0 %v1347
    %1574 = vmatpush1.bf16.msra.mxu0 %v1346
    %1575 = vmatprep.subr.bf16.mxu0 %v1339
    %1576 = vmatpush1.bf16.msra.mxu0 %v1338
    %1577 = vmatprep.subr.bf16.mxu0 %v1331
    %1578 = vmatpush1.bf16.msra.mxu0 %v1330
    %1579 = vmatprep.subr.bf16.mxu0 %v1323
    %1580 = vmatpush1.bf16.msra.mxu0 %v1322
    %1581 = vmatprep.subr.bf16.mxu0 %v1315
    %1582 = vmatpush1.bf16.msra.mxu0 %v1314
    %1583 = vmatprep.subr.bf16.mxu0 %v1435
    %1584 = vmatpush2.bf16.msra.mxu0 %v1434
    %1585 = vmatprep.subr.bf16.mxu0 %v1427
    %1586 = vmatpush2.bf16.msra.mxu0 %v1426
    %1587 = vmatprep.subr.bf16.mxu0 %v1419
    %1588 = vmatpush2.bf16.msra.mxu0 %v1418
    %1589 = vmatprep.subr.bf16.mxu0 %v1411
    %1590 = vmatpush2.bf16.msra.mxu0 %v1410
    %1591 = vmatprep.subr.bf16.mxu0 %v1403
    %1592 = vmatpush2.bf16.msra.mxu0 %v1402
    %1593 = vmatprep.subr.bf16.mxu0 %v1395
    %1594 = vmatpush2.bf16.msra.mxu0 %v1394
    %1595 = vmatprep.subr.bf16.mxu0 %v1387
    %1596 = vmatpush2.bf16.msra.mxu0 %v1386
    %1597 = vmatprep.subr.bf16.mxu0 %v1379
    %1598 = vmatpush2.bf16.msra.mxu0 %v1378
    %1599 = vmatprep.mubr.bf16.mxu0 %v1443
    %1600 = vmatmul.mubr.bf16.gmra.mxu0 %v1442
    %v1601 = vpop.f32.mrf.mxu0
    %v1602 = vadd.f32 %v1561, %v1601
    %v1603 = vpop.f32.mrf.mxu0
    %v1604 = vadd.f32 %v1563, %v1603
    %v1605 = vpop.f32.mrf.mxu0
    %v1606 = vpop.f32.mrf.mxu0
    %1607 = vdwg.mxu0
    %1608 = vmatprep.subr.bf16.mxu0 %v1245
    %1609 = vmatpush1.bf16.msra.mxu0 %v1244
    %1610 = vmatprep.subr.bf16.mxu0 %v1237
    %1611 = vmatpush1.bf16.msra.mxu0 %v1236
    %1612 = vmatprep.subr.bf16.mxu0 %v1229
    %1613 = vmatpush1.bf16.msra.mxu0 %v1228
    %1614 = vmatprep.subr.bf16.mxu0 %v1221
    %1615 = vmatpush1.bf16.msra.mxu0 %v1220
    %1616 = vmatprep.subr.bf16.mxu0 %v1213
    %1617 = vmatpush1.bf16.msra.mxu0 %v1212
    %1618 = vmatprep.subr.bf16.mxu0 %v1205
    %1619 = vmatpush1.bf16.msra.mxu0 %v1204
    %1620 = vmatprep.subr.bf16.mxu0 %v1197
    %1621 = vmatpush1.bf16.msra.mxu0 %v1196
    %1622 = vmatprep.subr.bf16.mxu0 %v1189
    %1623 = vmatpush1.bf16.msra.mxu0 %v1188
    %1624 = vmatprep.subr.bf16.mxu0 %v1309
    %1625 = vmatpush2.bf16.msra.mxu0 %v1308
    %1626 = vmatprep.subr.bf16.mxu0 %v1301
    %1627 = vmatpush2.bf16.msra.mxu0 %v1300
    %1628 = vmatprep.subr.bf16.mxu0 %v1293
    %1629 = vmatpush2.bf16.msra.mxu0 %v1292
    %1630 = vmatprep.subr.bf16.mxu0 %v1285
    %1631 = vmatpush2.bf16.msra.mxu0 %v1284
    %1632 = vmatprep.subr.bf16.mxu0 %v1277
    %1633 = vmatpush2.bf16.msra.mxu0 %v1276
    %1634 = vmatprep.subr.bf16.mxu0 %v1269
    %1635 = vmatpush2.bf16.msra.mxu0 %v1268
    %1636 = vmatprep.subr.bf16.mxu0 %v1261
    %1637 = vmatpush2.bf16.msra.mxu0 %v1260
    %1638 = vmatprep.subr.bf16.mxu0 %v1253
    %1639 = vmatpush2.bf16.msra.mxu0 %v1252
    %1640 = vmatprep.mubr.bf16.mxu0 %v1441
    %1641 = vmatmul.mubr.bf16.gmra.mxu0 %v1440
    %v1642 = vpop.f32.mrf.mxu0
    %v1643 = vadd.f32 0.0, %v1642
    %v1644 = vpop.f32.mrf.mxu0
    %v1645 = vadd.f32 0.0, %v1644
    %v1646 = vpop.f32.mrf.mxu0
    %v1647 = vpop.f32.mrf.mxu0
    %1648 = vdwg.mxu0
    %1649 = vmatprep.subr.bf16.mxu0 %v1373
    %1650 = vmatpush1.bf16.msra.mxu0 %v1372
    %1651 = vmatprep.subr.bf16.mxu0 %v1365
    %1652 = vmatpush1.bf16.msra.mxu0 %v1364
    %1653 = vmatprep.subr.bf16.mxu0 %v1357
    %1654 = vmatpush1.bf16.msra.mxu0 %v1356
    %1655 = vmatprep.subr.bf16.mxu0 %v1349
    %1656 = vmatpush1.bf16.msra.mxu0 %v1348
    %1657 = vmatprep.subr.bf16.mxu0 %v1341
    %1658 = vmatpush1.bf16.msra.mxu0 %v1340
    %1659 = vmatprep.subr.bf16.mxu0 %v1333
    %1660 = vmatpush1.bf16.msra.mxu0 %v1332
    %1661 = vmatprep.subr.bf16.mxu0 %v1325
    %1662 = vmatpush1.bf16.msra.mxu0 %v1324
    %1663 = vmatprep.subr.bf16.mxu0 %v1317
    %1664 = vmatpush1.bf16.msra.mxu0 %v1316
    %1665 = vmatprep.subr.bf16.mxu0 %v1437
    %1666 = vmatpush2.bf16.msra.mxu0 %v1436
    %1667 = vmatprep.subr.bf16.mxu0 %v1429
    %1668 = vmatpush2.bf16.msra.mxu0 %v1428
    %1669 = vmatprep.subr.bf16.mxu0 %v1421
    %1670 = vmatpush2.bf16.msra.mxu0 %v1420
    %1671 = vmatprep.subr.bf16.mxu0 %v1413
    %1672 = vmatpush2.bf16.msra.mxu0 %v1412
    %1673 = vmatprep.subr.bf16.mxu0 %v1405
    %1674 = vmatpush2.bf16.msra.mxu0 %v1404
    %1675 = vmatprep.subr.bf16.mxu0 %v1397
    %1676 = vmatpush2.bf16.msra.mxu0 %v1396
    %1677 = vmatprep.subr.bf16.mxu0 %v1389
    %1678 = vmatpush2.bf16.msra.mxu0 %v1388
    %1679 = vmatprep.subr.bf16.mxu0 %v1381
    %1680 = vmatpush2.bf16.msra.mxu0 %v1380
    %1681 = vmatprep.mubr.bf16.mxu0 %v1443
    %1682 = vmatmul.mubr.bf16.gmra.mxu0 %v1442
    %v1683 = vpop.f32.mrf.mxu0
    %v1684 = vadd.f32 %v1643, %v1683
    %v1685 = vpop.f32.mrf.mxu0
    %v1686 = vadd.f32 %v1645, %v1685
    %v1687 = vpop.f32.mrf.mxu0
    %v1688 = vpop.f32.mrf.mxu0
    %1689 = vdwg.mxu0
    %1690 = vmatprep.subr.bf16.mxu0 %v1247
    %1691 = vmatpush1.bf16.msra.mxu0 %v1246
    %1692 = vmatprep.subr.bf16.mxu0 %v1239
    %1693 = vmatpush1.bf16.msra.mxu0 %v1238
    %1694 = vmatprep.subr.bf16.mxu0 %v1231
    %1695 = vmatpush1.bf16.msra.mxu0 %v1230
    %1696 = vmatprep.subr.bf16.mxu0 %v1223
    %1697 = vmatpush1.bf16.msra.mxu0 %v1222
    %1698 = vmatprep.subr.bf16.mxu0 %v1215
    %1699 = vmatpush1.bf16.msra.mxu0 %v1214
    %1700 = vmatprep.subr.bf16.mxu0 %v1207
    %1701 = vmatpush1.bf16.msra.mxu0 %v1206
    %1702 = vmatprep.subr.bf16.mxu0 %v1199
    %1703 = vmatpush1.bf16.msra.mxu0 %v1198
    %1704 = vmatprep.subr.bf16.mxu0 %v1191
    %1705 = vmatpush1.bf16.msra.mxu0 %v1190
    %1706 = vmatprep.subr.bf16.mxu0 %v1311
    %1707 = vmatpush2.bf16.msra.mxu0 %v1310
    %1708 = vmatprep.subr.bf16.mxu0 %v1303
    %1709 = vmatpush2.bf16.msra.mxu0 %v1302
    %1710 = vmatprep.subr.bf16.mxu0 %v1295
    %1711 = vmatpush2.bf16.msra.mxu0 %v1294
    %1712 = vmatprep.subr.bf16.mxu0 %v1287
    %1713 = vmatpush2.bf16.msra.mxu0 %v1286
    %1714 = vmatprep.subr.bf16.mxu0 %v1279
    %1715 = vmatpush2.bf16.msra.mxu0 %v1278
    %1716 = vmatprep.subr.bf16.mxu0 %v1271
    %1717 = vmatpush2.bf16.msra.mxu0 %v1270
    %1718 = vmatprep.subr.bf16.mxu0 %v1263
    %1719 = vmatpush2.bf16.msra.mxu0 %v1262
    %1720 = vmatprep.subr.bf16.mxu0 %v1255
    %1721 = vmatpush2.bf16.msra.mxu0 %v1254
    %1722 = vmatprep.mubr.bf16.mxu0 %v1441
    %1723 = vmatmul.mubr.bf16.gmra.mxu0 %v1440
    %v1724 = vpop.f32.mrf.mxu0
    %v1725 = vadd.f32 0.0, %v1724
    %v1726 = vpop.f32.mrf.mxu0
    %v1727 = vadd.f32 0.0, %v1726
    %v1728 = vpop.f32.mrf.mxu0
    %v1729 = vpop.f32.mrf.mxu0
    %1730 = vdwg.mxu0
    %1731 = vmatprep.subr.bf16.mxu0 %v1375
    %1732 = vmatpush1.bf16.msra.mxu0 %v1374
    %1733 = vmatprep.subr.bf16.mxu0 %v1367
    %1734 = vmatpush1.bf16.msra.mxu0 %v1366
    %1735 = vmatprep.subr.bf16.mxu0 %v1359
    %1736 = vmatpush1.bf16.msra.mxu0 %v1358
    %1737 = vmatprep.subr.bf16.mxu0 %v1351
    %1738 = vmatpush1.bf16.msra.mxu0 %v1350
    %1739 = vmatprep.subr.bf16.mxu0 %v1343
    %1740 = vmatpush1.bf16.msra.mxu0 %v1342
    %1741 = vmatprep.subr.bf16.mxu0 %v1335
    %1742 = vmatpush1.bf16.msra.mxu0 %v1334
    %1743 = vmatprep.subr.bf16.mxu0 %v1327
    %1744 = vmatpush1.bf16.msra.mxu0 %v1326
    %1745 = vmatprep.subr.bf16.mxu0 %v1319
    %1746 = vmatpush1.bf16.msra.mxu0 %v1318
    %1747 = vmatprep.subr.bf16.mxu0 %v1439
    %1748 = vmatpush2.bf16.msra.mxu0 %v1438
    %1749 = vmatprep.subr.bf16.mxu0 %v1431
    %1750 = vmatpush2.bf16.msra.mxu0 %v1430
    %1751 = vmatprep.subr.bf16.mxu0 %v1423
    %1752 = vmatpush2.bf16.msra.mxu0 %v1422
    %1753 = vmatprep.subr.bf16.mxu0 %v1415
    %1754 = vmatpush2.bf16.msra.mxu0 %v1414
    %1755 = vmatprep.subr.bf16.mxu0 %v1407
    %1756 = vmatpush2.bf16.msra.mxu0 %v1406
    %1757 = vmatprep.subr.bf16.mxu0 %v1399
    %1758 = vmatpush2.bf16.msra.mxu0 %v1398
    %1759 = vmatprep.subr.bf16.mxu0 %v1391
    %1760 = vmatpush2.bf16.msra.mxu0 %v1390
    %1761 = vmatprep.subr.bf16.mxu0 %v1383
    %1762 = vmatpush2.bf16.msra.mxu0 %v1382
    %1763 = vmatprep.mubr.bf16.mxu0 %v1443
    %1764 = vmatmul.mubr.bf16.gmra.mxu0 %v1442
    %v1765 = vpop.f32.mrf.mxu0
    %v1766 = vadd.f32 %v1725, %v1765
    %v1767 = vpop.f32.mrf.mxu0
    %v1768 = vadd.f32 %v1727, %v1767
    %v1769 = vpop.f32.mrf.mxu0
    %v1770 = vpop.f32.mrf.mxu0
    %1771 = vdwg.mxu0
    %v1772 = vlaneseq
    %v1773 = vshrl.u32 %v1772, 7
    %v1774 = vsub.s32 3, %v1773
    %v1775 = vrot.slane %v124, %v1774
    %v1776 = vlaneseq
    %v1777 = vshrl.u32 %v1776, 7
    %v1778 = vsub.s32 3, %v1777
    %v1779 = vrot.slane %v125, %v1778
    %v1780 = vlaneseq
    %v1781 = vshrl.u32 %v1780, 7
    %v1782 = vsub.s32 3, %v1781
    %v1783 = vrot.slane %v126, %v1782
    %v1784 = vlaneseq
    %v1785 = vshrl.u32 %v1784, 7
    %v1786 = vsub.s32 3, %v1785
    %v1787 = vrot.slane %v127, %v1786
    %v1788 = vlaneseq
    %v1789 = vshrl.u32 %v1788, 7
    %v1790 = vsub.s32 3, %v1789
    %v1791 = vrot.slane %v128, %v1790
    %v1792 = vlaneseq
    %v1793 = vshrl.u32 %v1792, 7
    %v1794 = vsub.s32 3, %v1793
    %v1795 = vrot.slane %v129, %v1794
    %v1796 = vlaneseq
    %v1797 = vshrl.u32 %v1796, 7
    %v1798 = vsub.s32 3, %v1797
    %v1799 = vrot.slane %v130, %v1798
    %v1800 = vlaneseq
    %v1801 = vshrl.u32 %v1800, 7
    %v1802 = vsub.s32 3, %v1801
    %v1803 = vrot.slane %v131, %v1802
    %v1804 = vmul.f32 %v1520, %v1775
    %v1805 = vmul.f32 %v1522, %v1779
    %v1806 = vmul.f32 %v1602, %v1783
    %v1807 = vmul.f32 %v1604, %v1787
    %v1808 = vmul.f32 %v1684, %v1791
    %v1809 = vmul.f32 %v1686, %v1795
    %v1810 = vmul.f32 %v1766, %v1799
    %v1811 = vmul.f32 %v1768, %v1803
    %v1812 = vlaneseq
    %v1813 = vshrl.u32 %v1812, 7
    %v1814 = vsub.s32 7, %v1813
    %v1815 = vrot.slane %v116, %v1814
    %v1816 = vlaneseq
    %v1817 = vshrl.u32 %v1816, 7
    %v1818 = vsub.s32 7, %v1817
    %v1819 = vrot.slane %v117, %v1818
    %v1820 = vlaneseq
    %v1821 = vshrl.u32 %v1820, 7
    %v1822 = vsub.s32 7, %v1821
    %v1823 = vrot.slane %v118, %v1822
    %v1824 = vlaneseq
    %v1825 = vshrl.u32 %v1824, 7
    %v1826 = vsub.s32 7, %v1825
    %v1827 = vrot.slane %v119, %v1826
    %v1828 = vlaneseq
    %v1829 = vshrl.u32 %v1828, 7
    %v1830 = vsub.s32 7, %v1829
    %v1831 = vrot.slane %v120, %v1830
    %v1832 = vlaneseq
    %v1833 = vshrl.u32 %v1832, 7
    %v1834 = vsub.s32 7, %v1833
    %v1835 = vrot.slane %v121, %v1834
    %v1836 = vlaneseq
    %v1837 = vshrl.u32 %v1836, 7
    %v1838 = vsub.s32 7, %v1837
    %v1839 = vrot.slane %v122, %v1838
    %v1840 = vlaneseq
    %v1841 = vshrl.u32 %v1840, 7
    %v1842 = vsub.s32 7, %v1841
    %v1843 = vrot.slane %v123, %v1842
    %v1844 = vadd.f32 %v1804, %v1815
    %v1845 = vadd.f32 %v1805, %v1819
    %v1846 = vadd.f32 %v1806, %v1823
    %v1847 = vadd.f32 %v1807, %v1827
    %v1848 = vadd.f32 %v1808, %v1831
    %v1849 = vadd.f32 %v1809, %v1835
    %v1850 = vadd.f32 %v1810, %v1839
    %v1851 = vadd.f32 %v1811, %v1843
    %v1852 = vrot.slane %v1844, 4
    %v1853 = vadd.f32 %v1844, %v1852
    %v1854 = vrot.slane %v1853, 2
    %v1855 = vadd.f32 %v1853, %v1854
    %v1856 = vrot.slane %v1855, 1
    %v1857 = vadd.f32 %v1855, %v1856
    %v1858 = vrot.slane %v1845, 4
    %v1859 = vadd.f32 %v1845, %v1858
    %v1860 = vrot.slane %v1859, 2
    %v1861 = vadd.f32 %v1859, %v1860
    %v1862 = vrot.slane %v1861, 1
    %v1863 = vadd.f32 %v1861, %v1862
    %v1864 = vrot.slane %v1846, 4
    %v1865 = vadd.f32 %v1846, %v1864
    %v1866 = vrot.slane %v1865, 2
    %v1867 = vadd.f32 %v1865, %v1866
    %v1868 = vrot.slane %v1867, 1
    %v1869 = vadd.f32 %v1867, %v1868
    %v1870 = vrot.slane %v1847, 4
    %v1871 = vadd.f32 %v1847, %v1870
    %v1872 = vrot.slane %v1871, 2
    %v1873 = vadd.f32 %v1871, %v1872
    %v1874 = vrot.slane %v1873, 1
    %v1875 = vadd.f32 %v1873, %v1874
    %v1876 = vrot.slane %v1848, 4
    %v1877 = vadd.f32 %v1848, %v1876
    %v1878 = vrot.slane %v1877, 2
    %v1879 = vadd.f32 %v1877, %v1878
    %v1880 = vrot.slane %v1879, 1
    %v1881 = vadd.f32 %v1879, %v1880
    %v1882 = vrot.slane %v1849, 4
    %v1883 = vadd.f32 %v1849, %v1882
    %v1884 = vrot.slane %v1883, 2
    %v1885 = vadd.f32 %v1883, %v1884
    %v1886 = vrot.slane %v1885, 1
    %v1887 = vadd.f32 %v1885, %v1886
    %v1888 = vrot.slane %v1850, 4
    %v1889 = vadd.f32 %v1850, %v1888
    %v1890 = vrot.slane %v1889, 2
    %v1891 = vadd.f32 %v1889, %v1890
    %v1892 = vrot.slane %v1891, 1
    %v1893 = vadd.f32 %v1891, %v1892
    %v1894 = vrot.slane %v1851, 4
    %v1895 = vadd.f32 %v1851, %v1894
    %v1896 = vrot.slane %v1895, 2
    %v1897 = vadd.f32 %v1895, %v1896
    %v1898 = vrot.slane %v1897, 1
    %v1899 = vadd.f32 %v1897, %v1898
    %v1900 = vmul.f32 %v1857, %v383
    %v1901 = vmul.f32 %v1863, %v383
    %v1902 = vmul.f32 %v1869, %v383
    %v1903 = vmul.f32 %v1875, %v383
    %v1904 = vmul.f32 %v1881, %v383
    %v1905 = vmul.f32 %v1887, %v383
    %v1906 = vmul.f32 %v1893, %v383
    %v1907 = vmul.f32 %v1899, %v383
    %v1908 = vsub.f32 %v1844, %v1900
    %v1909 = vsub.f32 %v1845, %v1901
    %v1910 = vsub.f32 %v1846, %v1902
    %v1911 = vsub.f32 %v1847, %v1903
    %v1912 = vsub.f32 %v1848, %v1904
    %v1913 = vsub.f32 %v1849, %v1905
    %v1914 = vsub.f32 %v1850, %v1906
    %v1915 = vsub.f32 %v1851, %v1907
    %v1916 = vmul.f32 %v1908, %v1908
    %v1917 = vmul.f32 %v1909, %v1909
    %v1918 = vmul.f32 %v1910, %v1910
    %v1919 = vmul.f32 %v1911, %v1911
    %v1920 = vmul.f32 %v1912, %v1912
    %v1921 = vmul.f32 %v1913, %v1913
    %v1922 = vmul.f32 %v1914, %v1914
    %v1923 = vmul.f32 %v1915, %v1915
    %v1924 = vrot.slane %v1916, 4
    %v1925 = vadd.f32 %v1916, %v1924
    %v1926 = vrot.slane %v1925, 2
    %v1927 = vadd.f32 %v1925, %v1926
    %v1928 = vrot.slane %v1927, 1
    %v1929 = vadd.f32 %v1927, %v1928
    %v1930 = vrot.slane %v1917, 4
    %v1931 = vadd.f32 %v1917, %v1930
    %v1932 = vrot.slane %v1931, 2
    %v1933 = vadd.f32 %v1931, %v1932
    %v1934 = vrot.slane %v1933, 1
    %v1935 = vadd.f32 %v1933, %v1934
    %v1936 = vrot.slane %v1918, 4
    %v1937 = vadd.f32 %v1918, %v1936
    %v1938 = vrot.slane %v1937, 2
    %v1939 = vadd.f32 %v1937, %v1938
    %v1940 = vrot.slane %v1939, 1
    %v1941 = vadd.f32 %v1939, %v1940
    %v1942 = vrot.slane %v1919, 4
    %v1943 = vadd.f32 %v1919, %v1942
    %v1944 = vrot.slane %v1943, 2
    %v1945 = vadd.f32 %v1943, %v1944
    %v1946 = vrot.slane %v1945, 1
    %v1947 = vadd.f32 %v1945, %v1946
    %v1948 = vrot.slane %v1920, 4
    %v1949 = vadd.f32 %v1920, %v1948
    %v1950 = vrot.slane %v1949, 2
    %v1951 = vadd.f32 %v1949, %v1950
    %v1952 = vrot.slane %v1951, 1
    %v1953 = vadd.f32 %v1951, %v1952
    %v1954 = vrot.slane %v1921, 4
    %v1955 = vadd.f32 %v1921, %v1954
    %v1956 = vrot.slane %v1955, 2
    %v1957 = vadd.f32 %v1955, %v1956
    %v1958 = vrot.slane %v1957, 1
    %v1959 = vadd.f32 %v1957, %v1958
    %v1960 = vrot.slane %v1922, 4
    %v1961 = vadd.f32 %v1922, %v1960
    %v1962 = vrot.slane %v1961, 2
    %v1963 = vadd.f32 %v1961, %v1962
    %v1964 = vrot.slane %v1963, 1
    %v1965 = vadd.f32 %v1963, %v1964
    %v1966 = vrot.slane %v1923, 4
    %v1967 = vadd.f32 %v1923, %v1966
    %v1968 = vrot.slane %v1967, 2
    %v1969 = vadd.f32 %v1967, %v1968
    %v1970 = vrot.slane %v1969, 1
    %v1971 = vadd.f32 %v1969, %v1970
    %v1972 = vmul.f32 %v1929, %v383
    %v1973 = vmul.f32 %v1935, %v383
    %v1974 = vmul.f32 %v1941, %v383
    %v1975 = vmul.f32 %v1947, %v383
    %v1976 = vmul.f32 %v1953, %v383
    %v1977 = vmul.f32 %v1959, %v383
    %v1978 = vmul.f32 %v1965, %v383
    %v1979 = vmul.f32 %v1971, %v383
    %v1980 = vadd.f32 %v1972, 0.8
    %v1981 = vadd.f32 %v1973, 0.8
    %v1982 = vadd.f32 %v1974, 0.8
    %v1983 = vadd.f32 %v1975, 0.8
    %v1984 = vadd.f32 %v1976, 0.8
    %v1985 = vadd.f32 %v1977, 0.8
    %v1986 = vadd.f32 %v1978, 0.8
    %v1987 = vadd.f32 %v1979, 0.8
    %v1988 = vrsqrt.pop %v1980
    %v1989 = vrsqrt.pop %v1981
    %v1990 = vrsqrt.pop %v1982
    %v1991 = vrsqrt.pop %v1983
    %v1992 = vrsqrt.pop %v1984
    %v1993 = vrsqrt.pop %v1985
    %v1994 = vrsqrt.pop %v1986
    %v1995 = vrsqrt.pop %v1987
    %v1996 = vmul.f32 %v1908, %v1988
    %v1997 = vmul.f32 %v1909, %v1989
    %v1998 = vmul.f32 %v1910, %v1990
    %v1999 = vmul.f32 %v1911, %v1991
    %v2000 = vmul.f32 %v1912, %v1992
    %v2001 = vmul.f32 %v1913, %v1993
    %v2002 = vmul.f32 %v1914, %v1994
    %v2003 = vmul.f32 %v1915, %v1995
    %v2004 = vlaneseq
    %v2005 = vshrl.u32 %v2004, 7
    %v2006 = vsub.s32 0, %v2005
    %v2007 = vrot.slane %v124, %v2006
    %v2008 = vlaneseq
    %v2009 = vshrl.u32 %v2008, 7
    %v2010 = vsub.s32 0, %v2009
    %v2011 = vrot.slane %v125, %v2010
    %v2012 = vlaneseq
    %v2013 = vshrl.u32 %v2012, 7
    %v2014 = vsub.s32 0, %v2013
    %v2015 = vrot.slane %v126, %v2014
    %v2016 = vlaneseq
    %v2017 = vshrl.u32 %v2016, 7
    %v2018 = vsub.s32 0, %v2017
    %v2019 = vrot.slane %v127, %v2018
    %v2020 = vlaneseq
    %v2021 = vshrl.u32 %v2020, 7
    %v2022 = vsub.s32 0, %v2021
    %v2023 = vrot.slane %v128, %v2022
    %v2024 = vlaneseq
    %v2025 = vshrl.u32 %v2024, 7
    %v2026 = vsub.s32 0, %v2025
    %v2027 = vrot.slane %v129, %v2026
    %v2028 = vlaneseq
    %v2029 = vshrl.u32 %v2028, 7
    %v2030 = vsub.s32 0, %v2029
    %v2031 = vrot.slane %v130, %v2030
    %v2032 = vlaneseq
    %v2033 = vshrl.u32 %v2032, 7
    %v2034 = vsub.s32 0, %v2033
    %v2035 = vrot.slane %v131, %v2034
    %v2036 = vmul.f32 %v1996, %v2007
    %v2037 = vmul.f32 %v1997, %v2011
    %v2038 = vmul.f32 %v1998, %v2015
    %v2039 = vmul.f32 %v1999, %v2019
    %v2040 = vmul.f32 %v2000, %v2023
    %v2041 = vmul.f32 %v2001, %v2027
    %v2042 = vmul.f32 %v2002, %v2031
    %v2043 = vmul.f32 %v2003, %v2035
    %v2044 = vlaneseq
    %v2045 = vshrl.u32 %v2044, 7
    %v2046 = vsub.s32 1, %v2045
    %v2047 = vrot.slane %v124, %v2046
    %v2048 = vlaneseq
    %v2049 = vshrl.u32 %v2048, 7
    %v2050 = vsub.s32 1, %v2049
    %v2051 = vrot.slane %v125, %v2050
    %v2052 = vlaneseq
    %v2053 = vshrl.u32 %v2052, 7
    %v2054 = vsub.s32 1, %v2053
    %v2055 = vrot.slane %v126, %v2054
    %v2056 = vlaneseq
    %v2057 = vshrl.u32 %v2056, 7
    %v2058 = vsub.s32 1, %v2057
    %v2059 = vrot.slane %v127, %v2058
    %v2060 = vlaneseq
    %v2061 = vshrl.u32 %v2060, 7
    %v2062 = vsub.s32 1, %v2061
    %v2063 = vrot.slane %v128, %v2062
    %v2064 = vlaneseq
    %v2065 = vshrl.u32 %v2064, 7
    %v2066 = vsub.s32 1, %v2065
    %v2067 = vrot.slane %v129, %v2066
    %v2068 = vlaneseq
    %v2069 = vshrl.u32 %v2068, 7
    %v2070 = vsub.s32 1, %v2069
    %v2071 = vrot.slane %v130, %v2070
    %v2072 = vlaneseq
    %v2073 = vshrl.u32 %v2072, 7
    %v2074 = vsub.s32 1, %v2073
    %v2075 = vrot.slane %v131, %v2074
    %v2076 = vadd.f32 %v2036, %v2047
    %v2077 = vadd.f32 %v2037, %v2051
    %v2078 = vadd.f32 %v2038, %v2055
    %v2079 = vadd.f32 %v2039, %v2059
    %v2080 = vadd.f32 %v2040, %v2063
    %v2081 = vadd.f32 %v2041, %v2067
    %v2082 = vadd.f32 %v2042, %v2071
    %v2083 = vadd.f32 %v2043, %v2075
    %vm2084 = vcmp.gt.f32.partialorder %v2076, 0.0
    %vm2085 = vcmp.gt.f32.partialorder %v2077, 0.0
    %vm2086 = vcmp.gt.f32.partialorder %v2078, 0.0
    %vm2087 = vcmp.gt.f32.partialorder %v2079, 0.0
    %vm2088 = vcmp.gt.f32.partialorder %v2080, 0.0
    %vm2089 = vcmp.gt.f32.partialorder %v2081, 0.0
    %vm2090 = vcmp.gt.f32.partialorder %v2082, 0.0
    %vm2091 = vcmp.gt.f32.partialorder %v2083, 0.0
    %v2092 = vmul.f32 %v2076, 0.2
    %v2093 = vmul.f32 %v2077, 0.2
    %v2094 = vmul.f32 %v2078, 0.2
    %v2095 = vmul.f32 %v2079, 0.2
    %v2096 = vmul.f32 %v2080, 0.2
    %v2097 = vmul.f32 %v2081, 0.2
    %v2098 = vmul.f32 %v2082, 0.2
    %v2099 = vmul.f32 %v2083, 0.2
    %v2100 = vsel %vm2084, %v2076, %v2092
    %v2101 = vsel %vm2085, %v2077, %v2093
    %v2102 = vsel %vm2086, %v2078, %v2094
    %v2103 = vsel %vm2087, %v2079, %v2095
    %v2104 = vsel %vm2088, %v2080, %v2096
    %v2105 = vsel %vm2089, %v2081, %v2097
    %v2106 = vsel %vm2090, %v2082, %v2098
    %v2107 = vsel %vm2091, %v2083, %v2099
    %s2108 = smul.u32 2, 128
    %s2109 = smul.u32 %s2108, 4
    %s2110 = sshll.u32 %s2109, 4
    %2111 = dma.done %s92, %s2110
    %v2112 = vld [vmem:[#allocation6] sm:$0xff]
    %v2113 = vld [vmem:[#allocation6 + $0x8] sm:$0xff]
    %v2114 = vld [vmem:[#allocation6 + $0x10] sm:$0xff]
    %v2115 = vld [vmem:[#allocation6 + $0x18] sm:$0xff]
    %v2116 = vld [vmem:[#allocation6 + $0x20] sm:$0xff]
    %v2117 = vld [vmem:[#allocation6 + $0x28] sm:$0xff]
    %v2118 = vld [vmem:[#allocation6 + $0x30] sm:$0xff]
    %v2119 = vld [vmem:[#allocation6 + $0x38] sm:$0xff]
    %v2120 = vld [vmem:[#allocation6 + $0x40] sm:$0xff]
    %v2121 = vld [vmem:[#allocation6 + $0x48] sm:$0xff]
    %v2122 = vld [vmem:[#allocation6 + $0x50] sm:$0xff]
    %v2123 = vld [vmem:[#allocation6 + $0x58] sm:$0xff]
    %v2124 = vld [vmem:[#allocation6 + $0x60] sm:$0xff]
    %v2125 = vld [vmem:[#allocation6 + $0x68] sm:$0xff]
    %v2126 = vld [vmem:[#allocation6 + $0x70] sm:$0xff]
    %v2127 = vld [vmem:[#allocation6 + $0x78] sm:$0xff]
    %v2128 = vld [vmem:[#allocation6 + $0x80] sm:$0xff]
    %v2129 = vld [vmem:[#allocation6 + $0x88] sm:$0xff]
    %v2130 = vld [vmem:[#allocation6 + $0x90] sm:$0xff]
    %v2131 = vld [vmem:[#allocation6 + $0x98] sm:$0xff]
    %v2132 = vld [vmem:[#allocation6 + $0xa0] sm:$0xff]
    %v2133 = vld [vmem:[#allocation6 + $0xa8] sm:$0xff]
    %v2134 = vld [vmem:[#allocation6 + $0xb0] sm:$0xff]
    %v2135 = vld [vmem:[#allocation6 + $0xb8] sm:$0xff]
    %v2136 = vld [vmem:[#allocation6 + $0xc0] sm:$0xff]
    %v2137 = vld [vmem:[#allocation6 + $0xc8] sm:$0xff]
    %v2138 = vld [vmem:[#allocation6 + $0xd0] sm:$0xff]
    %v2139 = vld [vmem:[#allocation6 + $0xd8] sm:$0xff]
    %v2140 = vld [vmem:[#allocation6 + $0xe0] sm:$0xff]
    %v2141 = vld [vmem:[#allocation6 + $0xe8] sm:$0xff]
    %v2142 = vld [vmem:[#allocation6 + $0xf0] sm:$0xff]
    %v2143 = vld [vmem:[#allocation6 + $0xf8] sm:$0xff]
    %v2144 = vld [vmem:[#allocation6 + $0x100] sm:$0xff]
    %v2145 = vld [vmem:[#allocation6 + $0x108] sm:$0xff]
    %v2146 = vld [vmem:[#allocation6 + $0x110] sm:$0xff]
    %v2147 = vld [vmem:[#allocation6 + $0x118] sm:$0xff]
    %v2148 = vld [vmem:[#allocation6 + $0x120] sm:$0xff]
    %v2149 = vld [vmem:[#allocation6 + $0x128] sm:$0xff]
    %v2150 = vld [vmem:[#allocation6 + $0x130] sm:$0xff]
    %v2151 = vld [vmem:[#allocation6 + $0x138] sm:$0xff]
    %v2152 = vld [vmem:[#allocation6 + $0x140] sm:$0xff]
    %v2153 = vld [vmem:[#allocation6 + $0x148] sm:$0xff]
    %v2154 = vld [vmem:[#allocation6 + $0x150] sm:$0xff]
    %v2155 = vld [vmem:[#allocation6 + $0x158] sm:$0xff]
    %v2156 = vld [vmem:[#allocation6 + $0x160] sm:$0xff]
    %v2157 = vld [vmem:[#allocation6 + $0x168] sm:$0xff]
    %v2158 = vld [vmem:[#allocation6 + $0x170] sm:$0xff]
    %v2159 = vld [vmem:[#allocation6 + $0x178] sm:$0xff]
    %v2160 = vld [vmem:[#allocation6 + $0x180] sm:$0xff]
    %v2161 = vld [vmem:[#allocation6 + $0x188] sm:$0xff]
    %v2162 = vld [vmem:[#allocation6 + $0x190] sm:$0xff]
    %v2163 = vld [vmem:[#allocation6 + $0x198] sm:$0xff]
    %v2164 = vld [vmem:[#allocation6 + $0x1a0] sm:$0xff]
    %v2165 = vld [vmem:[#allocation6 + $0x1a8] sm:$0xff]
    %v2166 = vld [vmem:[#allocation6 + $0x1b0] sm:$0xff]
    %v2167 = vld [vmem:[#allocation6 + $0x1b8] sm:$0xff]
    %v2168 = vld [vmem:[#allocation6 + $0x1c0] sm:$0xff]
    %v2169 = vld [vmem:[#allocation6 + $0x1c8] sm:$0xff]
    %v2170 = vld [vmem:[#allocation6 + $0x1d0] sm:$0xff]
    %v2171 = vld [vmem:[#allocation6 + $0x1d8] sm:$0xff]
    %v2172 = vld [vmem:[#allocation6 + $0x1e0] sm:$0xff]
    %v2173 = vld [vmem:[#allocation6 + $0x1e8] sm:$0xff]
    %v2174 = vld [vmem:[#allocation6 + $0x1f0] sm:$0xff]
    %v2175 = vld [vmem:[#allocation6 + $0x1f8] sm:$0xff]
    %v2176 = vld [vmem:[#allocation6 + $0x200] sm:$0xff]
    %v2177 = vld [vmem:[#allocation6 + $0x208] sm:$0xff]
    %v2178 = vld [vmem:[#allocation6 + $0x210] sm:$0xff]
    %v2179 = vld [vmem:[#allocation6 + $0x218] sm:$0xff]
    %v2180 = vld [vmem:[#allocation6 + $0x220] sm:$0xff]
    %v2181 = vld [vmem:[#allocation6 + $0x228] sm:$0xff]
    %v2182 = vld [vmem:[#allocation6 + $0x230] sm:$0xff]
    %v2183 = vld [vmem:[#allocation6 + $0x238] sm:$0xff]
    %v2184 = vld [vmem:[#allocation6 + $0x240] sm:$0xff]
    %v2185 = vld [vmem:[#allocation6 + $0x248] sm:$0xff]
    %v2186 = vld [vmem:[#allocation6 + $0x250] sm:$0xff]
    %v2187 = vld [vmem:[#allocation6 + $0x258] sm:$0xff]
    %v2188 = vld [vmem:[#allocation6 + $0x260] sm:$0xff]
    %v2189 = vld [vmem:[#allocation6 + $0x268] sm:$0xff]
    %v2190 = vld [vmem:[#allocation6 + $0x270] sm:$0xff]
    %v2191 = vld [vmem:[#allocation6 + $0x278] sm:$0xff]
    %v2192 = vld [vmem:[#allocation6 + $0x280] sm:$0xff]
    %v2193 = vld [vmem:[#allocation6 + $0x288] sm:$0xff]
    %v2194 = vld [vmem:[#allocation6 + $0x290] sm:$0xff]
    %v2195 = vld [vmem:[#allocation6 + $0x298] sm:$0xff]
    %v2196 = vld [vmem:[#allocation6 + $0x2a0] sm:$0xff]
    %v2197 = vld [vmem:[#allocation6 + $0x2a8] sm:$0xff]
    %v2198 = vld [vmem:[#allocation6 + $0x2b0] sm:$0xff]
    %v2199 = vld [vmem:[#allocation6 + $0x2b8] sm:$0xff]
    %v2200 = vld [vmem:[#allocation6 + $0x2c0] sm:$0xff]
    %v2201 = vld [vmem:[#allocation6 + $0x2c8] sm:$0xff]
    %v2202 = vld [vmem:[#allocation6 + $0x2d0] sm:$0xff]
    %v2203 = vld [vmem:[#allocation6 + $0x2d8] sm:$0xff]
    %v2204 = vld [vmem:[#allocation6 + $0x2e0] sm:$0xff]
    %v2205 = vld [vmem:[#allocation6 + $0x2e8] sm:$0xff]
    %v2206 = vld [vmem:[#allocation6 + $0x2f0] sm:$0xff]
    %v2207 = vld [vmem:[#allocation6 + $0x2f8] sm:$0xff]
    %v2208 = vld [vmem:[#allocation6 + $0x300] sm:$0xff]
    %v2209 = vld [vmem:[#allocation6 + $0x308] sm:$0xff]
    %v2210 = vld [vmem:[#allocation6 + $0x310] sm:$0xff]
    %v2211 = vld [vmem:[#allocation6 + $0x318] sm:$0xff]
    %v2212 = vld [vmem:[#allocation6 + $0x320] sm:$0xff]
    %v2213 = vld [vmem:[#allocation6 + $0x328] sm:$0xff]
    %v2214 = vld [vmem:[#allocation6 + $0x330] sm:$0xff]
    %v2215 = vld [vmem:[#allocation6 + $0x338] sm:$0xff]
    %v2216 = vld [vmem:[#allocation6 + $0x340] sm:$0xff]
    %v2217 = vld [vmem:[#allocation6 + $0x348] sm:$0xff]
    %v2218 = vld [vmem:[#allocation6 + $0x350] sm:$0xff]
    %v2219 = vld [vmem:[#allocation6 + $0x358] sm:$0xff]
    %v2220 = vld [vmem:[#allocation6 + $0x360] sm:$0xff]
    %v2221 = vld [vmem:[#allocation6 + $0x368] sm:$0xff]
    %v2222 = vld [vmem:[#allocation6 + $0x370] sm:$0xff]
    %v2223 = vld [vmem:[#allocation6 + $0x378] sm:$0xff]
    %v2224 = vld [vmem:[#allocation6 + $0x380] sm:$0xff]
    %v2225 = vld [vmem:[#allocation6 + $0x388] sm:$0xff]
    %v2226 = vld [vmem:[#allocation6 + $0x390] sm:$0xff]
    %v2227 = vld [vmem:[#allocation6 + $0x398] sm:$0xff]
    %v2228 = vld [vmem:[#allocation6 + $0x3a0] sm:$0xff]
    %v2229 = vld [vmem:[#allocation6 + $0x3a8] sm:$0xff]
    %v2230 = vld [vmem:[#allocation6 + $0x3b0] sm:$0xff]
    %v2231 = vld [vmem:[#allocation6 + $0x3b8] sm:$0xff]
    %v2232 = vld [vmem:[#allocation6 + $0x3c0] sm:$0xff]
    %v2233 = vld [vmem:[#allocation6 + $0x3c8] sm:$0xff]
    %v2234 = vld [vmem:[#allocation6 + $0x3d0] sm:$0xff]
    %v2235 = vld [vmem:[#allocation6 + $0x3d8] sm:$0xff]
    %v2236 = vld [vmem:[#allocation6 + $0x3e0] sm:$0xff]
    %v2237 = vld [vmem:[#allocation6 + $0x3e8] sm:$0xff]
    %v2238 = vld [vmem:[#allocation6 + $0x3f0] sm:$0xff]
    %v2239 = vld [vmem:[#allocation6 + $0x3f8] sm:$0xff]
    %v2240 = vunpack.c.l.s8.bf16 %v2112
    %v2241 = vunpack.c.l.s8.bf16 %v2113
    %v2242 = vunpack.c.l.s8.bf16 %v2114
    %v2243 = vunpack.c.l.s8.bf16 %v2115
    %v2244 = vunpack.c.h.s8.bf16 %v2112
    %v2245 = vunpack.c.h.s8.bf16 %v2113
    %v2246 = vunpack.c.h.s8.bf16 %v2114
    %v2247 = vunpack.c.h.s8.bf16 %v2115
    %v2248 = vunpack.c.l.s8.bf16 %v2116
    %v2249 = vunpack.c.l.s8.bf16 %v2117
    %v2250 = vunpack.c.l.s8.bf16 %v2118
    %v2251 = vunpack.c.l.s8.bf16 %v2119
    %v2252 = vunpack.c.h.s8.bf16 %v2116
    %v2253 = vunpack.c.h.s8.bf16 %v2117
    %v2254 = vunpack.c.h.s8.bf16 %v2118
    %v2255 = vunpack.c.h.s8.bf16 %v2119
    %v2256 = vunpack.c.l.s8.bf16 %v2120
    %v2257 = vunpack.c.l.s8.bf16 %v2121
    %v2258 = vunpack.c.l.s8.bf16 %v2122
    %v2259 = vunpack.c.l.s8.bf16 %v2123
    %v2260 = vunpack.c.h.s8.bf16 %v2120
    %v2261 = vunpack.c.h.s8.bf16 %v2121
    %v2262 = vunpack.c.h.s8.bf16 %v2122
    %v2263 = vunpack.c.h.s8.bf16 %v2123
    %v2264 = vunpack.c.l.s8.bf16 %v2124
    %v2265 = vunpack.c.l.s8.bf16 %v2125
    %v2266 = vunpack.c.l.s8.bf16 %v2126
    %v2267 = vunpack.c.l.s8.bf16 %v2127
    %v2268 = vunpack.c.h.s8.bf16 %v2124
    %v2269 = vunpack.c.h.s8.bf16 %v2125
    %v2270 = vunpack.c.h.s8.bf16 %v2126
    %v2271 = vunpack.c.h.s8.bf16 %v2127
    %v2272 = vunpack.c.l.s8.bf16 %v2128
    %v2273 = vunpack.c.l.s8.bf16 %v2129
    %v2274 = vunpack.c.l.s8.bf16 %v2130
    %v2275 = vunpack.c.l.s8.bf16 %v2131
    %v2276 = vunpack.c.h.s8.bf16 %v2128
    %v2277 = vunpack.c.h.s8.bf16 %v2129
    %v2278 = vunpack.c.h.s8.bf16 %v2130
    %v2279 = vunpack.c.h.s8.bf16 %v2131
    %v2280 = vunpack.c.l.s8.bf16 %v2132
    %v2281 = vunpack.c.l.s8.bf16 %v2133
    %v2282 = vunpack.c.l.s8.bf16 %v2134
    %v2283 = vunpack.c.l.s8.bf16 %v2135
    %v2284 = vunpack.c.h.s8.bf16 %v2132
    %v2285 = vunpack.c.h.s8.bf16 %v2133
    %v2286 = vunpack.c.h.s8.bf16 %v2134
    %v2287 = vunpack.c.h.s8.bf16 %v2135
    %v2288 = vunpack.c.l.s8.bf16 %v2136
    %v2289 = vunpack.c.l.s8.bf16 %v2137
    %v2290 = vunpack.c.l.s8.bf16 %v2138
    %v2291 = vunpack.c.l.s8.bf16 %v2139
    %v2292 = vunpack.c.h.s8.bf16 %v2136
    %v2293 = vunpack.c.h.s8.bf16 %v2137
    %v2294 = vunpack.c.h.s8.bf16 %v2138
    %v2295 = vunpack.c.h.s8.bf16 %v2139
    %v2296 = vunpack.c.l.s8.bf16 %v2140
    %v2297 = vunpack.c.l.s8.bf16 %v2141
    %v2298 = vunpack.c.l.s8.bf16 %v2142
    %v2299 = vunpack.c.l.s8.bf16 %v2143
    %v2300 = vunpack.c.h.s8.bf16 %v2140
    %v2301 = vunpack.c.h.s8.bf16 %v2141
    %v2302 = vunpack.c.h.s8.bf16 %v2142
    %v2303 = vunpack.c.h.s8.bf16 %v2143
    %v2304 = vunpack.c.l.s8.bf16 %v2144
    %v2305 = vunpack.c.l.s8.bf16 %v2145
    %v2306 = vunpack.c.l.s8.bf16 %v2146
    %v2307 = vunpack.c.l.s8.bf16 %v2147
    %v2308 = vunpack.c.h.s8.bf16 %v2144
    %v2309 = vunpack.c.h.s8.bf16 %v2145
    %v2310 = vunpack.c.h.s8.bf16 %v2146
    %v2311 = vunpack.c.h.s8.bf16 %v2147
    %v2312 = vunpack.c.l.s8.bf16 %v2148
    %v2313 = vunpack.c.l.s8.bf16 %v2149
    %v2314 = vunpack.c.l.s8.bf16 %v2150
    %v2315 = vunpack.c.l.s8.bf16 %v2151
    %v2316 = vunpack.c.h.s8.bf16 %v2148
    %v2317 = vunpack.c.h.s8.bf16 %v2149
    %v2318 = vunpack.c.h.s8.bf16 %v2150
    %v2319 = vunpack.c.h.s8.bf16 %v2151
    %v2320 = vunpack.c.l.s8.bf16 %v2152
    %v2321 = vunpack.c.l.s8.bf16 %v2153
    %v2322 = vunpack.c.l.s8.bf16 %v2154
    %v2323 = vunpack.c.l.s8.bf16 %v2155
    %v2324 = vunpack.c.h.s8.bf16 %v2152
    %v2325 = vunpack.c.h.s8.bf16 %v2153
    %v2326 = vunpack.c.h.s8.bf16 %v2154
    %v2327 = vunpack.c.h.s8.bf16 %v2155
    %v2328 = vunpack.c.l.s8.bf16 %v2156
    %v2329 = vunpack.c.l.s8.bf16 %v2157
    %v2330 = vunpack.c.l.s8.bf16 %v2158
    %v2331 = vunpack.c.l.s8.bf16 %v2159
    %v2332 = vunpack.c.h.s8.bf16 %v2156
    %v2333 = vunpack.c.h.s8.bf16 %v2157
    %v2334 = vunpack.c.h.s8.bf16 %v2158
    %v2335 = vunpack.c.h.s8.bf16 %v2159
    %v2336 = vunpack.c.l.s8.bf16 %v2160
    %v2337 = vunpack.c.l.s8.bf16 %v2161
    %v2338 = vunpack.c.l.s8.bf16 %v2162
    %v2339 = vunpack.c.l.s8.bf16 %v2163
    %v2340 = vunpack.c.h.s8.bf16 %v2160
    %v2341 = vunpack.c.h.s8.bf16 %v2161
    %v2342 = vunpack.c.h.s8.bf16 %v2162
    %v2343 = vunpack.c.h.s8.bf16 %v2163
    %v2344 = vunpack.c.l.s8.bf16 %v2164
    %v2345 = vunpack.c.l.s8.bf16 %v2165
    %v2346 = vunpack.c.l.s8.bf16 %v2166
    %v2347 = vunpack.c.l.s8.bf16 %v2167
    %v2348 = vunpack.c.h.s8.bf16 %v2164
    %v2349 = vunpack.c.h.s8.bf16 %v2165
    %v2350 = vunpack.c.h.s8.bf16 %v2166
    %v2351 = vunpack.c.h.s8.bf16 %v2167
    %v2352 = vunpack.c.l.s8.bf16 %v2168
    %v2353 = vunpack.c.l.s8.bf16 %v2169
    %v2354 = vunpack.c.l.s8.bf16 %v2170
    %v2355 = vunpack.c.l.s8.bf16 %v2171
    %v2356 = vunpack.c.h.s8.bf16 %v2168
    %v2357 = vunpack.c.h.s8.bf16 %v2169
    %v2358 = vunpack.c.h.s8.bf16 %v2170
    %v2359 = vunpack.c.h.s8.bf16 %v2171
    %v2360 = vunpack.c.l.s8.bf16 %v2172
    %v2361 = vunpack.c.l.s8.bf16 %v2173
    %v2362 = vunpack.c.l.s8.bf16 %v2174
    %v2363 = vunpack.c.l.s8.bf16 %v2175
    %v2364 = vunpack.c.h.s8.bf16 %v2172
    %v2365 = vunpack.c.h.s8.bf16 %v2173
    %v2366 = vunpack.c.h.s8.bf16 %v2174
    %v2367 = vunpack.c.h.s8.bf16 %v2175
    %v2368 = vunpack.c.l.s8.bf16 %v2176
    %v2369 = vunpack.c.l.s8.bf16 %v2177
    %v2370 = vunpack.c.l.s8.bf16 %v2178
    %v2371 = vunpack.c.l.s8.bf16 %v2179
    %v2372 = vunpack.c.h.s8.bf16 %v2176
    %v2373 = vunpack.c.h.s8.bf16 %v2177
    %v2374 = vunpack.c.h.s8.bf16 %v2178
    %v2375 = vunpack.c.h.s8.bf16 %v2179
    %v2376 = vunpack.c.l.s8.bf16 %v2180
    %v2377 = vunpack.c.l.s8.bf16 %v2181
    %v2378 = vunpack.c.l.s8.bf16 %v2182
    %v2379 = vunpack.c.l.s8.bf16 %v2183
    %v2380 = vunpack.c.h.s8.bf16 %v2180
    %v2381 = vunpack.c.h.s8.bf16 %v2181
    %v2382 = vunpack.c.h.s8.bf16 %v2182
    %v2383 = vunpack.c.h.s8.bf16 %v2183
    %v2384 = vunpack.c.l.s8.bf16 %v2184
    %v2385 = vunpack.c.l.s8.bf16 %v2185
    %v2386 = vunpack.c.l.s8.bf16 %v2186
    %v2387 = vunpack.c.l.s8.bf16 %v2187
    %v2388 = vunpack.c.h.s8.bf16 %v2184
    %v2389 = vunpack.c.h.s8.bf16 %v2185
    %v2390 = vunpack.c.h.s8.bf16 %v2186
    %v2391 = vunpack.c.h.s8.bf16 %v2187
    %v2392 = vunpack.c.l.s8.bf16 %v2188
    %v2393 = vunpack.c.l.s8.bf16 %v2189
    %v2394 = vunpack.c.l.s8.bf16 %v2190
    %v2395 = vunpack.c.l.s8.bf16 %v2191
    %v2396 = vunpack.c.h.s8.bf16 %v2188
    %v2397 = vunpack.c.h.s8.bf16 %v2189
    %v2398 = vunpack.c.h.s8.bf16 %v2190
    %v2399 = vunpack.c.h.s8.bf16 %v2191
    %v2400 = vunpack.c.l.s8.bf16 %v2192
    %v2401 = vunpack.c.l.s8.bf16 %v2193
    %v2402 = vunpack.c.l.s8.bf16 %v2194
    %v2403 = vunpack.c.l.s8.bf16 %v2195
    %v2404 = vunpack.c.h.s8.bf16 %v2192
    %v2405 = vunpack.c.h.s8.bf16 %v2193
    %v2406 = vunpack.c.h.s8.bf16 %v2194
    %v2407 = vunpack.c.h.s8.bf16 %v2195
    %v2408 = vunpack.c.l.s8.bf16 %v2196
    %v2409 = vunpack.c.l.s8.bf16 %v2197
    %v2410 = vunpack.c.l.s8.bf16 %v2198
    %v2411 = vunpack.c.l.s8.bf16 %v2199
    %v2412 = vunpack.c.h.s8.bf16 %v2196
    %v2413 = vunpack.c.h.s8.bf16 %v2197
    %v2414 = vunpack.c.h.s8.bf16 %v2198
    %v2415 = vunpack.c.h.s8.bf16 %v2199
    %v2416 = vunpack.c.l.s8.bf16 %v2200
    %v2417 = vunpack.c.l.s8.bf16 %v2201
    %v2418 = vunpack.c.l.s8.bf16 %v2202
    %v2419 = vunpack.c.l.s8.bf16 %v2203
    %v2420 = vunpack.c.h.s8.bf16 %v2200
    %v2421 = vunpack.c.h.s8.bf16 %v2201
    %v2422 = vunpack.c.h.s8.bf16 %v2202
    %v2423 = vunpack.c.h.s8.bf16 %v2203
    %v2424 = vunpack.c.l.s8.bf16 %v2204
    %v2425 = vunpack.c.l.s8.bf16 %v2205
    %v2426 = vunpack.c.l.s8.bf16 %v2206
    %v2427 = vunpack.c.l.s8.bf16 %v2207
    %v2428 = vunpack.c.h.s8.bf16 %v2204
    %v2429 = vunpack.c.h.s8.bf16 %v2205
    %v2430 = vunpack.c.h.s8.bf16 %v2206
    %v2431 = vunpack.c.h.s8.bf16 %v2207
    %v2432 = vunpack.c.l.s8.bf16 %v2208
    %v2433 = vunpack.c.l.s8.bf16 %v2209
    %v2434 = vunpack.c.l.s8.bf16 %v2210
    %v2435 = vunpack.c.l.s8.bf16 %v2211
    %v2436 = vunpack.c.h.s8.bf16 %v2208
    %v2437 = vunpack.c.h.s8.bf16 %v2209
    %v2438 = vunpack.c.h.s8.bf16 %v2210
    %v2439 = vunpack.c.h.s8.bf16 %v2211
    %v2440 = vunpack.c.l.s8.bf16 %v2212
    %v2441 = vunpack.c.l.s8.bf16 %v2213
    %v2442 = vunpack.c.l.s8.bf16 %v2214
    %v2443 = vunpack.c.l.s8.bf16 %v2215
    %v2444 = vunpack.c.h.s8.bf16 %v2212
    %v2445 = vunpack.c.h.s8.bf16 %v2213
    %v2446 = vunpack.c.h.s8.bf16 %v2214
    %v2447 = vunpack.c.h.s8.bf16 %v2215
    %v2448 = vunpack.c.l.s8.bf16 %v2216
    %v2449 = vunpack.c.l.s8.bf16 %v2217
    %v2450 = vunpack.c.l.s8.bf16 %v2218
    %v2451 = vunpack.c.l.s8.bf16 %v2219
    %v2452 = vunpack.c.h.s8.bf16 %v2216
    %v2453 = vunpack.c.h.s8.bf16 %v2217
    %v2454 = vunpack.c.h.s8.bf16 %v2218
    %v2455 = vunpack.c.h.s8.bf16 %v2219
    %v2456 = vunpack.c.l.s8.bf16 %v2220
    %v2457 = vunpack.c.l.s8.bf16 %v2221
    %v2458 = vunpack.c.l.s8.bf16 %v2222
    %v2459 = vunpack.c.l.s8.bf16 %v2223
    %v2460 = vunpack.c.h.s8.bf16 %v2220
    %v2461 = vunpack.c.h.s8.bf16 %v2221
    %v2462 = vunpack.c.h.s8.bf16 %v2222
    %v2463 = vunpack.c.h.s8.bf16 %v2223
    %v2464 = vunpack.c.l.s8.bf16 %v2224
    %v2465 = vunpack.c.l.s8.bf16 %v2225
    %v2466 = vunpack.c.l.s8.bf16 %v2226
    %v2467 = vunpack.c.l.s8.bf16 %v2227
    %v2468 = vunpack.c.h.s8.bf16 %v2224
    %v2469 = vunpack.c.h.s8.bf16 %v2225
    %v2470 = vunpack.c.h.s8.bf16 %v2226
    %v2471 = vunpack.c.h.s8.bf16 %v2227
    %v2472 = vunpack.c.l.s8.bf16 %v2228
    %v2473 = vunpack.c.l.s8.bf16 %v2229
    %v2474 = vunpack.c.l.s8.bf16 %v2230
    %v2475 = vunpack.c.l.s8.bf16 %v2231
    %v2476 = vunpack.c.h.s8.bf16 %v2228
    %v2477 = vunpack.c.h.s8.bf16 %v2229
    %v2478 = vunpack.c.h.s8.bf16 %v2230
    %v2479 = vunpack.c.h.s8.bf16 %v2231
    %v2480 = vunpack.c.l.s8.bf16 %v2232
    %v2481 = vunpack.c.l.s8.bf16 %v2233
    %v2482 = vunpack.c.l.s8.bf16 %v2234
    %v2483 = vunpack.c.l.s8.bf16 %v2235
    %v2484 = vunpack.c.h.s8.bf16 %v2232
    %v2485 = vunpack.c.h.s8.bf16 %v2233
    %v2486 = vunpack.c.h.s8.bf16 %v2234
    %v2487 = vunpack.c.h.s8.bf16 %v2235
    %v2488 = vunpack.c.l.s8.bf16 %v2236
    %v2489 = vunpack.c.l.s8.bf16 %v2237
    %v2490 = vunpack.c.l.s8.bf16 %v2238
    %v2491 = vunpack.c.l.s8.bf16 %v2239
    %v2492 = vunpack.c.h.s8.bf16 %v2236
    %v2493 = vunpack.c.h.s8.bf16 %v2237
    %v2494 = vunpack.c.h.s8.bf16 %v2238
    %v2495 = vunpack.c.h.s8.bf16 %v2239
    %v2496 = vpack.c.bf16 %v2100, %v2100
    %v2497 = vpack.c.bf16 %v2101, %v2101
    %v2498 = vpack.c.bf16 %v2102, %v2102
    %v2499 = vpack.c.bf16 %v2103, %v2103
    %v2500 = vpack.c.bf16 %v2104, %v2104
    %v2501 = vpack.c.bf16 %v2105, %v2105
    %v2502 = vpack.c.bf16 %v2106, %v2106
    %v2503 = vpack.c.bf16 %v2107, %v2107
    %2504 = vmatprep.subr.bf16.mxu0 %v2269
    %2505 = vmatpush1.bf16.msra.mxu0 %v2268
    %2506 = vmatprep.subr.bf16.mxu0 %v2265
    %2507 = vmatpush1.bf16.msra.mxu0 %v2264
    %2508 = vmatprep.subr.bf16.mxu0 %v2261
    %2509 = vmatpush1.bf16.msra.mxu0 %v2260
    %2510 = vmatprep.subr.bf16.mxu0 %v2257
    %2511 = vmatpush1.bf16.msra.mxu0 %v2256
    %2512 = vmatprep.subr.bf16.mxu0 %v2253
    %2513 = vmatpush1.bf16.msra.mxu0 %v2252
    %2514 = vmatprep.subr.bf16.mxu0 %v2249
    %2515 = vmatpush1.bf16.msra.mxu0 %v2248
    %2516 = vmatprep.subr.bf16.mxu0 %v2245
    %2517 = vmatpush1.bf16.msra.mxu0 %v2244
    %2518 = vmatprep.subr.bf16.mxu0 %v2241
    %2519 = vmatpush1.bf16.msra.mxu0 %v2240
    %2520 = vmatprep.subr.bf16.mxu0 %v2301
    %2521 = vmatpush2.bf16.msra.mxu0 %v2300
    %2522 = vmatprep.subr.bf16.mxu0 %v2297
    %2523 = vmatpush2.bf16.msra.mxu0 %v2296
    %2524 = vmatprep.subr.bf16.mxu0 %v2293
    %2525 = vmatpush2.bf16.msra.mxu0 %v2292
    %2526 = vmatprep.subr.bf16.mxu0 %v2289
    %2527 = vmatpush2.bf16.msra.mxu0 %v2288
    %2528 = vmatprep.subr.bf16.mxu0 %v2285
    %2529 = vmatpush2.bf16.msra.mxu0 %v2284
    %2530 = vmatprep.subr.bf16.mxu0 %v2281
    %2531 = vmatpush2.bf16.msra.mxu0 %v2280
    %2532 = vmatprep.subr.bf16.mxu0 %v2277
    %2533 = vmatpush2.bf16.msra.mxu0 %v2276
    %2534 = vmatprep.subr.bf16.mxu0 %v2273
    %2535 = vmatpush2.bf16.msra.mxu0 %v2272
    %2536 = vmatprep.mubr.bf16.mxu0 %v2497
    %2537 = vmatmul.mubr.bf16.gmra.mxu0 %v2496
    %v2538 = vpop.f32.mrf.mxu0
    %v2539 = vadd.f32 0.0, %v2538
    %v2540 = vpop.f32.mrf.mxu0
    %v2541 = vadd.f32 0.0, %v2540
    %v2542 = vpop.f32.mrf.mxu0
    %v2543 = vpop.f32.mrf.mxu0
    %2544 = vdwg.mxu0
    %2545 = vmatprep.subr.bf16.mxu0 %v2333
    %2546 = vmatpush1.bf16.msra.mxu0 %v2332
    %2547 = vmatprep.subr.bf16.mxu0 %v2329
    %2548 = vmatpush1.bf16.msra.mxu0 %v2328
    %2549 = vmatprep.subr.bf16.mxu0 %v2325
    %2550 = vmatpush1.bf16.msra.mxu0 %v2324
    %2551 = vmatprep.subr.bf16.mxu0 %v2321
    %2552 = vmatpush1.bf16.msra.mxu0 %v2320
    %2553 = vmatprep.subr.bf16.mxu0 %v2317
    %2554 = vmatpush1.bf16.msra.mxu0 %v2316
    %2555 = vmatprep.subr.bf16.mxu0 %v2313
    %2556 = vmatpush1.bf16.msra.mxu0 %v2312
    %2557 = vmatprep.subr.bf16.mxu0 %v2309
    %2558 = vmatpush1.bf16.msra.mxu0 %v2308
    %2559 = vmatprep.subr.bf16.mxu0 %v2305
    %2560 = vmatpush1.bf16.msra.mxu0 %v2304
    %2561 = vmatprep.subr.bf16.mxu0 %v2365
    %2562 = vmatpush2.bf16.msra.mxu0 %v2364
    %2563 = vmatprep.subr.bf16.mxu0 %v2361
    %2564 = vmatpush2.bf16.msra.mxu0 %v2360
    %2565 = vmatprep.subr.bf16.mxu0 %v2357
    %2566 = vmatpush2.bf16.msra.mxu0 %v2356
    %2567 = vmatprep.subr.bf16.mxu0 %v2353
    %2568 = vmatpush2.bf16.msra.mxu0 %v2352
    %2569 = vmatprep.subr.bf16.mxu0 %v2349
    %2570 = vmatpush2.bf16.msra.mxu0 %v2348
    %2571 = vmatprep.subr.bf16.mxu0 %v2345
    %2572 = vmatpush2.bf16.msra.mxu0 %v2344
    %2573 = vmatprep.subr.bf16.mxu0 %v2341
    %2574 = vmatpush2.bf16.msra.mxu0 %v2340
    %2575 = vmatprep.subr.bf16.mxu0 %v2337
    %2576 = vmatpush2.bf16.msra.mxu0 %v2336
    %2577 = vmatprep.mubr.bf16.mxu0 %v2499
    %2578 = vmatmul.mubr.bf16.gmra.mxu0 %v2498
    %v2579 = vpop.f32.mrf.mxu0
    %v2580 = vadd.f32 %v2539, %v2579
    %v2581 = vpop.f32.mrf.mxu0
    %v2582 = vadd.f32 %v2541, %v2581
    %v2583 = vpop.f32.mrf.mxu0
    %v2584 = vpop.f32.mrf.mxu0
    %2585 = vdwg.mxu0
    %2586 = vmatprep.subr.bf16.mxu0 %v2397
    %2587 = vmatpush1.bf16.msra.mxu0 %v2396
    %2588 = vmatprep.subr.bf16.mxu0 %v2393
    %2589 = vmatpush1.bf16.msra.mxu0 %v2392
    %2590 = vmatprep.subr.bf16.mxu0 %v2389
    %2591 = vmatpush1.bf16.msra.mxu0 %v2388
    %2592 = vmatprep.subr.bf16.mxu0 %v2385
    %2593 = vmatpush1.bf16.msra.mxu0 %v2384
    %2594 = vmatprep.subr.bf16.mxu0 %v2381
    %2595 = vmatpush1.bf16.msra.mxu0 %v2380
    %2596 = vmatprep.subr.bf16.mxu0 %v2377
    %2597 = vmatpush1.bf16.msra.mxu0 %v2376
    %2598 = vmatprep.subr.bf16.mxu0 %v2373
    %2599 = vmatpush1.bf16.msra.mxu0 %v2372
    %2600 = vmatprep.subr.bf16.mxu0 %v2369
    %2601 = vmatpush1.bf16.msra.mxu0 %v2368
    %2602 = vmatprep.subr.bf16.mxu0 %v2429
    %2603 = vmatpush2.bf16.msra.mxu0 %v2428
    %2604 = vmatprep.subr.bf16.mxu0 %v2425
    %2605 = vmatpush2.bf16.msra.mxu0 %v2424
    %2606 = vmatprep.subr.bf16.mxu0 %v2421
    %2607 = vmatpush2.bf16.msra.mxu0 %v2420
    %2608 = vmatprep.subr.bf16.mxu0 %v2417
    %2609 = vmatpush2.bf16.msra.mxu0 %v2416
    %2610 = vmatprep.subr.bf16.mxu0 %v2413
    %2611 = vmatpush2.bf16.msra.mxu0 %v2412
    %2612 = vmatprep.subr.bf16.mxu0 %v2409
    %2613 = vmatpush2.bf16.msra.mxu0 %v2408
    %2614 = vmatprep.subr.bf16.mxu0 %v2405
    %2615 = vmatpush2.bf16.msra.mxu0 %v2404
    %2616 = vmatprep.subr.bf16.mxu0 %v2401
    %2617 = vmatpush2.bf16.msra.mxu0 %v2400
    %2618 = vmatprep.mubr.bf16.mxu0 %v2501
    %2619 = vmatmul.mubr.bf16.gmra.mxu0 %v2500
    %v2620 = vpop.f32.mrf.mxu0
    %v2621 = vadd.f32 %v2580, %v2620
    %v2622 = vpop.f32.mrf.mxu0
    %v2623 = vadd.f32 %v2582, %v2622
    %v2624 = vpop.f32.mrf.mxu0
    %v2625 = vpop.f32.mrf.mxu0
    %2626 = vdwg.mxu0
    %2627 = vmatprep.subr.bf16.mxu0 %v2461
    %2628 = vmatpush1.bf16.msra.mxu0 %v2460
    %2629 = vmatprep.subr.bf16.mxu0 %v2457
    %2630 = vmatpush1.bf16.msra.mxu0 %v2456
    %2631 = vmatprep.subr.bf16.mxu0 %v2453
    %2632 = vmatpush1.bf16.msra.mxu0 %v2452
    %2633 = vmatprep.subr.bf16.mxu0 %v2449
    %2634 = vmatpush1.bf16.msra.mxu0 %v2448
    %2635 = vmatprep.subr.bf16.mxu0 %v2445
    %2636 = vmatpush1.bf16.msra.mxu0 %v2444
    %2637 = vmatprep.subr.bf16.mxu0 %v2441
    %2638 = vmatpush1.bf16.msra.mxu0 %v2440
    %2639 = vmatprep.subr.bf16.mxu0 %v2437
    %2640 = vmatpush1.bf16.msra.mxu0 %v2436
    %2641 = vmatprep.subr.bf16.mxu0 %v2433
    %2642 = vmatpush1.bf16.msra.mxu0 %v2432
    %2643 = vmatprep.subr.bf16.mxu0 %v2493
    %2644 = vmatpush2.bf16.msra.mxu0 %v2492
    %2645 = vmatprep.subr.bf16.mxu0 %v2489
    %2646 = vmatpush2.bf16.msra.mxu0 %v2488
    %2647 = vmatprep.subr.bf16.mxu0 %v2485
    %2648 = vmatpush2.bf16.msra.mxu0 %v2484
    %2649 = vmatprep.subr.bf16.mxu0 %v2481
    %2650 = vmatpush2.bf16.msra.mxu0 %v2480
    %2651 = vmatprep.subr.bf16.mxu0 %v2477
    %2652 = vmatpush2.bf16.msra.mxu0 %v2476
    %2653 = vmatprep.subr.bf16.mxu0 %v2473
    %2654 = vmatpush2.bf16.msra.mxu0 %v2472
    %2655 = vmatprep.subr.bf16.mxu0 %v2469
    %2656 = vmatpush2.bf16.msra.mxu0 %v2468
    %2657 = vmatprep.subr.bf16.mxu0 %v2465
    %2658 = vmatpush2.bf16.msra.mxu0 %v2464
    %2659 = vmatprep.mubr.bf16.mxu0 %v2503
    %2660 = vmatmul.mubr.bf16.gmra.mxu0 %v2502
    %v2661 = vpop.f32.mrf.mxu0
    %v2662 = vadd.f32 %v2621, %v2661
    %v2663 = vpop.f32.mrf.mxu0
    %v2664 = vadd.f32 %v2623, %v2663
    %v2665 = vpop.f32.mrf.mxu0
    %v2666 = vpop.f32.mrf.mxu0
    %2667 = vdwg.mxu0
    %2668 = vmatprep.subr.bf16.mxu0 %v2271
    %2669 = vmatpush1.bf16.msra.mxu0 %v2270
    %2670 = vmatprep.subr.bf16.mxu0 %v2267
    %2671 = vmatpush1.bf16.msra.mxu0 %v2266
    %2672 = vmatprep.subr.bf16.mxu0 %v2263
    %2673 = vmatpush1.bf16.msra.mxu0 %v2262
    %2674 = vmatprep.subr.bf16.mxu0 %v2259
    %2675 = vmatpush1.bf16.msra.mxu0 %v2258
    %2676 = vmatprep.subr.bf16.mxu0 %v2255
    %2677 = vmatpush1.bf16.msra.mxu0 %v2254
    %2678 = vmatprep.subr.bf16.mxu0 %v2251
    %2679 = vmatpush1.bf16.msra.mxu0 %v2250
    %2680 = vmatprep.subr.bf16.mxu0 %v2247
    %2681 = vmatpush1.bf16.msra.mxu0 %v2246
    %2682 = vmatprep.subr.bf16.mxu0 %v2243
    %2683 = vmatpush1.bf16.msra.mxu0 %v2242
    %2684 = vmatprep.subr.bf16.mxu0 %v2303
    %2685 = vmatpush2.bf16.msra.mxu0 %v2302
    %2686 = vmatprep.subr.bf16.mxu0 %v2299
    %2687 = vmatpush2.bf16.msra.mxu0 %v2298
    %2688 = vmatprep.subr.bf16.mxu0 %v2295
    %2689 = vmatpush2.bf16.msra.mxu0 %v2294
    %2690 = vmatprep.subr.bf16.mxu0 %v2291
    %2691 = vmatpush2.bf16.msra.mxu0 %v2290
    %2692 = vmatprep.subr.bf16.mxu0 %v2287
    %2693 = vmatpush2.bf16.msra.mxu0 %v2286
    %2694 = vmatprep.subr.bf16.mxu0 %v2283
    %2695 = vmatpush2.bf16.msra.mxu0 %v2282
    %2696 = vmatprep.subr.bf16.mxu0 %v2279
    %2697 = vmatpush2.bf16.msra.mxu0 %v2278
    %2698 = vmatprep.subr.bf16.mxu0 %v2275
    %2699 = vmatpush2.bf16.msra.mxu0 %v2274
    %2700 = vmatprep.mubr.bf16.mxu0 %v2497
    %2701 = vmatmul.mubr.bf16.gmra.mxu0 %v2496
    %v2702 = vpop.f32.mrf.mxu0
    %v2703 = vadd.f32 0.0, %v2702
    %v2704 = vpop.f32.mrf.mxu0
    %v2705 = vadd.f32 0.0, %v2704
    %v2706 = vpop.f32.mrf.mxu0
    %v2707 = vpop.f32.mrf.mxu0
    %2708 = vdwg.mxu0
    %2709 = vmatprep.subr.bf16.mxu0 %v2335
    %2710 = vmatpush1.bf16.msra.mxu0 %v2334
    %2711 = vmatprep.subr.bf16.mxu0 %v2331
    %2712 = vmatpush1.bf16.msra.mxu0 %v2330
    %2713 = vmatprep.subr.bf16.mxu0 %v2327
    %2714 = vmatpush1.bf16.msra.mxu0 %v2326
    %2715 = vmatprep.subr.bf16.mxu0 %v2323
    %2716 = vmatpush1.bf16.msra.mxu0 %v2322
    %2717 = vmatprep.subr.bf16.mxu0 %v2319
    %2718 = vmatpush1.bf16.msra.mxu0 %v2318
    %2719 = vmatprep.subr.bf16.mxu0 %v2315
    %2720 = vmatpush1.bf16.msra.mxu0 %v2314
    %2721 = vmatprep.subr.bf16.mxu0 %v2311
    %2722 = vmatpush1.bf16.msra.mxu0 %v2310
    %2723 = vmatprep.subr.bf16.mxu0 %v2307
    %2724 = vmatpush1.bf16.msra.mxu0 %v2306
    %2725 = vmatprep.subr.bf16.mxu0 %v2367
    %2726 = vmatpush2.bf16.msra.mxu0 %v2366
    %2727 = vmatprep.subr.bf16.mxu0 %v2363
    %2728 = vmatpush2.bf16.msra.mxu0 %v2362
    %2729 = vmatprep.subr.bf16.mxu0 %v2359
    %2730 = vmatpush2.bf16.msra.mxu0 %v2358
    %2731 = vmatprep.subr.bf16.mxu0 %v2355
    %2732 = vmatpush2.bf16.msra.mxu0 %v2354
    %2733 = vmatprep.subr.bf16.mxu0 %v2351
    %2734 = vmatpush2.bf16.msra.mxu0 %v2350
    %2735 = vmatprep.subr.bf16.mxu0 %v2347
    %2736 = vmatpush2.bf16.msra.mxu0 %v2346
    %2737 = vmatprep.subr.bf16.mxu0 %v2343
    %2738 = vmatpush2.bf16.msra.mxu0 %v2342
    %2739 = vmatprep.subr.bf16.mxu0 %v2339
    %2740 = vmatpush2.bf16.msra.mxu0 %v2338
    %2741 = vmatprep.mubr.bf16.mxu0 %v2499
    %2742 = vmatmul.mubr.bf16.gmra.mxu0 %v2498
    %v2743 = vpop.f32.mrf.mxu0
    %v2744 = vadd.f32 %v2703, %v2743
    %v2745 = vpop.f32.mrf.mxu0
    %v2746 = vadd.f32 %v2705, %v2745
    %v2747 = vpop.f32.mrf.mxu0
    %v2748 = vpop.f32.mrf.mxu0
    %2749 = vdwg.mxu0
    %2750 = vmatprep.subr.bf16.mxu0 %v2399
    %2751 = vmatpush1.bf16.msra.mxu0 %v2398
    %2752 = vmatprep.subr.bf16.mxu0 %v2395
    %2753 = vmatpush1.bf16.msra.mxu0 %v2394
    %2754 = vmatprep.subr.bf16.mxu0 %v2391
    %2755 = vmatpush1.bf16.msra.mxu0 %v2390
    %2756 = vmatprep.subr.bf16.mxu0 %v2387
    %2757 = vmatpush1.bf16.msra.mxu0 %v2386
    %2758 = vmatprep.subr.bf16.mxu0 %v2383
    %2759 = vmatpush1.bf16.msra.mxu0 %v2382
    %2760 = vmatprep.subr.bf16.mxu0 %v2379
    %2761 = vmatpush1.bf16.msra.mxu0 %v2378
    %2762 = vmatprep.subr.bf16.mxu0 %v2375
    %2763 = vmatpush1.bf16.msra.mxu0 %v2374
    %2764 = vmatprep.subr.bf16.mxu0 %v2371
    %2765 = vmatpush1.bf16.msra.mxu0 %v2370
    %2766 = vmatprep.subr.bf16.mxu0 %v2431
    %2767 = vmatpush2.bf16.msra.mxu0 %v2430
    %2768 = vmatprep.subr.bf16.mxu0 %v2427
    %2769 = vmatpush2.bf16.msra.mxu0 %v2426
    %2770 = vmatprep.subr.bf16.mxu0 %v2423
    %2771 = vmatpush2.bf16.msra.mxu0 %v2422
    %2772 = vmatprep.subr.bf16.mxu0 %v2419
    %2773 = vmatpush2.bf16.msra.mxu0 %v2418
    %2774 = vmatprep.subr.bf16.mxu0 %v2415
    %2775 = vmatpush2.bf16.msra.mxu0 %v2414
    %2776 = vmatprep.subr.bf16.mxu0 %v2411
    %2777 = vmatpush2.bf16.msra.mxu0 %v2410
    %2778 = vmatprep.subr.bf16.mxu0 %v2407
    %2779 = vmatpush2.bf16.msra.mxu0 %v2406
    %2780 = vmatprep.subr.bf16.mxu0 %v2403
    %2781 = vmatpush2.bf16.msra.mxu0 %v2402
    %2782 = vmatprep.mubr.bf16.mxu0 %v2501
    %2783 = vmatmul.mubr.bf16.gmra.mxu0 %v2500
    %v2784 = vpop.f32.mrf.mxu0
    %v2785 = vadd.f32 %v2744, %v2784
    %v2786 = vpop.f32.mrf.mxu0
    %v2787 = vadd.f32 %v2746, %v2786
    %v2788 = vpop.f32.mrf.mxu0
    %v2789 = vpop.f32.mrf.mxu0
    %2790 = vdwg.mxu0
    %2791 = vmatprep.subr.bf16.mxu0 %v2463
    %2792 = vmatpush1.bf16.msra.mxu0 %v2462
    %2793 = vmatprep.subr.bf16.mxu0 %v2459
    %2794 = vmatpush1.bf16.msra.mxu0 %v2458
    %2795 = vmatprep.subr.bf16.mxu0 %v2455
    %2796 = vmatpush1.bf16.msra.mxu0 %v2454
    %2797 = vmatprep.subr.bf16.mxu0 %v2451
    %2798 = vmatpush1.bf16.msra.mxu0 %v2450
    %2799 = vmatprep.subr.bf16.mxu0 %v2447
    %2800 = vmatpush1.bf16.msra.mxu0 %v2446
    %2801 = vmatprep.subr.bf16.mxu0 %v2443
    %2802 = vmatpush1.bf16.msra.mxu0 %v2442
    %2803 = vmatprep.subr.bf16.mxu0 %v2439
    %2804 = vmatpush1.bf16.msra.mxu0 %v2438
    %2805 = vmatprep.subr.bf16.mxu0 %v2435
    %2806 = vmatpush1.bf16.msra.mxu0 %v2434
    %2807 = vmatprep.subr.bf16.mxu0 %v2495
    %2808 = vmatpush2.bf16.msra.mxu0 %v2494
    %2809 = vmatprep.subr.bf16.mxu0 %v2491
    %2810 = vmatpush2.bf16.msra.mxu0 %v2490
    %2811 = vmatprep.subr.bf16.mxu0 %v2487
    %2812 = vmatpush2.bf16.msra.mxu0 %v2486
    %2813 = vmatprep.subr.bf16.mxu0 %v2483
    %2814 = vmatpush2.bf16.msra.mxu0 %v2482
    %2815 = vmatprep.subr.bf16.mxu0 %v2479
    %2816 = vmatpush2.bf16.msra.mxu0 %v2478
    %2817 = vmatprep.subr.bf16.mxu0 %v2475
    %2818 = vmatpush2.bf16.msra.mxu0 %v2474
    %2819 = vmatprep.subr.bf16.mxu0 %v2471
    %2820 = vmatpush2.bf16.msra.mxu0 %v2470
    %2821 = vmatprep.subr.bf16.mxu0 %v2467
    %2822 = vmatpush2.bf16.msra.mxu0 %v2466
    %2823 = vmatprep.mubr.bf16.mxu0 %v2503
    %2824 = vmatmul.mubr.bf16.gmra.mxu0 %v2502
    %v2825 = vpop.f32.mrf.mxu0
    %v2826 = vadd.f32 %v2785, %v2825
    %v2827 = vpop.f32.mrf.mxu0
    %v2828 = vadd.f32 %v2787, %v2827
    %v2829 = vpop.f32.mrf.mxu0
    %v2830 = vpop.f32.mrf.mxu0
    %2831 = vdwg.mxu0
    %v2832 = vlaneseq
    %v2833 = vshrl.u32 %v2832, 7
    %v2834 = vsub.s32 4, %v2833
    %v2835 = vrot.slane %v124, %v2834
    %v2836 = vlaneseq
    %v2837 = vshrl.u32 %v2836, 7
    %v2838 = vsub.s32 4, %v2837
    %v2839 = vrot.slane %v125, %v2838
    %v2840 = vlaneseq
    %v2841 = vshrl.u32 %v2840, 7
    %v2842 = vsub.s32 4, %v2841
    %v2843 = vrot.slane %v126, %v2842
    %v2844 = vlaneseq
    %v2845 = vshrl.u32 %v2844, 7
    %v2846 = vsub.s32 4, %v2845
    %v2847 = vrot.slane %v127, %v2846
    %v2848 = vmul.f32 %v2662, %v2835
    %v2849 = vmul.f32 %v2664, %v2839
    %v2850 = vmul.f32 %v2826, %v2843
    %v2851 = vmul.f32 %v2828, %v2847
    %v2852 = vlaneseq
    %v2853 = vshrl.u32 %v2852, 7
    %v2854 = vsub.s32 2, %v2853
    %v2855 = vrot.slane %v124, %v2854
    %v2856 = vlaneseq
    %v2857 = vshrl.u32 %v2856, 7
    %v2858 = vsub.s32 2, %v2857
    %v2859 = vrot.slane %v125, %v2858
    %v2860 = vlaneseq
    %v2861 = vshrl.u32 %v2860, 7
    %v2862 = vsub.s32 2, %v2861
    %v2863 = vrot.slane %v126, %v2862
    %v2864 = vlaneseq
    %v2865 = vshrl.u32 %v2864, 7
    %v2866 = vsub.s32 2, %v2865
    %v2867 = vrot.slane %v127, %v2866
    %v2868 = vadd.f32 %v2848, %v2855
    %v2869 = vadd.f32 %v2849, %v2859
    %v2870 = vadd.f32 %v2850, %v2863
    %v2871 = vadd.f32 %v2851, %v2867
    %v2872 = vtanh.pop %v2868
    %v2873 = vtanh.pop %v2869
    %v2874 = vtanh.pop %v2870
    %v2875 = vtanh.pop %v2871
    %2876 = vst [vmem:[#allocation14] sm:$0xff] %v2872
    %2877 = vst [vmem:[#allocation14 + $0x8] sm:$0xff] %v2873
    %2878 = vst [vmem:[#allocation14 + $0x10] sm:$0xff] %v2874
    %2879 = vst [vmem:[#allocation14 + $0x18] sm:$0xff] %v2875
    %s2880 = smul.u32 %s2108, 3
    %s2881 = sshll.u32 %s2880, 4
    %2882 = dma.done %s104, %s2881
    %v2883 = vld [vmem:[#allocation7] sm:$0xff]
    %v2884 = vld [vmem:[#allocation7 + $0x8] sm:$0xff]
    %v2885 = vld [vmem:[#allocation7 + $0x10] sm:$0xff]
    %v2886 = vld [vmem:[#allocation7 + $0x18] sm:$0xff]
    %v2887 = vld [vmem:[#allocation7 + $0x20] sm:$0xff]
    %v2888 = vld [vmem:[#allocation7 + $0x28] sm:$0xff]
    %v2889 = vld [vmem:[#allocation7 + $0x30] sm:$0xff]
    %v2890 = vld [vmem:[#allocation7 + $0x38] sm:$0xff]
    %v2891 = vld [vmem:[#allocation7 + $0x40] sm:$0xff]
    %v2892 = vld [vmem:[#allocation7 + $0x48] sm:$0xff]
    %v2893 = vld [vmem:[#allocation7 + $0x50] sm:$0xff]
    %v2894 = vld [vmem:[#allocation7 + $0x58] sm:$0xff]
    %v2895 = vld [vmem:[#allocation7 + $0x60] sm:$0xff]
    %v2896 = vld [vmem:[#allocation7 + $0x68] sm:$0xff]
    %v2897 = vld [vmem:[#allocation7 + $0x70] sm:$0xff]
    %v2898 = vld [vmem:[#allocation7 + $0x78] sm:$0xff]
    %v2899 = vld [vmem:[#allocation7 + $0x80] sm:$0xff]
    %v2900 = vld [vmem:[#allocation7 + $0x88] sm:$0xff]
    %v2901 = vld [vmem:[#allocation7 + $0x90] sm:$0xff]
    %v2902 = vld [vmem:[#allocation7 + $0x98] sm:$0xff]
    %v2903 = vld [vmem:[#allocation7 + $0xa0] sm:$0xff]
    %v2904 = vld [vmem:[#allocation7 + $0xa8] sm:$0xff]
    %v2905 = vld [vmem:[#allocation7 + $0xb0] sm:$0xff]
    %v2906 = vld [vmem:[#allocation7 + $0xb8] sm:$0xff]
    %v2907 = vld [vmem:[#allocation7 + $0xc0] sm:$0xff]
    %v2908 = vld [vmem:[#allocation7 + $0xc8] sm:$0xff]
    %v2909 = vld [vmem:[#allocation7 + $0xd0] sm:$0xff]
    %v2910 = vld [vmem:[#allocation7 + $0xd8] sm:$0xff]
    %v2911 = vld [vmem:[#allocation7 + $0xe0] sm:$0xff]
    %v2912 = vld [vmem:[#allocation7 + $0xe8] sm:$0xff]
    %v2913 = vld [vmem:[#allocation7 + $0xf0] sm:$0xff]
    %v2914 = vld [vmem:[#allocation7 + $0xf8] sm:$0xff]
    %v2915 = vld [vmem:[#allocation7 + $0x100] sm:$0xff]
    %v2916 = vld [vmem:[#allocation7 + $0x108] sm:$0xff]
    %v2917 = vld [vmem:[#allocation7 + $0x110] sm:$0xff]
    %v2918 = vld [vmem:[#allocation7 + $0x118] sm:$0xff]
    %v2919 = vld [vmem:[#allocation7 + $0x120] sm:$0xff]
    %v2920 = vld [vmem:[#allocation7 + $0x128] sm:$0xff]
    %v2921 = vld [vmem:[#allocation7 + $0x130] sm:$0xff]
    %v2922 = vld [vmem:[#allocation7 + $0x138] sm:$0xff]
    %v2923 = vld [vmem:[#allocation7 + $0x140] sm:$0xff]
    %v2924 = vld [vmem:[#allocation7 + $0x148] sm:$0xff]
    %v2925 = vld [vmem:[#allocation7 + $0x150] sm:$0xff]
    %v2926 = vld [vmem:[#allocation7 + $0x158] sm:$0xff]
    %v2927 = vld [vmem:[#allocation7 + $0x160] sm:$0xff]
    %v2928 = vld [vmem:[#allocation7 + $0x168] sm:$0xff]
    %v2929 = vld [vmem:[#allocation7 + $0x170] sm:$0xff]
    %v2930 = vld [vmem:[#allocation7 + $0x178] sm:$0xff]
    %v2931 = vld [vmem:[#allocation7 + $0x180] sm:$0xff]
    %v2932 = vld [vmem:[#allocation7 + $0x188] sm:$0xff]
    %v2933 = vld [vmem:[#allocation7 + $0x190] sm:$0xff]
    %v2934 = vld [vmem:[#allocation7 + $0x198] sm:$0xff]
    %v2935 = vld [vmem:[#allocation7 + $0x1a0] sm:$0xff]
    %v2936 = vld [vmem:[#allocation7 + $0x1a8] sm:$0xff]
    %v2937 = vld [vmem:[#allocation7 + $0x1b0] sm:$0xff]
    %v2938 = vld [vmem:[#allocation7 + $0x1b8] sm:$0xff]
    %v2939 = vld [vmem:[#allocation7 + $0x1c0] sm:$0xff]
    %v2940 = vld [vmem:[#allocation7 + $0x1c8] sm:$0xff]
    %v2941 = vld [vmem:[#allocation7 + $0x1d0] sm:$0xff]
    %v2942 = vld [vmem:[#allocation7 + $0x1d8] sm:$0xff]
    %v2943 = vld [vmem:[#allocation7 + $0x1e0] sm:$0xff]
    %v2944 = vld [vmem:[#allocation7 + $0x1e8] sm:$0xff]
    %v2945 = vld [vmem:[#allocation7 + $0x1f0] sm:$0xff]
    %v2946 = vld [vmem:[#allocation7 + $0x1f8] sm:$0xff]
    %v2947 = vld [vmem:[#allocation7 + $0x200] sm:$0xff]
    %v2948 = vld [vmem:[#allocation7 + $0x208] sm:$0xff]
    %v2949 = vld [vmem:[#allocation7 + $0x210] sm:$0xff]
    %v2950 = vld [vmem:[#allocation7 + $0x218] sm:$0xff]
    %v2951 = vld [vmem:[#allocation7 + $0x220] sm:$0xff]
    %v2952 = vld [vmem:[#allocation7 + $0x228] sm:$0xff]
    %v2953 = vld [vmem:[#allocation7 + $0x230] sm:$0xff]
    %v2954 = vld [vmem:[#allocation7 + $0x238] sm:$0xff]
    %v2955 = vld [vmem:[#allocation7 + $0x240] sm:$0xff]
    %v2956 = vld [vmem:[#allocation7 + $0x248] sm:$0xff]
    %v2957 = vld [vmem:[#allocation7 + $0x250] sm:$0xff]
    %v2958 = vld [vmem:[#allocation7 + $0x258] sm:$0xff]
    %v2959 = vld [vmem:[#allocation7 + $0x260] sm:$0xff]
    %v2960 = vld [vmem:[#allocation7 + $0x268] sm:$0xff]
    %v2961 = vld [vmem:[#allocation7 + $0x270] sm:$0xff]
    %v2962 = vld [vmem:[#allocation7 + $0x278] sm:$0xff]
    %v2963 = vld [vmem:[#allocation7 + $0x280] sm:$0xff]
    %v2964 = vld [vmem:[#allocation7 + $0x288] sm:$0xff]
    %v2965 = vld [vmem:[#allocation7 + $0x290] sm:$0xff]
    %v2966 = vld [vmem:[#allocation7 + $0x298] sm:$0xff]
    %v2967 = vld [vmem:[#allocation7 + $0x2a0] sm:$0xff]
    %v2968 = vld [vmem:[#allocation7 + $0x2a8] sm:$0xff]
    %v2969 = vld [vmem:[#allocation7 + $0x2b0] sm:$0xff]
    %v2970 = vld [vmem:[#allocation7 + $0x2b8] sm:$0xff]
    %v2971 = vld [vmem:[#allocation7 + $0x2c0] sm:$0xff]
    %v2972 = vld [vmem:[#allocation7 + $0x2c8] sm:$0xff]
    %v2973 = vld [vmem:[#allocation7 + $0x2d0] sm:$0xff]
    %v2974 = vld [vmem:[#allocation7 + $0x2d8] sm:$0xff]
    %v2975 = vld [vmem:[#allocation7 + $0x2e0] sm:$0xff]
    %v2976 = vld [vmem:[#allocation7 + $0x2e8] sm:$0xff]
    %v2977 = vld [vmem:[#allocation7 + $0x2f0] sm:$0xff]
    %v2978 = vld [vmem:[#allocation7 + $0x2f8] sm:$0xff]
    %v2979 = vunpack.c.l.s8.bf16 %v2883
    %v2980 = vunpack.c.l.s8.bf16 %v2884
    %v2981 = vunpack.c.l.s8.bf16 %v2885
    %v2982 = vunpack.c.h.s8.bf16 %v2883
    %v2983 = vunpack.c.h.s8.bf16 %v2884
    %v2984 = vunpack.c.h.s8.bf16 %v2885
    %v2985 = vunpack.c.l.s8.bf16 %v2886
    %v2986 = vunpack.c.l.s8.bf16 %v2887
    %v2987 = vunpack.c.l.s8.bf16 %v2888
    %v2988 = vunpack.c.h.s8.bf16 %v2886
    %v2989 = vunpack.c.h.s8.bf16 %v2887
    %v2990 = vunpack.c.h.s8.bf16 %v2888
    %v2991 = vunpack.c.l.s8.bf16 %v2889
    %v2992 = vunpack.c.l.s8.bf16 %v2890
    %v2993 = vunpack.c.l.s8.bf16 %v2891
    %v2994 = vunpack.c.h.s8.bf16 %v2889
    %v2995 = vunpack.c.h.s8.bf16 %v2890
    %v2996 = vunpack.c.h.s8.bf16 %v2891
    %v2997 = vunpack.c.l.s8.bf16 %v2892
    %v2998 = vunpack.c.l.s8.bf16 %v2893
    %v2999 = vunpack.c.l.s8.bf16 %v2894
    %v3000 = vunpack.c.h.s8.bf16 %v2892
    %v3001 = vunpack.c.h.s8.bf16 %v2893
    %v3002 = vunpack.c.h.s8.bf16 %v2894
    %v3003 = vunpack.c.l.s8.bf16 %v2895
    %v3004 = vunpack.c.l.s8.bf16 %v2896
    %v3005 = vunpack.c.l.s8.bf16 %v2897
    %v3006 = vunpack.c.h.s8.bf16 %v2895
    %v3007 = vunpack.c.h.s8.bf16 %v2896
    %v3008 = vunpack.c.h.s8.bf16 %v2897
    %v3009 = vunpack.c.l.s8.bf16 %v2898
    %v3010 = vunpack.c.l.s8.bf16 %v2899
    %v3011 = vunpack.c.l.s8.bf16 %v2900
    %v3012 = vunpack.c.h.s8.bf16 %v2898
    %v3013 = vunpack.c.h.s8.bf16 %v2899
    %v3014 = vunpack.c.h.s8.bf16 %v2900
    %v3015 = vunpack.c.l.s8.bf16 %v2901
    %v3016 = vunpack.c.l.s8.bf16 %v2902
    %v3017 = vunpack.c.l.s8.bf16 %v2903
    %v3018 = vunpack.c.h.s8.bf16 %v2901
    %v3019 = vunpack.c.h.s8.bf16 %v2902
    %v3020 = vunpack.c.h.s8.bf16 %v2903
    %v3021 = vunpack.c.l.s8.bf16 %v2904
    %v3022 = vunpack.c.l.s8.bf16 %v2905
    %v3023 = vunpack.c.l.s8.bf16 %v2906
    %v3024 = vunpack.c.h.s8.bf16 %v2904
    %v3025 = vunpack.c.h.s8.bf16 %v2905
    %v3026 = vunpack.c.h.s8.bf16 %v2906
    %v3027 = vunpack.c.l.s8.bf16 %v2907
    %v3028 = vunpack.c.l.s8.bf16 %v2908
    %v3029 = vunpack.c.l.s8.bf16 %v2909
    %v3030 = vunpack.c.h.s8.bf16 %v2907
    %v3031 = vunpack.c.h.s8.bf16 %v2908
    %v3032 = vunpack.c.h.s8.bf16 %v2909
    %v3033 = vunpack.c.l.s8.bf16 %v2910
    %v3034 = vunpack.c.l.s8.bf16 %v2911
    %v3035 = vunpack.c.l.s8.bf16 %v2912
    %v3036 = vunpack.c.h.s8.bf16 %v2910
    %v3037 = vunpack.c.h.s8.bf16 %v2911
    %v3038 = vunpack.c.h.s8.bf16 %v2912
    %v3039 = vunpack.c.l.s8.bf16 %v2913
    %v3040 = vunpack.c.l.s8.bf16 %v2914
    %v3041 = vunpack.c.l.s8.bf16 %v2915
    %v3042 = vunpack.c.h.s8.bf16 %v2913
    %v3043 = vunpack.c.h.s8.bf16 %v2914
    %v3044 = vunpack.c.h.s8.bf16 %v2915
    %v3045 = vunpack.c.l.s8.bf16 %v2916
    %v3046 = vunpack.c.l.s8.bf16 %v2917
    %v3047 = vunpack.c.l.s8.bf16 %v2918
    %v3048 = vunpack.c.h.s8.bf16 %v2916
    %v3049 = vunpack.c.h.s8.bf16 %v2917
    %v3050 = vunpack.c.h.s8.bf16 %v2918
    %v3051 = vunpack.c.l.s8.bf16 %v2919
    %v3052 = vunpack.c.l.s8.bf16 %v2920
    %v3053 = vunpack.c.l.s8.bf16 %v2921
    %v3054 = vunpack.c.h.s8.bf16 %v2919
    %v3055 = vunpack.c.h.s8.bf16 %v2920
    %v3056 = vunpack.c.h.s8.bf16 %v2921
    %v3057 = vunpack.c.l.s8.bf16 %v2922
    %v3058 = vunpack.c.l.s8.bf16 %v2923
    %v3059 = vunpack.c.l.s8.bf16 %v2924
    %v3060 = vunpack.c.h.s8.bf16 %v2922
    %v3061 = vunpack.c.h.s8.bf16 %v2923
    %v3062 = vunpack.c.h.s8.bf16 %v2924
    %v3063 = vunpack.c.l.s8.bf16 %v2925
    %v3064 = vunpack.c.l.s8.bf16 %v2926
    %v3065 = vunpack.c.l.s8.bf16 %v2927
    %v3066 = vunpack.c.h.s8.bf16 %v2925
    %v3067 = vunpack.c.h.s8.bf16 %v2926
    %v3068 = vunpack.c.h.s8.bf16 %v2927
    %v3069 = vunpack.c.l.s8.bf16 %v2928
    %v3070 = vunpack.c.l.s8.bf16 %v2929
    %v3071 = vunpack.c.l.s8.bf16 %v2930
    %v3072 = vunpack.c.h.s8.bf16 %v2928
    %v3073 = vunpack.c.h.s8.bf16 %v2929
    %v3074 = vunpack.c.h.s8.bf16 %v2930
    %v3075 = vunpack.c.l.s8.bf16 %v2931
    %v3076 = vunpack.c.l.s8.bf16 %v2932
    %v3077 = vunpack.c.l.s8.bf16 %v2933
    %v3078 = vunpack.c.h.s8.bf16 %v2931
    %v3079 = vunpack.c.h.s8.bf16 %v2932
    %v3080 = vunpack.c.h.s8.bf16 %v2933
    %v3081 = vunpack.c.l.s8.bf16 %v2934
    %v3082 = vunpack.c.l.s8.bf16 %v2935
    %v3083 = vunpack.c.l.s8.bf16 %v2936
    %v3084 = vunpack.c.h.s8.bf16 %v2934
    %v3085 = vunpack.c.h.s8.bf16 %v2935
    %v3086 = vunpack.c.h.s8.bf16 %v2936
    %v3087 = vunpack.c.l.s8.bf16 %v2937
    %v3088 = vunpack.c.l.s8.bf16 %v2938
    %v3089 = vunpack.c.l.s8.bf16 %v2939
    %v3090 = vunpack.c.h.s8.bf16 %v2937
    %v3091 = vunpack.c.h.s8.bf16 %v2938
    %v3092 = vunpack.c.h.s8.bf16 %v2939
    %v3093 = vunpack.c.l.s8.bf16 %v2940
    %v3094 = vunpack.c.l.s8.bf16 %v2941
    %v3095 = vunpack.c.l.s8.bf16 %v2942
    %v3096 = vunpack.c.h.s8.bf16 %v2940
    %v3097 = vunpack.c.h.s8.bf16 %v2941
    %v3098 = vunpack.c.h.s8.bf16 %v2942
    %v3099 = vunpack.c.l.s8.bf16 %v2943
    %v3100 = vunpack.c.l.s8.bf16 %v2944
    %v3101 = vunpack.c.l.s8.bf16 %v2945
    %v3102 = vunpack.c.h.s8.bf16 %v2943
    %v3103 = vunpack.c.h.s8.bf16 %v2944
    %v3104 = vunpack.c.h.s8.bf16 %v2945
    %v3105 = vunpack.c.l.s8.bf16 %v2946
    %v3106 = vunpack.c.l.s8.bf16 %v2947
    %v3107 = vunpack.c.l.s8.bf16 %v2948
    %v3108 = vunpack.c.h.s8.bf16 %v2946
    %v3109 = vunpack.c.h.s8.bf16 %v2947
    %v3110 = vunpack.c.h.s8.bf16 %v2948
    %v3111 = vunpack.c.l.s8.bf16 %v2949
    %v3112 = vunpack.c.l.s8.bf16 %v2950
    %v3113 = vunpack.c.l.s8.bf16 %v2951
    %v3114 = vunpack.c.h.s8.bf16 %v2949
    %v3115 = vunpack.c.h.s8.bf16 %v2950
    %v3116 = vunpack.c.h.s8.bf16 %v2951
    %v3117 = vunpack.c.l.s8.bf16 %v2952
    %v3118 = vunpack.c.l.s8.bf16 %v2953
    %v3119 = vunpack.c.l.s8.bf16 %v2954
    %v3120 = vunpack.c.h.s8.bf16 %v2952
    %v3121 = vunpack.c.h.s8.bf16 %v2953
    %v3122 = vunpack.c.h.s8.bf16 %v2954
    %v3123 = vunpack.c.l.s8.bf16 %v2955
    %v3124 = vunpack.c.l.s8.bf16 %v2956
    %v3125 = vunpack.c.l.s8.bf16 %v2957
    %v3126 = vunpack.c.h.s8.bf16 %v2955
    %v3127 = vunpack.c.h.s8.bf16 %v2956
    %v3128 = vunpack.c.h.s8.bf16 %v2957
    %v3129 = vunpack.c.l.s8.bf16 %v2958
    %v3130 = vunpack.c.l.s8.bf16 %v2959
    %v3131 = vunpack.c.l.s8.bf16 %v2960
    %v3132 = vunpack.c.h.s8.bf16 %v2958
    %v3133 = vunpack.c.h.s8.bf16 %v2959
    %v3134 = vunpack.c.h.s8.bf16 %v2960
    %v3135 = vunpack.c.l.s8.bf16 %v2961
    %v3136 = vunpack.c.l.s8.bf16 %v2962
    %v3137 = vunpack.c.l.s8.bf16 %v2963
    %v3138 = vunpack.c.h.s8.bf16 %v2961
    %v3139 = vunpack.c.h.s8.bf16 %v2962
    %v3140 = vunpack.c.h.s8.bf16 %v2963
    %v3141 = vunpack.c.l.s8.bf16 %v2964
    %v3142 = vunpack.c.l.s8.bf16 %v2965
    %v3143 = vunpack.c.l.s8.bf16 %v2966
    %v3144 = vunpack.c.h.s8.bf16 %v2964
    %v3145 = vunpack.c.h.s8.bf16 %v2965
    %v3146 = vunpack.c.h.s8.bf16 %v2966
    %v3147 = vunpack.c.l.s8.bf16 %v2967
    %v3148 = vunpack.c.l.s8.bf16 %v2968
    %v3149 = vunpack.c.l.s8.bf16 %v2969
    %v3150 = vunpack.c.h.s8.bf16 %v2967
    %v3151 = vunpack.c.h.s8.bf16 %v2968
    %v3152 = vunpack.c.h.s8.bf16 %v2969
    %v3153 = vunpack.c.l.s8.bf16 %v2970
    %v3154 = vunpack.c.l.s8.bf16 %v2971
    %v3155 = vunpack.c.l.s8.bf16 %v2972
    %v3156 = vunpack.c.h.s8.bf16 %v2970
    %v3157 = vunpack.c.h.s8.bf16 %v2971
    %v3158 = vunpack.c.h.s8.bf16 %v2972
    %v3159 = vunpack.c.l.s8.bf16 %v2973
    %v3160 = vunpack.c.l.s8.bf16 %v2974
    %v3161 = vunpack.c.l.s8.bf16 %v2975
    %v3162 = vunpack.c.h.s8.bf16 %v2973
    %v3163 = vunpack.c.h.s8.bf16 %v2974
    %v3164 = vunpack.c.h.s8.bf16 %v2975
    %v3165 = vunpack.c.l.s8.bf16 %v2976
    %v3166 = vunpack.c.l.s8.bf16 %v2977
    %v3167 = vunpack.c.l.s8.bf16 %v2978
    %v3168 = vunpack.c.h.s8.bf16 %v2976
    %v3169 = vunpack.c.h.s8.bf16 %v2977
    %v3170 = vunpack.c.h.s8.bf16 %v2978
    %3171 = vmatprep.subr.bf16.mxu0 %v3001
    %3172 = vmatpush1.bf16.msra.mxu0 %v3000
    %3173 = vmatprep.subr.bf16.mxu0 %v2998
    %3174 = vmatpush1.bf16.msra.mxu0 %v2997
    %3175 = vmatprep.subr.bf16.mxu0 %v2995
    %3176 = vmatpush1.bf16.msra.mxu0 %v2994
    %3177 = vmatprep.subr.bf16.mxu0 %v2992
    %3178 = vmatpush1.bf16.msra.mxu0 %v2991
    %3179 = vmatprep.subr.bf16.mxu0 %v2989
    %3180 = vmatpush1.bf16.msra.mxu0 %v2988
    %3181 = vmatprep.subr.bf16.mxu0 %v2986
    %3182 = vmatpush1.bf16.msra.mxu0 %v2985
    %3183 = vmatprep.subr.bf16.mxu0 %v2983
    %3184 = vmatpush1.bf16.msra.mxu0 %v2982
    %3185 = vmatprep.subr.bf16.mxu0 %v2980
    %3186 = vmatpush1.bf16.msra.mxu0 %v2979
    %3187 = vmatprep.subr.bf16.mxu0 %v3025
    %3188 = vmatpush2.bf16.msra.mxu0 %v3024
    %3189 = vmatprep.subr.bf16.mxu0 %v3022
    %3190 = vmatpush2.bf16.msra.mxu0 %v3021
    %3191 = vmatprep.subr.bf16.mxu0 %v3019
    %3192 = vmatpush2.bf16.msra.mxu0 %v3018
    %3193 = vmatprep.subr.bf16.mxu0 %v3016
    %3194 = vmatpush2.bf16.msra.mxu0 %v3015
    %3195 = vmatprep.subr.bf16.mxu0 %v3013
    %3196 = vmatpush2.bf16.msra.mxu0 %v3012
    %3197 = vmatprep.subr.bf16.mxu0 %v3010
    %3198 = vmatpush2.bf16.msra.mxu0 %v3009
    %3199 = vmatprep.subr.bf16.mxu0 %v3007
    %3200 = vmatpush2.bf16.msra.mxu0 %v3006
    %3201 = vmatprep.subr.bf16.mxu0 %v3004
    %3202 = vmatpush2.bf16.msra.mxu0 %v3003
    %3203 = vmatprep.mubr.bf16.mxu0 %v2497
    %3204 = vmatmul.mubr.bf16.gmra.mxu0 %v2496
    %v3205 = vpop.f32.mrf.mxu0
    %v3206 = vadd.f32 0.0, %v3205
    %v3207 = vpop.f32.mrf.mxu0
    %v3208 = vadd.f32 0.0, %v3207
    %v3209 = vpop.f32.mrf.mxu0
    %v3210 = vpop.f32.mrf.mxu0
    %3211 = vdwg.mxu0
    %3212 = vmatprep.subr.bf16.mxu0 %v3049
    %3213 = vmatpush1.bf16.msra.mxu0 %v3048
    %3214 = vmatprep.subr.bf16.mxu0 %v3046
    %3215 = vmatpush1.bf16.msra.mxu0 %v3045
    %3216 = vmatprep.subr.bf16.mxu0 %v3043
    %3217 = vmatpush1.bf16.msra.mxu0 %v3042
    %3218 = vmatprep.subr.bf16.mxu0 %v3040
    %3219 = vmatpush1.bf16.msra.mxu0 %v3039
    %3220 = vmatprep.subr.bf16.mxu0 %v3037
    %3221 = vmatpush1.bf16.msra.mxu0 %v3036
    %3222 = vmatprep.subr.bf16.mxu0 %v3034
    %3223 = vmatpush1.bf16.msra.mxu0 %v3033
    %3224 = vmatprep.subr.bf16.mxu0 %v3031
    %3225 = vmatpush1.bf16.msra.mxu0 %v3030
    %3226 = vmatprep.subr.bf16.mxu0 %v3028
    %3227 = vmatpush1.bf16.msra.mxu0 %v3027
    %3228 = vmatprep.subr.bf16.mxu0 %v3073
    %3229 = vmatpush2.bf16.msra.mxu0 %v3072
    %3230 = vmatprep.subr.bf16.mxu0 %v3070
    %3231 = vmatpush2.bf16.msra.mxu0 %v3069
    %3232 = vmatprep.subr.bf16.mxu0 %v3067
    %3233 = vmatpush2.bf16.msra.mxu0 %v3066
    %3234 = vmatprep.subr.bf16.mxu0 %v3064
    %3235 = vmatpush2.bf16.msra.mxu0 %v3063
    %3236 = vmatprep.subr.bf16.mxu0 %v3061
    %3237 = vmatpush2.bf16.msra.mxu0 %v3060
    %3238 = vmatprep.subr.bf16.mxu0 %v3058
    %3239 = vmatpush2.bf16.msra.mxu0 %v3057
    %3240 = vmatprep.subr.bf16.mxu0 %v3055
    %3241 = vmatpush2.bf16.msra.mxu0 %v3054
    %3242 = vmatprep.subr.bf16.mxu0 %v3052
    %3243 = vmatpush2.bf16.msra.mxu0 %v3051
    %3244 = vmatprep.mubr.bf16.mxu0 %v2499
    %3245 = vmatmul.mubr.bf16.gmra.mxu0 %v2498
    %v3246 = vpop.f32.mrf.mxu0
    %v3247 = vadd.f32 %v3206, %v3246
    %v3248 = vpop.f32.mrf.mxu0
    %v3249 = vadd.f32 %v3208, %v3248
    %v3250 = vpop.f32.mrf.mxu0
    %v3251 = vpop.f32.mrf.mxu0
    %3252 = vdwg.mxu0
    %3253 = vmatprep.subr.bf16.mxu0 %v3097
    %3254 = vmatpush1.bf16.msra.mxu0 %v3096
    %3255 = vmatprep.subr.bf16.mxu0 %v3094
    %3256 = vmatpush1.bf16.msra.mxu0 %v3093
    %3257 = vmatprep.subr.bf16.mxu0 %v3091
    %3258 = vmatpush1.bf16.msra.mxu0 %v3090
    %3259 = vmatprep.subr.bf16.mxu0 %v3088
    %3260 = vmatpush1.bf16.msra.mxu0 %v3087
    %3261 = vmatprep.subr.bf16.mxu0 %v3085
    %3262 = vmatpush1.bf16.msra.mxu0 %v3084
    %3263 = vmatprep.subr.bf16.mxu0 %v3082
    %3264 = vmatpush1.bf16.msra.mxu0 %v3081
    %3265 = vmatprep.subr.bf16.mxu0 %v3079
    %3266 = vmatpush1.bf16.msra.mxu0 %v3078
    %3267 = vmatprep.subr.bf16.mxu0 %v3076
    %3268 = vmatpush1.bf16.msra.mxu0 %v3075
    %3269 = vmatprep.subr.bf16.mxu0 %v3121
    %3270 = vmatpush2.bf16.msra.mxu0 %v3120
    %3271 = vmatprep.subr.bf16.mxu0 %v3118
    %3272 = vmatpush2.bf16.msra.mxu0 %v3117
    %3273 = vmatprep.subr.bf16.mxu0 %v3115
    %3274 = vmatpush2.bf16.msra.mxu0 %v3114
    %3275 = vmatprep.subr.bf16.mxu0 %v3112
    %3276 = vmatpush2.bf16.msra.mxu0 %v3111
    %3277 = vmatprep.subr.bf16.mxu0 %v3109
    %3278 = vmatpush2.bf16.msra.mxu0 %v3108
    %3279 = vmatprep.subr.bf16.mxu0 %v3106
    %3280 = vmatpush2.bf16.msra.mxu0 %v3105
    %3281 = vmatprep.subr.bf16.mxu0 %v3103
    %3282 = vmatpush2.bf16.msra.mxu0 %v3102
    %3283 = vmatprep.subr.bf16.mxu0 %v3100
    %3284 = vmatpush2.bf16.msra.mxu0 %v3099
    %3285 = vmatprep.mubr.bf16.mxu0 %v2501
    %3286 = vmatmul.mubr.bf16.gmra.mxu0 %v2500
    %v3287 = vpop.f32.mrf.mxu0
    %v3288 = vadd.f32 %v3247, %v3287
    %v3289 = vpop.f32.mrf.mxu0
    %v3290 = vadd.f32 %v3249, %v3289
    %v3291 = vpop.f32.mrf.mxu0
    %v3292 = vpop.f32.mrf.mxu0
    %3293 = vdwg.mxu0
    %3294 = vmatprep.subr.bf16.mxu0 %v3145
    %3295 = vmatpush1.bf16.msra.mxu0 %v3144
    %3296 = vmatprep.subr.bf16.mxu0 %v3142
    %3297 = vmatpush1.bf16.msra.mxu0 %v3141
    %3298 = vmatprep.subr.bf16.mxu0 %v3139
    %3299 = vmatpush1.bf16.msra.mxu0 %v3138
    %3300 = vmatprep.subr.bf16.mxu0 %v3136
    %3301 = vmatpush1.bf16.msra.mxu0 %v3135
    %3302 = vmatprep.subr.bf16.mxu0 %v3133
    %3303 = vmatpush1.bf16.msra.mxu0 %v3132
    %3304 = vmatprep.subr.bf16.mxu0 %v3130
    %3305 = vmatpush1.bf16.msra.mxu0 %v3129
    %3306 = vmatprep.subr.bf16.mxu0 %v3127
    %3307 = vmatpush1.bf16.msra.mxu0 %v3126
    %3308 = vmatprep.subr.bf16.mxu0 %v3124
    %3309 = vmatpush1.bf16.msra.mxu0 %v3123
    %3310 = vmatprep.subr.bf16.mxu0 %v3169
    %3311 = vmatpush2.bf16.msra.mxu0 %v3168
    %3312 = vmatprep.subr.bf16.mxu0 %v3166
    %3313 = vmatpush2.bf16.msra.mxu0 %v3165
    %3314 = vmatprep.subr.bf16.mxu0 %v3163
    %3315 = vmatpush2.bf16.msra.mxu0 %v3162
    %3316 = vmatprep.subr.bf16.mxu0 %v3160
    %3317 = vmatpush2.bf16.msra.mxu0 %v3159
    %3318 = vmatprep.subr.bf16.mxu0 %v3157
    %3319 = vmatpush2.bf16.msra.mxu0 %v3156
    %3320 = vmatprep.subr.bf16.mxu0 %v3154
    %3321 = vmatpush2.bf16.msra.mxu0 %v3153
    %3322 = vmatprep.subr.bf16.mxu0 %v3151
    %3323 = vmatpush2.bf16.msra.mxu0 %v3150
    %3324 = vmatprep.subr.bf16.mxu0 %v3148
    %3325 = vmatpush2.bf16.msra.mxu0 %v3147
    %3326 = vmatprep.mubr.bf16.mxu0 %v2503
    %3327 = vmatmul.mubr.bf16.gmra.mxu0 %v2502
    %v3328 = vpop.f32.mrf.mxu0
    %v3329 = vadd.f32 %v3288, %v3328
    %v3330 = vpop.f32.mrf.mxu0
    %v3331 = vadd.f32 %v3290, %v3330
    %v3332 = vpop.f32.mrf.mxu0
    %v3333 = vpop.f32.mrf.mxu0
    %3334 = vdwg.mxu0
    %3335 = vmatprep.subr.bf16.mxu0 0
    %3336 = vmatpush1.bf16.msra.mxu0 %v3002
    %3337 = vmatprep.subr.bf16.mxu0 0
    %3338 = vmatpush1.bf16.msra.mxu0 %v2999
    %3339 = vmatprep.subr.bf16.mxu0 0
    %3340 = vmatpush1.bf16.msra.mxu0 %v2996
    %3341 = vmatprep.subr.bf16.mxu0 0
    %3342 = vmatpush1.bf16.msra.mxu0 %v2993
    %3343 = vmatprep.subr.bf16.mxu0 0
    %3344 = vmatpush1.bf16.msra.mxu0 %v2990
    %3345 = vmatprep.subr.bf16.mxu0 0
    %3346 = vmatpush1.bf16.msra.mxu0 %v2987
    %3347 = vmatprep.subr.bf16.mxu0 0
    %3348 = vmatpush1.bf16.msra.mxu0 %v2984
    %3349 = vmatprep.subr.bf16.mxu0 0
    %3350 = vmatpush1.bf16.msra.mxu0 %v2981
    %3351 = vmatprep.subr.bf16.mxu0 0
    %3352 = vmatpush2.bf16.msra.mxu0 %v3026
    %3353 = vmatprep.subr.bf16.mxu0 0
    %3354 = vmatpush2.bf16.msra.mxu0 %v3023
    %3355 = vmatprep.subr.bf16.mxu0 0
    %3356 = vmatpush2.bf16.msra.mxu0 %v3020
    %3357 = vmatprep.subr.bf16.mxu0 0
    %3358 = vmatpush2.bf16.msra.mxu0 %v3017
    %3359 = vmatprep.subr.bf16.mxu0 0
    %3360 = vmatpush2.bf16.msra.mxu0 %v3014
    %3361 = vmatprep.subr.bf16.mxu0 0
    %3362 = vmatpush2.bf16.msra.mxu0 %v3011
    %3363 = vmatprep.subr.bf16.mxu0 0
    %3364 = vmatpush2.bf16.msra.mxu0 %v3008
    %3365 = vmatprep.subr.bf16.mxu0 0
    %3366 = vmatpush2.bf16.msra.mxu0 %v3005
    %3367 = vmatprep.mubr.bf16.mxu0 %v2497
    %3368 = vmatmul.mubr.bf16.gmra.mxu0 %v2496
    %v3369 = vpop.f32.mrf.mxu0
    %v3370 = vadd.f32 0.0, %v3369
    %v3371 = vpop.f32.mrf.mxu0
    %v3372 = vpop.f32.mrf.mxu0
    %v3373 = vpop.f32.mrf.mxu0
    %3374 = vdwg.mxu0
    %3375 = vmatprep.subr.bf16.mxu0 0
    %3376 = vmatpush1.bf16.msra.mxu0 %v3050
    %3377 = vmatprep.subr.bf16.mxu0 0
    %3378 = vmatpush1.bf16.msra.mxu0 %v3047
    %3379 = vmatprep.subr.bf16.mxu0 0
    %3380 = vmatpush1.bf16.msra.mxu0 %v3044
    %3381 = vmatprep.subr.bf16.mxu0 0
    %3382 = vmatpush1.bf16.msra.mxu0 %v3041
    %3383 = vmatprep.subr.bf16.mxu0 0
    %3384 = vmatpush1.bf16.msra.mxu0 %v3038
    %3385 = vmatprep.subr.bf16.mxu0 0
    %3386 = vmatpush1.bf16.msra.mxu0 %v3035
    %3387 = vmatprep.subr.bf16.mxu0 0
    %3388 = vmatpush1.bf16.msra.mxu0 %v3032
    %3389 = vmatprep.subr.bf16.mxu0 0
    %3390 = vmatpush1.bf16.msra.mxu0 %v3029
    %3391 = vmatprep.subr.bf16.mxu0 0
    %3392 = vmatpush2.bf16.msra.mxu0 %v3074
    %3393 = vmatprep.subr.bf16.mxu0 0
    %3394 = vmatpush2.bf16.msra.mxu0 %v3071
    %3395 = vmatprep.subr.bf16.mxu0 0
    %3396 = vmatpush2.bf16.msra.mxu0 %v3068
    %3397 = vmatprep.subr.bf16.mxu0 0
    %3398 = vmatpush2.bf16.msra.mxu0 %v3065
    %3399 = vmatprep.subr.bf16.mxu0 0
    %3400 = vmatpush2.bf16.msra.mxu0 %v3062
    %3401 = vmatprep.subr.bf16.mxu0 0
    %3402 = vmatpush2.bf16.msra.mxu0 %v3059
    %3403 = vmatprep.subr.bf16.mxu0 0
    %3404 = vmatpush2.bf16.msra.mxu0 %v3056
    %3405 = vmatprep.subr.bf16.mxu0 0
    %3406 = vmatpush2.bf16.msra.mxu0 %v3053
    %3407 = vmatprep.mubr.bf16.mxu0 %v2499
    %3408 = vmatmul.mubr.bf16.gmra.mxu0 %v2498
    %v3409 = vpop.f32.mrf.mxu0
    %v3410 = vadd.f32 %v3370, %v3409
    %v3411 = vpop.f32.mrf.mxu0
    %v3412 = vpop.f32.mrf.mxu0
    %v3413 = vpop.f32.mrf.mxu0
    %3414 = vdwg.mxu0
    %3415 = vmatprep.subr.bf16.mxu0 0
    %3416 = vmatpush1.bf16.msra.mxu0 %v3098
    %3417 = vmatprep.subr.bf16.mxu0 0
    %3418 = vmatpush1.bf16.msra.mxu0 %v3095
    %3419 = vmatprep.subr.bf16.mxu0 0
    %3420 = vmatpush1.bf16.msra.mxu0 %v3092
    %3421 = vmatprep.subr.bf16.mxu0 0
    %3422 = vmatpush1.bf16.msra.mxu0 %v3089
    %3423 = vmatprep.subr.bf16.mxu0 0
    %3424 = vmatpush1.bf16.msra.mxu0 %v3086
    %3425 = vmatprep.subr.bf16.mxu0 0
    %3426 = vmatpush1.bf16.msra.mxu0 %v3083
    %3427 = vmatprep.subr.bf16.mxu0 0
    %3428 = vmatpush1.bf16.msra.mxu0 %v3080
    %3429 = vmatprep.subr.bf16.mxu0 0
    %3430 = vmatpush1.bf16.msra.mxu0 %v3077
    %3431 = vmatprep.subr.bf16.mxu0 0
    %3432 = vmatpush2.bf16.msra.mxu0 %v3122
    %3433 = vmatprep.subr.bf16.mxu0 0
    %3434 = vmatpush2.bf16.msra.mxu0 %v3119
    %3435 = vmatprep.subr.bf16.mxu0 0
    %3436 = vmatpush2.bf16.msra.mxu0 %v3116
    %3437 = vmatprep.subr.bf16.mxu0 0
    %3438 = vmatpush2.bf16.msra.mxu0 %v3113
    %3439 = vmatprep.subr.bf16.mxu0 0
    %3440 = vmatpush2.bf16.msra.mxu0 %v3110
    %3441 = vmatprep.subr.bf16.mxu0 0
    %3442 = vmatpush2.bf16.msra.mxu0 %v3107
    %3443 = vmatprep.subr.bf16.mxu0 0
    %3444 = vmatpush2.bf16.msra.mxu0 %v3104
    %3445 = vmatprep.subr.bf16.mxu0 0
    %3446 = vmatpush2.bf16.msra.mxu0 %v3101
    %3447 = vmatprep.mubr.bf16.mxu0 %v2501
    %3448 = vmatmul.mubr.bf16.gmra.mxu0 %v2500
    %v3449 = vpop.f32.mrf.mxu0
    %v3450 = vadd.f32 %v3410, %v3449
    %v3451 = vpop.f32.mrf.mxu0
    %v3452 = vpop.f32.mrf.mxu0
    %v3453 = vpop.f32.mrf.mxu0
    %3454 = vdwg.mxu0
    %3455 = vmatprep.subr.bf16.mxu0 0
    %3456 = vmatpush1.bf16.msra.mxu0 %v3146
    %3457 = vmatprep.subr.bf16.mxu0 0
    %3458 = vmatpush1.bf16.msra.mxu0 %v3143
    %3459 = vmatprep.subr.bf16.mxu0 0
    %3460 = vmatpush1.bf16.msra.mxu0 %v3140
    %3461 = vmatprep.subr.bf16.mxu0 0
    %3462 = vmatpush1.bf16.msra.mxu0 %v3137
    %3463 = vmatprep.subr.bf16.mxu0 0
    %3464 = vmatpush1.bf16.msra.mxu0 %v3134
    %3465 = vmatprep.subr.bf16.mxu0 0
    %3466 = vmatpush1.bf16.msra.mxu0 %v3131
    %3467 = vmatprep.subr.bf16.mxu0 0
    %3468 = vmatpush1.bf16.msra.mxu0 %v3128
    %3469 = vmatprep.subr.bf16.mxu0 0
    %3470 = vmatpush1.bf16.msra.mxu0 %v3125
    %3471 = vmatprep.subr.bf16.mxu0 0
    %3472 = vmatpush2.bf16.msra.mxu0 %v3170
    %3473 = vmatprep.subr.bf16.mxu0 0
    %3474 = vmatpush2.bf16.msra.mxu0 %v3167
    %3475 = vmatprep.subr.bf16.mxu0 0
    %3476 = vmatpush2.bf16.msra.mxu0 %v3164
    %3477 = vmatprep.subr.bf16.mxu0 0
    %3478 = vmatpush2.bf16.msra.mxu0 %v3161
    %3479 = vmatprep.subr.bf16.mxu0 0
    %3480 = vmatpush2.bf16.msra.mxu0 %v3158
    %3481 = vmatprep.subr.bf16.mxu0 0
    %3482 = vmatpush2.bf16.msra.mxu0 %v3155
    %3483 = vmatprep.subr.bf16.mxu0 0
    %3484 = vmatpush2.bf16.msra.mxu0 %v3152
    %3485 = vmatprep.subr.bf16.mxu0 0
    %3486 = vmatpush2.bf16.msra.mxu0 %v3149
    %3487 = vmatprep.mubr.bf16.mxu0 %v2503
    %3488 = vmatmul.mubr.bf16.gmra.mxu0 %v2502
    %v3489 = vpop.f32.mrf.mxu0
    %v3490 = vadd.f32 %v3450, %v3489
    %v3491 = vpop.f32.mrf.mxu0
    %v3492 = vpop.f32.mrf.mxu0
    %v3493 = vpop.f32.mrf.mxu0
    %3494 = vdwg.mxu0
    %v3495 = vlaneseq
    %v3496 = vshrl.u32 %v3495, 7
    %v3497 = vsub.s32 4, %v3496
    %v3498 = vrot.slane %v128, %v3497
    %v3499 = vlaneseq
    %v3500 = vshrl.u32 %v3499, 7
    %v3501 = vsub.s32 4, %v3500
    %v3502 = vrot.slane %v129, %v3501
    %v3503 = vlaneseq
    %v3504 = vshrl.u32 %v3503, 7
    %v3505 = vsub.s32 4, %v3504
    %v3506 = vrot.slane %v130, %v3505
    %v3507 = vmul.f32 %v3329, %v3498
    %v3508 = vmul.f32 %v3331, %v3502
    %v3509 = vmul.f32 %v3490, %v3506
    %v3510 = vlaneseq
    %v3511 = vshrl.u32 %v3510, 7
    %v3512 = vsub.s32 2, %v3511
    %v3513 = vrot.slane %v128, %v3512
    %v3514 = vlaneseq
    %v3515 = vshrl.u32 %v3514, 7
    %v3516 = vsub.s32 2, %v3515
    %v3517 = vrot.slane %v129, %v3516
    %v3518 = vlaneseq
    %v3519 = vshrl.u32 %v3518, 7
    %v3520 = vsub.s32 2, %v3519
    %v3521 = vrot.slane %v130, %v3520
    %v3522 = vadd.f32 %v3507, %v3513
    %v3523 = vadd.f32 %v3508, %v3517
    %v3524 = vadd.f32 %v3509, %v3521
    %v3525 = vtanh.pop %v3522
    %v3526 = vtanh.pop %v3523
    %v3527 = vtanh.pop %v3524
    %3528 = vst [vmem:[#allocation14 + $0x20] sm:$0xff] %v3525
    %3529 = vst [vmem:[#allocation14 + $0x28] sm:$0xff] %v3526
    %3530 = vst [vmem:[#allocation14 + $0x30] sm:$0xff] %v3527
    // Predicated region
    $region42: #{tpu_custom_call.1} parent=1 // pred_check
      _
    $region43: #{tpu_custom_call.1} parent=1 // pred_check_branch
      %3532 = sbr.rel (0) target = $region45
    $region44: #{tpu_custom_call.1} parent=1 // pred_region
      %s3534 = ssub.s32 896, 896
      %3535 = vsyncadd [#allocation11], %s3534
      %s3537 = sshll.u32 [#allocation14], 4
      %s3538 = int_to_ptr.vmem [resolvable:$true] %s3537
      %3540 = dma.vmem_to_hbm [thread:$0]  %s3538, 896, %s8, [#allocation11]
    $region45: #{tpu_custom_call.1} parent=1 // pred_fallthru
      _
    // Predicated region
    $region46: #{tpu_custom_call.1} parent=1 // pred_check
      _
    $region47: #{tpu_custom_call.1} parent=1 // pred_check_branch
      %3542 = sbr.rel (0) target = $region49
    $region48: #{tpu_custom_call.1} parent=1 // pred_region
      %3543 = dma.done [#allocation11], 896
    $region49: #{tpu_custom_call.1} parent=1 // pred_fallthru
      _
    %3544 = vsyncpa [#allocation10], 1
    %3545 = vsyncpa [#allocation13], 1
    %3546 = vsyncpa [#allocation11], 1
  %3547 = vsyncmov [#allocation8]
  %s3548 = vpop.sfrf %3547
  %p3549 = scmp.eq.s32.totalorder %s3548, 0
  %p3550 = pneg %p3549
  %3552 = shalt.err (%p3550)
  %s3553 = scalar_lea.sflag [#allocation8], 1
  %3554 = vsyncmov %s3553
  %s3555 = vpop.sfrf %3554
  %p3556 = scmp.eq.s32.totalorder %s3555, 0
  %p3557 = pneg %p3556
  %3559 = shalt.err (%p3557)
  %s3560 = scalar_lea.sflag [#allocation8], 2
  %3561 = vsyncmov %s3560
  %s3562 = vpop.sfrf %3561
  %p3563 = scmp.eq.s32.totalorder %s3562, 0
  %p3564 = pneg %p3563
  %3566 = shalt.err (%p3564)
  %s3567 = scalar_lea.sflag [#allocation8], 3
  %3568 = vsyncmov %s3567
  %s3569 = vpop.sfrf %3568
  %p3570 = scmp.eq.s32.totalorder %s3569, 0
  %p3571 = pneg %p3570
  %3573 = shalt.err (%p3571)
  %s3574 = scalar_lea.sflag [#allocation8], 4
  %3575 = vsyncmov %s3574
  %s3576 = vpop.sfrf %3575
  %p3577 = scmp.eq.s32.totalorder %s3576, 0
  %p3578 = pneg %p3577
  %3580 = shalt.err (%p3578)
  %s3581 = scalar_lea.sflag [#allocation8], 5
  %3582 = vsyncmov %s3581
  %s3583 = vpop.sfrf %3582
  %p3584 = scmp.eq.s32.totalorder %s3583, 0
  %p3585 = pneg %p3584
  %3587 = shalt.err (%p3585)

</llo_original>
